<compile_context>
chip_gen: v7x
topology: tpu7x:2x2x1
jax: 0.10.0
libtpu: 0.0.40
codegen_flags: <defaults>
</compile_context>

<pallas_src>
import numpy as np
import jax
import jax.numpy as jnp
from jax.experimental import pallas as pl
from jax.experimental.pallas import tpu as pltpu


def _encoder_kernel(gx_ref, mask_ref, wrec_ref, whp_ref, bhp_ref, wcp_ref, bcp_ref,
                    out_ref, hproj_ref, cproj_ref, hist_ref, c_ref):
    Lt, B, _ = gx_ref.shape            # time-chunk block of fused gate inputs
    L = hist_ref.shape[0]              # full sequence length
    H2 = hist_ref.shape[2]             # 2H: fwd | bkwd lanes fused
    H = H2 // 2
    chunk = pl.program_id(0)

    @pl.when(chunk == 0)
    def _init():                       # carried cell state starts at zero
        c_ref[...] = jnp.zeros_like(c_ref)

    w_rec = wrec_ref[...]              # (2H, 8H) block-diag recurrent weight, hoisted
    n_dyadic = int(np.log2(L - 1)) + 1 if L > 1 else 0

    h = jnp.zeros((B, H2), jnp.float32)
    for lj in range(Lt):               # static unroll (Lt kept small)
        j = chunk * Lt + lj            # global timestep

        # Dyadic skip context sum_{k: 2^k <= j} h[j - 2^k] for BOTH directions
        # in a single (B, 2H) accumulation (one load/select/add per offset).
        ctx = jnp.zeros((B, H2), jnp.float32)
        for k in range(n_dyadic):
            d = 1 << k
            # select (not multiply): uninitialised history at j < d can never
            # propagate garbage/NaN.
            ctx = ctx + jnp.where(j >= d, hist_ref[jnp.maximum(j - d, 0)], 0.0)

        # Input projection + biases were hoisted to the wrapper; only the
        # K=2H recurrent dot stays per step.
        g = gx_ref[lj] + jnp.dot(ctx, w_rec, preferred_element_type=jnp.float32)

        # gate columns: [i_f i_b | f_f f_b | o_f o_b | g_f g_b]
        s = jax.nn.sigmoid(g[:, :6 * H])    # one wide sigmoid (i, f, o of both dirs)
        t = jnp.tanh(g[:, 6 * H:])          # one wide tanh    (g of both dirs)
        i_g = s[:, 0:H2]
        f_g = s[:, H2:2 * H2]
        o_g = s[:, 2 * H2:3 * H2]
        c_new = f_g * c_ref[...] + i_g * t  # cell state kept in f32
        h = o_g * jnp.tanh(c_new)           # (B, 2H) = [h_f | h_b], no concat needed
        c_ref[...] = c_new
        hist_ref[j] = h
        # static middle-axis slice store into the (B, Lt, 2H) VMEM output block;
        # HBM writeback is one DMA per chunk via the pipeline.
        out_ref[:, lj, :] = h * mask_ref[:, lj, :]

    # Final-state projections only on the last chunk (outputs are resident).
    @pl.when(chunk == pl.num_programs(0) - 1)
    def _final():
        hproj_ref[...] = (jnp.dot(h, whp_ref[...],
                                  preferred_element_type=jnp.float32) + bhp_ref[...])
        cproj_ref[...] = (jnp.dot(c_ref[...], wcp_ref[...],
                                  preferred_element_type=jnp.float32) + bcp_ref[...])


def init_params(key, vocab, input_size, hidden_size):
    ks = jax.random.split(key, 13)
    bound = 1.0 / np.sqrt(hidden_size)
    u = lambda k, shape: jax.random.uniform(k, shape, jnp.float32, -bound, bound)
    return dict(
        embed=jax.random.normal(ks[0], (vocab, input_size), jnp.float32) * 0.1,
        w_ih_f=u(ks[1], (4 * hidden_size, input_size)),
        w_hh_f=u(ks[2], (4 * hidden_size, hidden_size)),
        b_ih_f=u(ks[3], (4 * hidden_size,)),
        b_hh_f=u(ks[4], (4 * hidden_size,)),
        w_ih_b=u(ks[5], (4 * hidden_size, input_size)),
        w_hh_b=u(ks[6], (4 * hidden_size, hidden_size)),
        b_ih_b=u(ks[7], (4 * hidden_size,)),
        b_hh_b=u(ks[8], (4 * hidden_size,)),
        w_hproj=u(ks[9], (hidden_size, 2 * hidden_size)),
        b_hproj=u(ks[10], (hidden_size,)),
        w_cproj=u(ks[11], (hidden_size, 2 * hidden_size)),
        b_cproj=u(ks[12], (hidden_size,)),
    )


def encoder_forward(ids, rev_ids, params, *, time_block=8):
    B, L = ids.shape
    I = params["embed"].shape[1]
    H = params["w_hh_f"].shape[1]

    # (B, Lt, .) output/mask blocks need Lt % 8 == 0 (sublane tiling) or Lt == L.
    if L % time_block != 0 or (time_block % 8 != 0 and time_block != L):
        time_block = L
    Lt = time_block
    n_chunks = L // Lt

    # TODO(synk): embedding gather stays in plain JAX (see header).
    embed = params["embed"]
    ef = jnp.take(embed, ids.T, axis=0)        # (L, B, I) time-major, no transpose pass
    er = jnp.take(embed, rev_ids.T, axis=0)    # (L, B, I)

    # Hoisted input projection: one (L*B, I)@(I, 4H) matmul per direction (XLA),
    # biases b_ih + b_hh folded in, torch gate order [i, f, g, o].
    gx_f = jnp.einsum('lbi,gi->lbg', ef, params["w_ih_f"]) + (params["b_ih_f"] + params["b_hh_f"])
    gx_b = jnp.einsum('lbi,gi->lbg', er, params["w_ih_b"]) + (params["b_ih_b"] + params["b_hh_b"])

    # Interleave the two directions' gate columns:
    # [i_f i_b | f_f f_b | o_f o_b | g_f g_b]  (sigmoid block first, tanh last).
    def torch_gates(g):
        return g[..., 0:H], g[..., H:2 * H], g[..., 2 * H:3 * H], g[..., 3 * H:4 * H]
    i_f, f_f, gg_f, o_f = torch_gates(gx_f)
    i_b, f_b, gg_b, o_b = torch_gates(gx_b)
    gx = jnp.concatenate([i_f, i_b, f_f, f_b, o_f, o_b, gg_f, gg_b], axis=-1)   # (L, B, 8H)

    # Block-diagonal recurrent weight (2H, 8H): fwd ctx rows feed only fwd gate
    # columns, bkwd ctx rows only bkwd gate columns (same column order as gx).
    def rec_cols(w_hh):                 # (4H, H), torch rows [i, f, g, o]
        wt = w_hh.T                     # (H, 4H) cols [i, f, g, o]
        return wt[:, 0:H], wt[:, H:2 * H], wt[:, 3 * H:4 * H], wt[:, 2 * H:3 * H]  # i, f, o, g
    rfi, rff, rfo, rfg = rec_cols(params["w_hh_f"])
    rbi, rbf, rbo, rbg = rec_cols(params["w_hh_b"])
    z = jnp.zeros((H, H), jnp.float32)
    w_rec = jnp.concatenate([
        jnp.concatenate([rfi, z, rff, z, rfo, z, rfg, z], axis=1),
        jnp.concatenate([z, rbi, z, rbf, z, rbo, z, rbg], axis=1)], axis=0)     # (2H, 8H)

    inv_mask = (ids != 0).astype(jnp.float32)[:, :, None]                       # (B, L, 1)

    kern_args = (gx, inv_mask, w_rec,
                 params["w_hproj"].T, params["b_hproj"].reshape(1, -1),
                 params["w_cproj"].T, params["b_cproj"].reshape(1, -1))

    full2d = lambda r, c: pl.BlockSpec((r, c), lambda i: (0, 0))
    grid_spec = pltpu.PrefetchScalarGridSpec(
        num_scalar_prefetch=0,
        grid=(n_chunks,),                                   # stream over time
        in_specs=[
            pl.BlockSpec((Lt, B, 8 * H), lambda i: (i, 0, 0)),   # fused gate inputs
            pl.BlockSpec((B, Lt, 1), lambda i: (0, i, 0)),       # inv mask
            full2d(2 * H, 8 * H),                                # w_rec
            full2d(2 * H, H), full2d(1, H),                      # w_hproj^T, b_hproj
            full2d(2 * H, H), full2d(1, H),                      # w_cproj^T, b_cproj
        ],
        out_specs=(
            pl.BlockSpec((B, Lt, 2 * H), lambda i: (0, i, 0)),   # hidden out (B, L, 2H)
            pl.BlockSpec((B, H), lambda i: (0, 0)),              # h projection
            pl.BlockSpec((B, H), lambda i: (0, 0)),              # c projection
        ),
        scratch_shapes=[
            pltpu.VMEM((L, B, 2 * H), jnp.float32),   # merged fwd|bkwd h history
            pltpu.VMEM((B, 2 * H), jnp.float32),      # merged fwd|bkwd cell carry
        ],
    )

    # VMEM budget: persistent history + double-buffered streamed blocks + weights.
    pad = lambda v, m: ((v + m - 1) // m) * m
    Bp = pad(B, 8)
    vmem_est = 4 * (
        L * Bp * pad(2 * H, 128)                      # h history scratch
        + Bp * pad(2 * H, 128)                        # cell carry
        + 2 * Lt * Bp * pad(8 * H, 128)               # gx blocks (double buffered)
        + 2 * Bp * pad(Lt, 8) * 128                   # mask blocks
        + 2 * Bp * pad(Lt, 8) * pad(2 * H, 128)       # out blocks
        + pad(2 * H, 8) * pad(8 * H, 128)             # w_rec
        + 2 * (pad(2 * H, 8) + 8) * pad(H, 128)       # proj weights + biases
        + 2 * Bp * pad(H, 128)                        # hproj / cproj blocks
    )
    vmem_limit = int(min(max(2 * vmem_est + (4 << 20), 32 << 20), 128 << 20))

    out, hproj, cproj = pl.pallas_call(
        _encoder_kernel,
        out_shape=(
            jax.ShapeDtypeStruct((B, L, 2 * H), jnp.float32),
            jax.ShapeDtypeStruct((B, H), jnp.float32),
            jax.ShapeDtypeStruct((B, H), jnp.float32),
        ),
        grid_spec=grid_spec,
        compiler_params=pltpu.CompilerParams(
            dimension_semantics=("arbitrary",),        # time recurrence is sequential
            vmem_limit_bytes=vmem_limit),
    )(*kern_args)

    mask = ids == 0
    return out, hproj, cproj, mask


def encoder_reference(ids, rev_ids, params):
    """Pure-numpy mirror of the PyTorch forward for correctness checking."""
    ids = np.asarray(ids)
    rev_ids = np.asarray(rev_ids)
    p = {k: np.asarray(v, np.float32) for k, v in params.items()}
    B, L = ids.shape
    H = p["w_hh_f"].shape[1]
    ef, er = p["embed"][ids], p["embed"][rev_ids]

    def sigmoid(x):
        return 1.0 / (1.0 + np.exp(-x))

    def lstm_step(x, h, c, w_ih, w_hh, b_ih, b_hh):
        g = x @ w_ih.T + b_ih + h @ w_hh.T + b_hh
        i = sigmoid(g[:, 0:H]); f = sigmoid(g[:, H:2 * H])
        gg = np.tanh(g[:, 2 * H:3 * H]); o = sigmoid(g[:, 3 * H:4 * H])
        c_new = f * c + i * gg
        return o * np.tanh(c_new), c_new

    def run(embed, w_ih, w_hh, b_ih, b_hh):
        c = np.zeros((B, H), np.float32)
        h = np.zeros((B, H), np.float32)
        outs = np.zeros((B, L, H), np.float32)
        h_hist = [np.zeros((B, H), np.float32)] * L
        for j in range(L):
            context = np.zeros((B, H), np.float32)
            if j > 0:
                for k in range(int(np.log2(j)) + 1):
                    context = context + h_hist[j - 2 ** k]
            h, c = lstm_step(embed[:, j, :], context, c, w_ih, w_hh, b_ih, b_hh)
            h_hist[j] = h
            outs[:, j, :] = h
        return outs, h, c

    fo, hf, cf = run(ef, p["w_ih_f"], p["w_hh_f"], p["b_ih_f"], p["b_hh_f"])
    bo, hb, cb = run(er, p["w_ih_b"], p["w_hh_b"], p["b_ih_b"], p["b_hh_b"])
    mask = ids == 0
    inv = (~mask).astype(np.float32)[:, :, None]
    hidden_out = np.concatenate([fo, bo], axis=2) * inv
    hproj = np.concatenate([hf, hb], axis=1) @ p["w_hproj"].T + p["b_hproj"]
    cproj = np.concatenate([cf, cb], axis=1) @ p["w_cproj"].T + p["b_cproj"]
    return hidden_out, hproj, cproj, mask


if __name__ == "__main__":
    B, L, I, H, V = 2, 16, 16, 32, 50
    key = jax.random.PRNGKey(0)
    kp, kd = jax.random.split(key)
    params = init_params(kp, V, I, H)

    ids = jax.random.randint(kd, (B, L), 1, V, dtype=jnp.int32)
    ids = ids.at[:, -3:].set(0)          # padding tokens -> exercises the mask
    rev_ids = jnp.flip(ids, axis=1)

    fwd = jax.jit(lambda a, b, p: encoder_forward(a, b, p, time_block=8))
    hidden_out, hproj, cproj, mask = fwd(ids, rev_ids, params)
    jax.block_until_ready((hidden_out, hproj, cproj, mask))

    ref_hidden, ref_hproj, ref_cproj, ref_mask = encoder_reference(ids, rev_ids, params)
    np.testing.assert_allclose(np.asarray(hidden_out), ref_hidden, atol=2e-3, rtol=2e-3)
    np.testing.assert_allclose(np.asarray(hproj), ref_hproj, atol=2e-3, rtol=2e-3)
    np.testing.assert_allclose(np.asarray(cproj), ref_cproj, atol=2e-3, rtol=2e-3)
    assert np.array_equal(np.asarray(mask), ref_mask)
    print("KERNEL_OK")
</pallas_src>

<mosaic_0001>
module attributes {stable_mosaic.version = 11 : i64} {
  func.func @_encoder_kernel(%arg0: i32, %arg1: memref<8x2x256xf32, #tpu.memory_space<vmem>>, %arg2: memref<2x8x1xf32, #tpu.memory_space<vmem>>, %arg3: memref<64x256xf32, #tpu.memory_space<vmem>>, %arg4: memref<64x32xf32, #tpu.memory_space<vmem>>, %arg5: memref<1x32xf32, #tpu.memory_space<vmem>>, %arg6: memref<64x32xf32, #tpu.memory_space<vmem>>, %arg7: memref<1x32xf32, #tpu.memory_space<vmem>>, %arg8: memref<2x8x64xf32, #tpu.memory_space<vmem>>, %arg9: memref<2x32xf32, #tpu.memory_space<vmem>>, %arg10: memref<2x32xf32, #tpu.memory_space<vmem>>, %arg11: memref<16x2x64xf32, #tpu.memory_space<vmem>>, %arg12: memref<2x64xf32, #tpu.memory_space<vmem>>) attributes {dimension_semantics = [#tpu.dimension_semantics<arbitrary>], iteration_bounds = array<i64: 2>, scalar_prefetch = 0 : i64, scratch_operands = 2 : i64, tpu.core_type = #tpu.core_type<tc>, window_params = [{transform_indices = @transform_0, window_bounds = array<i64: 8, 2, 256>}, {transform_indices = @transform_1, window_bounds = array<i64: 2, 8, 1>}, {pipeline_mode = #tpu.pipeline_mode<synchronous>, transform_indices = @transform_2, window_bounds = array<i64: 64, 256>}, {pipeline_mode = #tpu.pipeline_mode<synchronous>, transform_indices = @transform_3, window_bounds = array<i64: 64, 32>}, {pipeline_mode = #tpu.pipeline_mode<synchronous>, transform_indices = @transform_4, window_bounds = array<i64: 1, 32>}, {pipeline_mode = #tpu.pipeline_mode<synchronous>, transform_indices = @transform_5, window_bounds = array<i64: 64, 32>}, {pipeline_mode = #tpu.pipeline_mode<synchronous>, transform_indices = @transform_6, window_bounds = array<i64: 1, 32>}, {transform_indices = @transform_7, window_bounds = array<i64: 2, 8, 64>}, {pipeline_mode = #tpu.pipeline_mode<synchronous>, transform_indices = @transform_8, window_bounds = array<i64: 2, 32>}, {pipeline_mode = #tpu.pipeline_mode<synchronous>, transform_indices = @transform_9, window_bounds = array<i64: 2, 32>}]} {
    %c0_i32 = arith.constant 0 : i32
    %0 = arith.cmpi eq, %arg0, %c0_i32 : i32
    %1 = arith.extui %0 : i1 to i32
    %c0_i32_0 = arith.constant 0 : i32
    %2 = arith.cmpi ne, %1, %c0_i32_0 : i32
    scf.if %2 {
      %cst_340 = arith.constant 0.000000e+00 : f32
      %583 = vector.broadcast %cst_340 : f32 to vector<2x64xf32>
      %c0_341 = arith.constant 0 : index
      %c0_342 = arith.constant 0 : index
      %584 = vector.load %arg12[%c0_341, %c0_342] : memref<2x64xf32, #tpu.memory_space<vmem>>, vector<2x64xf32>
      tpu.vector_store %arg12[%c0_341, %c0_342], %583 {strides = array<i32>} : memref<2x64xf32, #tpu.memory_space<vmem>>, vector<2x64xf32>,
    } else {
    }
    %c0 = arith.constant 0 : index
    %c0_1 = arith.constant 0 : index
    %3 = vector.load %arg3[%c0, %c0_1] : memref<64x256xf32, #tpu.memory_space<vmem>>, vector<64x256xf32>
    %c8_i32 = arith.constant 8 : i32
    %4 = arith.muli %arg0, %c8_i32 : i32
    %c0_i32_2 = arith.constant 0 : i32
    %5 = arith.addi %4, %c0_i32_2 : i32
    %cst = arith.constant 0.000000e+00 : f32
    %6 = vector.broadcast %cst : f32 to vector<2x64xf32>
    %c1_i32 = arith.constant 1 : i32
    %7 = arith.cmpi sge, %5, %c1_i32 : i32
    %c1_i32_3 = arith.constant 1 : i32
    %8 = arith.subi %5, %c1_i32_3 : i32
    %c0_i32_4 = arith.constant 0 : i32
    %9 = arith.maxsi %8, %c0_i32_4 : i32
    %10 = arith.index_cast %9 : i32 to index
    %c0_5 = arith.constant 0 : index
    %c0_6 = arith.constant 0 : index
    %11 = vector.load %arg11[%10, %c0_5, %c0_6] : memref<16x2x64xf32, #tpu.memory_space<vmem>>, vector<1x2x64xf32>
    %12 = vector.shape_cast %11 : vector<1x2x64xf32> to vector<2x64xf32>
    %cst_7 = arith.constant 0.000000e+00 : f32
    %13 = vector.broadcast %cst_7 : f32 to vector<2x64xf32>
    %14 = arith.select %7, %12, %13 : vector<2x64xf32>
    %15 = arith.addf %6, %14 : vector<2x64xf32>
    %c2_i32 = arith.constant 2 : i32
    %16 = arith.cmpi sge, %5, %c2_i32 : i32
    %c2_i32_8 = arith.constant 2 : i32
    %17 = arith.subi %5, %c2_i32_8 : i32
    %c0_i32_9 = arith.constant 0 : i32
    %18 = arith.maxsi %17, %c0_i32_9 : i32
    %19 = arith.index_cast %18 : i32 to index
    %c0_10 = arith.constant 0 : index
    %c0_11 = arith.constant 0 : index
    %20 = vector.load %arg11[%19, %c0_10, %c0_11] : memref<16x2x64xf32, #tpu.memory_space<vmem>>, vector<1x2x64xf32>
    %21 = vector.shape_cast %20 : vector<1x2x64xf32> to vector<2x64xf32>
    %cst_12 = arith.constant 0.000000e+00 : f32
    %22 = vector.broadcast %cst_12 : f32 to vector<2x64xf32>
    %23 = arith.select %16, %21, %22 : vector<2x64xf32>
    %24 = arith.addf %15, %23 : vector<2x64xf32>
    %c4_i32 = arith.constant 4 : i32
    %25 = arith.cmpi sge, %5, %c4_i32 : i32
    %c4_i32_13 = arith.constant 4 : i32
    %26 = arith.subi %5, %c4_i32_13 : i32
    %c0_i32_14 = arith.constant 0 : i32
    %27 = arith.maxsi %26, %c0_i32_14 : i32
    %28 = arith.index_cast %27 : i32 to index
    %c0_15 = arith.constant 0 : index
    %c0_16 = arith.constant 0 : index
    %29 = vector.load %arg11[%28, %c0_15, %c0_16] : memref<16x2x64xf32, #tpu.memory_space<vmem>>, vector<1x2x64xf32>
    %30 = vector.shape_cast %29 : vector<1x2x64xf32> to vector<2x64xf32>
    %cst_17 = arith.constant 0.000000e+00 : f32
    %31 = vector.broadcast %cst_17 : f32 to vector<2x64xf32>
    %32 = arith.select %25, %30, %31 : vector<2x64xf32>
    %33 = arith.addf %24, %32 : vector<2x64xf32>
    %c8_i32_18 = arith.constant 8 : i32
    %34 = arith.cmpi sge, %5, %c8_i32_18 : i32
    %c8_i32_19 = arith.constant 8 : i32
    %35 = arith.subi %5, %c8_i32_19 : i32
    %c0_i32_20 = arith.constant 0 : i32
    %36 = arith.maxsi %35, %c0_i32_20 : i32
    %37 = arith.index_cast %36 : i32 to index
    %c0_21 = arith.constant 0 : index
    %c0_22 = arith.constant 0 : index
    %38 = vector.load %arg11[%37, %c0_21, %c0_22] : memref<16x2x64xf32, #tpu.memory_space<vmem>>, vector<1x2x64xf32>
    %39 = vector.shape_cast %38 : vector<1x2x64xf32> to vector<2x64xf32>
    %cst_23 = arith.constant 0.000000e+00 : f32
    %40 = vector.broadcast %cst_23 : f32 to vector<2x64xf32>
    %41 = arith.select %34, %39, %40 : vector<2x64xf32>
    %42 = arith.addf %33, %41 : vector<2x64xf32>
    %c0_24 = arith.constant 0 : index
    %c0_25 = arith.constant 0 : index
    %c0_26 = arith.constant 0 : index
    %43 = vector.load %arg1[%c0_24, %c0_25, %c0_26] : memref<8x2x256xf32, #tpu.memory_space<vmem>>, vector<1x2x256xf32>
    %44 = vector.shape_cast %43 : vector<1x2x256xf32> to vector<2x256xf32>
    %cst_27 = arith.constant dense<0.000000e+00> : vector<2x256xf32>
    %45 = tpu.matmul %42, %3, %cst_27 {dimension_numbers = #tpu.dot_dimension_numbers<[1], [0], [0], [1], [0, 0, 1, 1], [], []>} : vector<2x64xf32>, vector<64x256xf32>, vector<2x256xf32> -> vector<2x256xf32>
    %46 = arith.addf %44, %45 : vector<2x256xf32>
    %47 = vector.extract_strided_slice %46 {offsets = [0, 0], sizes = [2, 192], strides = [1, 1]} : vector<2x256xf32> to vector<2x192xf32>
    %48 = arith.negf %47 : vector<2x192xf32>
    %49 = math.exp %48 : vector<2x192xf32>
    %cst_28 = arith.constant 1.000000e+00 : f32
    %50 = vector.broadcast %cst_28 : f32 to vector<2x192xf32>
    %51 = arith.addf %50, %49 : vector<2x192xf32>
    %52 = arith.divf %50, %51 : vector<2x192xf32>
    %53 = vector.extract_strided_slice %46 {offsets = [0, 192], sizes = [2, 64], strides = [1, 1]} : vector<2x256xf32> to vector<2x64xf32>
    %54 = math.tanh %53 : vector<2x64xf32>
    %55 = vector.extract_strided_slice %52 {offsets = [0, 0], sizes = [2, 64], strides = [1, 1]} : vector<2x192xf32> to vector<2x64xf32>
    %56 = vector.extract_strided_slice %52 {offsets = [0, 64], sizes = [2, 64], strides = [1, 1]} : vector<2x192xf32> to vector<2x64xf32>
    %57 = vector.extract_strided_slice %52 {offsets = [0, 128], sizes = [2, 64], strides = [1, 1]} : vector<2x192xf32> to vector<2x64xf32>
    %c0_29 = arith.constant 0 : index
    %c0_30 = arith.constant 0 : index
    %58 = vector.load %arg12[%c0_29, %c0_30] : memref<2x64xf32, #tpu.memory_space<vmem>>, vector<2x64xf32>
    %59 = arith.mulf %56, %58 : vector<2x64xf32>
    %60 = arith.mulf %55, %54 : vector<2x64xf32>
    %61 = arith.addf %59, %60 : vector<2x64xf32>
    %62 = math.tanh %61 : vector<2x64xf32>
    %63 = arith.mulf %57, %62 : vector<2x64xf32>
    %c0_31 = arith.constant 0 : index
    %c0_32 = arith.constant 0 : index
    %64 = vector.load %arg12[%c0_31, %c0_32] : memref<2x64xf32, #tpu.memory_space<vmem>>, vector<2x64xf32>
    tpu.vector_store %arg12[%c0_31, %c0_32], %61 {strides = array<i32>} : memref<2x64xf32, #tpu.memory_space<vmem>>, vector<2x64xf32>,
    %65 = arith.index_cast %5 : i32 to index
    %c0_33 = arith.constant 0 : index
    %c0_34 = arith.constant 0 : index
    %66 = vector.load %arg11[%65, %c0_33, %c0_34] : memref<16x2x64xf32, #tpu.memory_space<vmem>>, vector<1x2x64xf32>
    %67 = vector.shape_cast %66 : vector<1x2x64xf32> to vector<2x64xf32>
    %68 = vector.shape_cast %63 : vector<2x64xf32> to vector<1x2x64xf32>
    tpu.vector_store %arg11[%65, %c0_33, %c0_34], %68 {strides = array<i32>} : memref<16x2x64xf32, #tpu.memory_space<vmem>>, vector<1x2x64xf32>,
    %c0_35 = arith.constant 0 : index
    %c0_36 = arith.constant 0 : index
    %c0_37 = arith.constant 0 : index
    %69 = vector.load %arg2[%c0_35, %c0_36, %c0_37] : memref<2x8x1xf32, #tpu.memory_space<vmem>>, vector<2x1x1xf32>
    %70 = vector.shape_cast %69 : vector<2x1x1xf32> to vector<2x1xf32>
    %71 = vector.broadcast %70 : vector<2x1xf32> to vector<2x64xf32>
    %72 = arith.mulf %63, %71 : vector<2x64xf32>
    %c0_38 = arith.constant 0 : index
    %c0_39 = arith.constant 0 : index
    %c0_40 = arith.constant 0 : index
    %73 = vector.load %arg8[%c0_38, %c0_39, %c0_40] : memref<2x8x64xf32, #tpu.memory_space<vmem>>, vector<2x1x64xf32>
    %74 = vector.shape_cast %73 : vector<2x1x64xf32> to vector<2x64xf32>
    %75 = vector.shape_cast %72 : vector<2x64xf32> to vector<2x1x64xf32>
    tpu.vector_store %arg8[%c0_38, %c0_39, %c0_40], %75 {strides = array<i32>} : memref<2x8x64xf32, #tpu.memory_space<vmem>>, vector<2x1x64xf32>,
    %c8_i32_41 = arith.constant 8 : i32
    %76 = arith.muli %arg0, %c8_i32_41 : i32
    %c1_i32_42 = arith.constant 1 : i32
    %77 = arith.addi %76, %c1_i32_42 : i32
    %cst_43 = arith.constant 0.000000e+00 : f32
    %78 = vector.broadcast %cst_43 : f32 to vector<2x64xf32>
    %c1_i32_44 = arith.constant 1 : i32
    %79 = arith.cmpi sge, %77, %c1_i32_44 : i32
    %c1_i32_45 = arith.constant 1 : i32
    %80 = arith.subi %77, %c1_i32_45 : i32
    %c0_i32_46 = arith.constant 0 : i32
    %81 = arith.maxsi %80, %c0_i32_46 : i32
    %82 = arith.index_cast %81 : i32 to index
    %c0_47 = arith.constant 0 : index
    %c0_48 = arith.constant 0 : index
    %83 = vector.load %arg11[%82, %c0_47, %c0_48] : memref<16x2x64xf32, #tpu.memory_space<vmem>>, vector<1x2x64xf32>
    %84 = vector.shape_cast %83 : vector<1x2x64xf32> to vector<2x64xf32>
    %cst_49 = arith.constant 0.000000e+00 : f32
    %85 = vector.broadcast %cst_49 : f32 to vector<2x64xf32>
    %86 = arith.select %79, %84, %85 : vector<2x64xf32>
    %87 = arith.addf %78, %86 : vector<2x64xf32>
    %c2_i32_50 = arith.constant 2 : i32
    %88 = arith.cmpi sge, %77, %c2_i32_50 : i32
    %c2_i32_51 = arith.constant 2 : i32
    %89 = arith.subi %77, %c2_i32_51 : i32
    %c0_i32_52 = arith.constant 0 : i32
    %90 = arith.maxsi %89, %c0_i32_52 : i32
    %91 = arith.index_cast %90 : i32 to index
    %c0_53 = arith.constant 0 : index
    %c0_54 = arith.constant 0 : index
    %92 = vector.load %arg11[%91, %c0_53, %c0_54] : memref<16x2x64xf32, #tpu.memory_space<vmem>>, vector<1x2x64xf32>
    %93 = vector.shape_cast %92 : vector<1x2x64xf32> to vector<2x64xf32>
    %cst_55 = arith.constant 0.000000e+00 : f32
    %94 = vector.broadcast %cst_55 : f32 to vector<2x64xf32>
    %95 = arith.select %88, %93, %94 : vector<2x64xf32>
    %96 = arith.addf %87, %95 : vector<2x64xf32>
    %c4_i32_56 = arith.constant 4 : i32
    %97 = arith.cmpi sge, %77, %c4_i32_56 : i32
    %c4_i32_57 = arith.constant 4 : i32
    %98 = arith.subi %77, %c4_i32_57 : i32
    %c0_i32_58 = arith.constant 0 : i32
    %99 = arith.maxsi %98, %c0_i32_58 : i32
    %100 = arith.index_cast %99 : i32 to index
    %c0_59 = arith.constant 0 : index
    %c0_60 = arith.constant 0 : index
    %101 = vector.load %arg11[%100, %c0_59, %c0_60] : memref<16x2x64xf32, #tpu.memory_space<vmem>>, vector<1x2x64xf32>
    %102 = vector.shape_cast %101 : vector<1x2x64xf32> to vector<2x64xf32>
    %cst_61 = arith.constant 0.000000e+00 : f32
    %103 = vector.broadcast %cst_61 : f32 to vector<2x64xf32>
    %104 = arith.select %97, %102, %103 : vector<2x64xf32>
    %105 = arith.addf %96, %104 : vector<2x64xf32>
    %c8_i32_62 = arith.constant 8 : i32
    %106 = arith.cmpi sge, %77, %c8_i32_62 : i32
    %c8_i32_63 = arith.constant 8 : i32
    %107 = arith.subi %77, %c8_i32_63 : i32
    %c0_i32_64 = arith.constant 0 : i32
    %108 = arith.maxsi %107, %c0_i32_64 : i32
    %109 = arith.index_cast %108 : i32 to index
    %c0_65 = arith.constant 0 : index
    %c0_66 = arith.constant 0 : index
    %110 = vector.load %arg11[%109, %c0_65, %c0_66] : memref<16x2x64xf32, #tpu.memory_space<vmem>>, vector<1x2x64xf32>
    %111 = vector.shape_cast %110 : vector<1x2x64xf32> to vector<2x64xf32>
    %cst_67 = arith.constant 0.000000e+00 : f32
    %112 = vector.broadcast %cst_67 : f32 to vector<2x64xf32>
    %113 = arith.select %106, %111, %112 : vector<2x64xf32>
    %114 = arith.addf %105, %113 : vector<2x64xf32>
    %c1 = arith.constant 1 : index
    %c0_68 = arith.constant 0 : index
    %c0_69 = arith.constant 0 : index
    %115 = vector.load %arg1[%c1, %c0_68, %c0_69] : memref<8x2x256xf32, #tpu.memory_space<vmem>>, vector<1x2x256xf32>
    %116 = vector.shape_cast %115 : vector<1x2x256xf32> to vector<2x256xf32>
    %cst_70 = arith.constant dense<0.000000e+00> : vector<2x256xf32>
    %117 = tpu.matmul %114, %3, %cst_70 {dimension_numbers = #tpu.dot_dimension_numbers<[1], [0], [0], [1], [0, 0, 1, 1], [], []>} : vector<2x64xf32>, vector<64x256xf32>, vector<2x256xf32> -> vector<2x256xf32>
    %118 = arith.addf %116, %117 : vector<2x256xf32>
    %119 = vector.extract_strided_slice %118 {offsets = [0, 0], sizes = [2, 192], strides = [1, 1]} : vector<2x256xf32> to vector<2x192xf32>
    %120 = arith.negf %119 : vector<2x192xf32>
    %121 = math.exp %120 : vector<2x192xf32>
    %cst_71 = arith.constant 1.000000e+00 : f32
    %122 = vector.broadcast %cst_71 : f32 to vector<2x192xf32>
    %123 = arith.addf %122, %121 : vector<2x192xf32>
    %124 = arith.divf %122, %123 : vector<2x192xf32>
    %125 = vector.extract_strided_slice %118 {offsets = [0, 192], sizes = [2, 64], strides = [1, 1]} : vector<2x256xf32> to vector<2x64xf32>
    %126 = math.tanh %125 : vector<2x64xf32>
    %127 = vector.extract_strided_slice %124 {offsets = [0, 0], sizes = [2, 64], strides = [1, 1]} : vector<2x192xf32> to vector<2x64xf32>
    %128 = vector.extract_strided_slice %124 {offsets = [0, 64], sizes = [2, 64], strides = [1, 1]} : vector<2x192xf32> to vector<2x64xf32>
    %129 = vector.extract_strided_slice %124 {offsets = [0, 128], sizes = [2, 64], strides = [1, 1]} : vector<2x192xf32> to vector<2x64xf32>
    %c0_72 = arith.constant 0 : index
    %c0_73 = arith.constant 0 : index
    %130 = vector.load %arg12[%c0_72, %c0_73] : memref<2x64xf32, #tpu.memory_space<vmem>>, vector<2x64xf32>
    %131 = arith.mulf %128, %130 : vector<2x64xf32>
    %132 = arith.mulf %127, %126 : vector<2x64xf32>
    %133 = arith.addf %131, %132 : vector<2x64xf32>
    %134 = math.tanh %133 : vector<2x64xf32>
    %135 = arith.mulf %129, %134 : vector<2x64xf32>
    %c0_74 = arith.constant 0 : index
    %c0_75 = arith.constant 0 : index
    %136 = vector.load %arg12[%c0_74, %c0_75] : memref<2x64xf32, #tpu.memory_space<vmem>>, vector<2x64xf32>
    tpu.vector_store %arg12[%c0_74, %c0_75], %133 {strides = array<i32>} : memref<2x64xf32, #tpu.memory_space<vmem>>, vector<2x64xf32>,
    %137 = arith.index_cast %77 : i32 to index
    %c0_76 = arith.constant 0 : index
    %c0_77 = arith.constant 0 : index
    %138 = vector.load %arg11[%137, %c0_76, %c0_77] : memref<16x2x64xf32, #tpu.memory_space<vmem>>, vector<1x2x64xf32>
    %139 = vector.shape_cast %138 : vector<1x2x64xf32> to vector<2x64xf32>
    %140 = vector.shape_cast %135 : vector<2x64xf32> to vector<1x2x64xf32>
    tpu.vector_store %arg11[%137, %c0_76, %c0_77], %140 {strides = array<i32>} : memref<16x2x64xf32, #tpu.memory_space<vmem>>, vector<1x2x64xf32>,
    %c0_78 = arith.constant 0 : index
    %c1_79 = arith.constant 1 : index
    %c0_80 = arith.constant 0 : index
    %141 = vector.load %arg2[%c0_78, %c1_79, %c0_80] : memref<2x8x1xf32, #tpu.memory_space<vmem>>, vector<2x1x1xf32>
    %142 = vector.shape_cast %141 : vector<2x1x1xf32> to vector<2x1xf32>
    %143 = vector.broadcast %142 : vector<2x1xf32> to vector<2x64xf32>
    %144 = arith.mulf %135, %143 : vector<2x64xf32>
    %c0_81 = arith.constant 0 : index
    %c1_82 = arith.constant 1 : index
    %c0_83 = arith.constant 0 : index
    %145 = vector.load %arg8[%c0_81, %c1_82, %c0_83] : memref<2x8x64xf32, #tpu.memory_space<vmem>>, vector<2x1x64xf32>
    %146 = vector.shape_cast %145 : vector<2x1x64xf32> to vector<2x64xf32>
    %147 = vector.shape_cast %144 : vector<2x64xf32> to vector<2x1x64xf32>
    tpu.vector_store %arg8[%c0_81, %c1_82, %c0_83], %147 {strides = array<i32>} : memref<2x8x64xf32, #tpu.memory_space<vmem>>, vector<2x1x64xf32>,
    %c8_i32_84 = arith.constant 8 : i32
    %148 = arith.muli %arg0, %c8_i32_84 : i32
    %c2_i32_85 = arith.constant 2 : i32
    %149 = arith.addi %148, %c2_i32_85 : i32
    %cst_86 = arith.constant 0.000000e+00 : f32
    %150 = vector.broadcast %cst_86 : f32 to vector<2x64xf32>
    %c1_i32_87 = arith.constant 1 : i32
    %151 = arith.cmpi sge, %149, %c1_i32_87 : i32
    %c1_i32_88 = arith.constant 1 : i32
    %152 = arith.subi %149, %c1_i32_88 : i32
    %c0_i32_89 = arith.constant 0 : i32
    %153 = arith.maxsi %152, %c0_i32_89 : i32
    %154 = arith.index_cast %153 : i32 to index
    %c0_90 = arith.constant 0 : index
    %c0_91 = arith.constant 0 : index
    %155 = vector.load %arg11[%154, %c0_90, %c0_91] : memref<16x2x64xf32, #tpu.memory_space<vmem>>, vector<1x2x64xf32>
    %156 = vector.shape_cast %155 : vector<1x2x64xf32> to vector<2x64xf32>
    %cst_92 = arith.constant 0.000000e+00 : f32
    %157 = vector.broadcast %cst_92 : f32 to vector<2x64xf32>
    %158 = arith.select %151, %156, %157 : vector<2x64xf32>
    %159 = arith.addf %150, %158 : vector<2x64xf32>
    %c2_i32_93 = arith.constant 2 : i32
    %160 = arith.cmpi sge, %149, %c2_i32_93 : i32
    %c2_i32_94 = arith.constant 2 : i32
    %161 = arith.subi %149, %c2_i32_94 : i32
    %c0_i32_95 = arith.constant 0 : i32
    %162 = arith.maxsi %161, %c0_i32_95 : i32
    %163 = arith.index_cast %162 : i32 to index
    %c0_96 = arith.constant 0 : index
    %c0_97 = arith.constant 0 : index
    %164 = vector.load %arg11[%163, %c0_96, %c0_97] : memref<16x2x64xf32, #tpu.memory_space<vmem>>, vector<1x2x64xf32>
    %165 = vector.shape_cast %164 : vector<1x2x64xf32> to vector<2x64xf32>
    %cst_98 = arith.constant 0.000000e+00 : f32
    %166 = vector.broadcast %cst_98 : f32 to vector<2x64xf32>
    %167 = arith.select %160, %165, %166 : vector<2x64xf32>
    %168 = arith.addf %159, %167 : vector<2x64xf32>
    %c4_i32_99 = arith.constant 4 : i32
    %169 = arith.cmpi sge, %149, %c4_i32_99 : i32
    %c4_i32_100 = arith.constant 4 : i32
    %170 = arith.subi %149, %c4_i32_100 : i32
    %c0_i32_101 = arith.constant 0 : i32
    %171 = arith.maxsi %170, %c0_i32_101 : i32
    %172 = arith.index_cast %171 : i32 to index
    %c0_102 = arith.constant 0 : index
    %c0_103 = arith.constant 0 : index
    %173 = vector.load %arg11[%172, %c0_102, %c0_103] : memref<16x2x64xf32, #tpu.memory_space<vmem>>, vector<1x2x64xf32>
    %174 = vector.shape_cast %173 : vector<1x2x64xf32> to vector<2x64xf32>
    %cst_104 = arith.constant 0.000000e+00 : f32
    %175 = vector.broadcast %cst_104 : f32 to vector<2x64xf32>
    %176 = arith.select %169, %174, %175 : vector<2x64xf32>
    %177 = arith.addf %168, %176 : vector<2x64xf32>
    %c8_i32_105 = arith.constant 8 : i32
    %178 = arith.cmpi sge, %149, %c8_i32_105 : i32
    %c8_i32_106 = arith.constant 8 : i32
    %179 = arith.subi %149, %c8_i32_106 : i32
    %c0_i32_107 = arith.constant 0 : i32
    %180 = arith.maxsi %179, %c0_i32_107 : i32
    %181 = arith.index_cast %180 : i32 to index
    %c0_108 = arith.constant 0 : index
    %c0_109 = arith.constant 0 : index
    %182 = vector.load %arg11[%181, %c0_108, %c0_109] : memref<16x2x64xf32, #tpu.memory_space<vmem>>, vector<1x2x64xf32>
    %183 = vector.shape_cast %182 : vector<1x2x64xf32> to vector<2x64xf32>
    %cst_110 = arith.constant 0.000000e+00 : f32
    %184 = vector.broadcast %cst_110 : f32 to vector<2x64xf32>
    %185 = arith.select %178, %183, %184 : vector<2x64xf32>
    %186 = arith.addf %177, %185 : vector<2x64xf32>
    %c2 = arith.constant 2 : index
    %c0_111 = arith.constant 0 : index
    %c0_112 = arith.constant 0 : index
    %187 = vector.load %arg1[%c2, %c0_111, %c0_112] : memref<8x2x256xf32, #tpu.memory_space<vmem>>, vector<1x2x256xf32>
    %188 = vector.shape_cast %187 : vector<1x2x256xf32> to vector<2x256xf32>
    %cst_113 = arith.constant dense<0.000000e+00> : vector<2x256xf32>
    %189 = tpu.matmul %186, %3, %cst_113 {dimension_numbers = #tpu.dot_dimension_numbers<[1], [0], [0], [1], [0, 0, 1, 1], [], []>} : vector<2x64xf32>, vector<64x256xf32>, vector<2x256xf32> -> vector<2x256xf32>
    %190 = arith.addf %188, %189 : vector<2x256xf32>
    %191 = vector.extract_strided_slice %190 {offsets = [0, 0], sizes = [2, 192], strides = [1, 1]} : vector<2x256xf32> to vector<2x192xf32>
    %192 = arith.negf %191 : vector<2x192xf32>
    %193 = math.exp %192 : vector<2x192xf32>
    %cst_114 = arith.constant 1.000000e+00 : f32
    %194 = vector.broadcast %cst_114 : f32 to vector<2x192xf32>
    %195 = arith.addf %194, %193 : vector<2x192xf32>
    %196 = arith.divf %194, %195 : vector<2x192xf32>
    %197 = vector.extract_strided_slice %190 {offsets = [0, 192], sizes = [2, 64], strides = [1, 1]} : vector<2x256xf32> to vector<2x64xf32>
    %198 = math.tanh %197 : vector<2x64xf32>
    %199 = vector.extract_strided_slice %196 {offsets = [0, 0], sizes = [2, 64], strides = [1, 1]} : vector<2x192xf32> to vector<2x64xf32>
    %200 = vector.extract_strided_slice %196 {offsets = [0, 64], sizes = [2, 64], strides = [1, 1]} : vector<2x192xf32> to vector<2x64xf32>
    %201 = vector.extract_strided_slice %196 {offsets = [0, 128], sizes = [2, 64], strides = [1, 1]} : vector<2x192xf32> to vector<2x64xf32>
    %c0_115 = arith.constant 0 : index
    %c0_116 = arith.constant 0 : index
    %202 = vector.load %arg12[%c0_115, %c0_116] : memref<2x64xf32, #tpu.memory_space<vmem>>, vector<2x64xf32>
    %203 = arith.mulf %200, %202 : vector<2x64xf32>
    %204 = arith.mulf %199, %198 : vector<2x64xf32>
    %205 = arith.addf %203, %204 : vector<2x64xf32>
    %206 = math.tanh %205 : vector<2x64xf32>
    %207 = arith.mulf %201, %206 : vector<2x64xf32>
    %c0_117 = arith.constant 0 : index
    %c0_118 = arith.constant 0 : index
    %208 = vector.load %arg12[%c0_117, %c0_118] : memref<2x64xf32, #tpu.memory_space<vmem>>, vector<2x64xf32>
    tpu.vector_store %arg12[%c0_117, %c0_118], %205 {strides = array<i32>} : memref<2x64xf32, #tpu.memory_space<vmem>>, vector<2x64xf32>,
    %209 = arith.index_cast %149 : i32 to index
    %c0_119 = arith.constant 0 : index
    %c0_120 = arith.constant 0 : index
    %210 = vector.load %arg11[%209, %c0_119, %c0_120] : memref<16x2x64xf32, #tpu.memory_space<vmem>>, vector<1x2x64xf32>
    %211 = vector.shape_cast %210 : vector<1x2x64xf32> to vector<2x64xf32>
    %212 = vector.shape_cast %207 : vector<2x64xf32> to vector<1x2x64xf32>
    tpu.vector_store %arg11[%209, %c0_119, %c0_120], %212 {strides = array<i32>} : memref<16x2x64xf32, #tpu.memory_space<vmem>>, vector<1x2x64xf32>,
    %c0_121 = arith.constant 0 : index
    %c2_122 = arith.constant 2 : index
    %c0_123 = arith.constant 0 : index
    %213 = vector.load %arg2[%c0_121, %c2_122, %c0_123] : memref<2x8x1xf32, #tpu.memory_space<vmem>>, vector<2x1x1xf32>
    %214 = vector.shape_cast %213 : vector<2x1x1xf32> to vector<2x1xf32>
    %215 = vector.broadcast %214 : vector<2x1xf32> to vector<2x64xf32>
    %216 = arith.mulf %207, %215 : vector<2x64xf32>
    %c0_124 = arith.constant 0 : index
    %c2_125 = arith.constant 2 : index
    %c0_126 = arith.constant 0 : index
    %217 = vector.load %arg8[%c0_124, %c2_125, %c0_126] : memref<2x8x64xf32, #tpu.memory_space<vmem>>, vector<2x1x64xf32>
    %218 = vector.shape_cast %217 : vector<2x1x64xf32> to vector<2x64xf32>
    %219 = vector.shape_cast %216 : vector<2x64xf32> to vector<2x1x64xf32>
    tpu.vector_store %arg8[%c0_124, %c2_125, %c0_126], %219 {strides = array<i32>} : memref<2x8x64xf32, #tpu.memory_space<vmem>>, vector<2x1x64xf32>,
    %c8_i32_127 = arith.constant 8 : i32
    %220 = arith.muli %arg0, %c8_i32_127 : i32
    %c3_i32 = arith.constant 3 : i32
    %221 = arith.addi %220, %c3_i32 : i32
    %cst_128 = arith.constant 0.000000e+00 : f32
    %222 = vector.broadcast %cst_128 : f32 to vector<2x64xf32>
    %c1_i32_129 = arith.constant 1 : i32
    %223 = arith.cmpi sge, %221, %c1_i32_129 : i32
    %c1_i32_130 = arith.constant 1 : i32
    %224 = arith.subi %221, %c1_i32_130 : i32
    %c0_i32_131 = arith.constant 0 : i32
    %225 = arith.maxsi %224, %c0_i32_131 : i32
    %226 = arith.index_cast %225 : i32 to index
    %c0_132 = arith.constant 0 : index
    %c0_133 = arith.constant 0 : index
    %227 = vector.load %arg11[%226, %c0_132, %c0_133] : memref<16x2x64xf32, #tpu.memory_space<vmem>>, vector<1x2x64xf32>
    %228 = vector.shape_cast %227 : vector<1x2x64xf32> to vector<2x64xf32>
    %cst_134 = arith.constant 0.000000e+00 : f32
    %229 = vector.broadcast %cst_134 : f32 to vector<2x64xf32>
    %230 = arith.select %223, %228, %229 : vector<2x64xf32>
    %231 = arith.addf %222, %230 : vector<2x64xf32>
    %c2_i32_135 = arith.constant 2 : i32
    %232 = arith.cmpi sge, %221, %c2_i32_135 : i32
    %c2_i32_136 = arith.constant 2 : i32
    %233 = arith.subi %221, %c2_i32_136 : i32
    %c0_i32_137 = arith.constant 0 : i32
    %234 = arith.maxsi %233, %c0_i32_137 : i32
    %235 = arith.index_cast %234 : i32 to index
    %c0_138 = arith.constant 0 : index
    %c0_139 = arith.constant 0 : index
    %236 = vector.load %arg11[%235, %c0_138, %c0_139] : memref<16x2x64xf32, #tpu.memory_space<vmem>>, vector<1x2x64xf32>
    %237 = vector.shape_cast %236 : vector<1x2x64xf32> to vector<2x64xf32>
    %cst_140 = arith.constant 0.000000e+00 : f32
    %238 = vector.broadcast %cst_140 : f32 to vector<2x64xf32>
    %239 = arith.select %232, %237, %238 : vector<2x64xf32>
    %240 = arith.addf %231, %239 : vector<2x64xf32>
    %c4_i32_141 = arith.constant 4 : i32
    %241 = arith.cmpi sge, %221, %c4_i32_141 : i32
    %c4_i32_142 = arith.constant 4 : i32
    %242 = arith.subi %221, %c4_i32_142 : i32
    %c0_i32_143 = arith.constant 0 : i32
    %243 = arith.maxsi %242, %c0_i32_143 : i32
    %244 = arith.index_cast %243 : i32 to index
    %c0_144 = arith.constant 0 : index
    %c0_145 = arith.constant 0 : index
    %245 = vector.load %arg11[%244, %c0_144, %c0_145] : memref<16x2x64xf32, #tpu.memory_space<vmem>>, vector<1x2x64xf32>
    %246 = vector.shape_cast %245 : vector<1x2x64xf32> to vector<2x64xf32>
    %cst_146 = arith.constant 0.000000e+00 : f32
    %247 = vector.broadcast %cst_146 : f32 to vector<2x64xf32>
    %248 = arith.select %241, %246, %247 : vector<2x64xf32>
    %249 = arith.addf %240, %248 : vector<2x64xf32>
    %c8_i32_147 = arith.constant 8 : i32
    %250 = arith.cmpi sge, %221, %c8_i32_147 : i32
    %c8_i32_148 = arith.constant 8 : i32
    %251 = arith.subi %221, %c8_i32_148 : i32
    %c0_i32_149 = arith.constant 0 : i32
    %252 = arith.maxsi %251, %c0_i32_149 : i32
    %253 = arith.index_cast %252 : i32 to index
    %c0_150 = arith.constant 0 : index
    %c0_151 = arith.constant 0 : index
    %254 = vector.load %arg11[%253, %c0_150, %c0_151] : memref<16x2x64xf32, #tpu.memory_space<vmem>>, vector<1x2x64xf32>
    %255 = vector.shape_cast %254 : vector<1x2x64xf32> to vector<2x64xf32>
    %cst_152 = arith.constant 0.000000e+00 : f32
    %256 = vector.broadcast %cst_152 : f32 to vector<2x64xf32>
    %257 = arith.select %250, %255, %256 : vector<2x64xf32>
    %258 = arith.addf %249, %257 : vector<2x64xf32>
    %c3 = arith.constant 3 : index
    %c0_153 = arith.constant 0 : index
    %c0_154 = arith.constant 0 : index
    %259 = vector.load %arg1[%c3, %c0_153, %c0_154] : memref<8x2x256xf32, #tpu.memory_space<vmem>>, vector<1x2x256xf32>
    %260 = vector.shape_cast %259 : vector<1x2x256xf32> to vector<2x256xf32>
    %cst_155 = arith.constant dense<0.000000e+00> : vector<2x256xf32>
    %261 = tpu.matmul %258, %3, %cst_155 {dimension_numbers = #tpu.dot_dimension_numbers<[1], [0], [0], [1], [0, 0, 1, 1], [], []>} : vector<2x64xf32>, vector<64x256xf32>, vector<2x256xf32> -> vector<2x256xf32>
    %262 = arith.addf %260, %261 : vector<2x256xf32>
    %263 = vector.extract_strided_slice %262 {offsets = [0, 0], sizes = [2, 192], strides = [1, 1]} : vector<2x256xf32> to vector<2x192xf32>
    %264 = arith.negf %263 : vector<2x192xf32>
    %265 = math.exp %264 : vector<2x192xf32>
    %cst_156 = arith.constant 1.000000e+00 : f32
    %266 = vector.broadcast %cst_156 : f32 to vector<2x192xf32>
    %267 = arith.addf %266, %265 : vector<2x192xf32>
    %268 = arith.divf %266, %267 : vector<2x192xf32>
    %269 = vector.extract_strided_slice %262 {offsets = [0, 192], sizes = [2, 64], strides = [1, 1]} : vector<2x256xf32> to vector<2x64xf32>
    %270 = math.tanh %269 : vector<2x64xf32>
    %271 = vector.extract_strided_slice %268 {offsets = [0, 0], sizes = [2, 64], strides = [1, 1]} : vector<2x192xf32> to vector<2x64xf32>
    %272 = vector.extract_strided_slice %268 {offsets = [0, 64], sizes = [2, 64], strides = [1, 1]} : vector<2x192xf32> to vector<2x64xf32>
    %273 = vector.extract_strided_slice %268 {offsets = [0, 128], sizes = [2, 64], strides = [1, 1]} : vector<2x192xf32> to vector<2x64xf32>
    %c0_157 = arith.constant 0 : index
    %c0_158 = arith.constant 0 : index
    %274 = vector.load %arg12[%c0_157, %c0_158] : memref<2x64xf32, #tpu.memory_space<vmem>>, vector<2x64xf32>
    %275 = arith.mulf %272, %274 : vector<2x64xf32>
    %276 = arith.mulf %271, %270 : vector<2x64xf32>
    %277 = arith.addf %275, %276 : vector<2x64xf32>
    %278 = math.tanh %277 : vector<2x64xf32>
    %279 = arith.mulf %273, %278 : vector<2x64xf32>
    %c0_159 = arith.constant 0 : index
    %c0_160 = arith.constant 0 : index
    %280 = vector.load %arg12[%c0_159, %c0_160] : memref<2x64xf32, #tpu.memory_space<vmem>>, vector<2x64xf32>
    tpu.vector_store %arg12[%c0_159, %c0_160], %277 {strides = array<i32>} : memref<2x64xf32, #tpu.memory_space<vmem>>, vector<2x64xf32>,
    %281 = arith.index_cast %221 : i32 to index
    %c0_161 = arith.constant 0 : index
    %c0_162 = arith.constant 0 : index
    %282 = vector.load %arg11[%281, %c0_161, %c0_162] : memref<16x2x64xf32, #tpu.memory_space<vmem>>, vector<1x2x64xf32>
    %283 = vector.shape_cast %282 : vector<1x2x64xf32> to vector<2x64xf32>
    %284 = vector.shape_cast %279 : vector<2x64xf32> to vector<1x2x64xf32>
    tpu.vector_store %arg11[%281, %c0_161, %c0_162], %284 {strides = array<i32>} : memref<16x2x64xf32, #tpu.memory_space<vmem>>, vector<1x2x64xf32>,
    %c0_163 = arith.constant 0 : index
    %c3_164 = arith.constant 3 : index
    %c0_165 = arith.constant 0 : index
    %285 = vector.load %arg2[%c0_163, %c3_164, %c0_165] : memref<2x8x1xf32, #tpu.memory_space<vmem>>, vector<2x1x1xf32>
    %286 = vector.shape_cast %285 : vector<2x1x1xf32> to vector<2x1xf32>
    %287 = vector.broadcast %286 : vector<2x1xf32> to vector<2x64xf32>
    %288 = arith.mulf %279, %287 : vector<2x64xf32>
    %c0_166 = arith.constant 0 : index
    %c3_167 = arith.constant 3 : index
    %c0_168 = arith.constant 0 : index
    %289 = vector.load %arg8[%c0_166, %c3_167, %c0_168] : memref<2x8x64xf32, #tpu.memory_space<vmem>>, vector<2x1x64xf32>
    %290 = vector.shape_cast %289 : vector<2x1x64xf32> to vector<2x64xf32>
    %291 = vector.shape_cast %288 : vector<2x64xf32> to vector<2x1x64xf32>
    tpu.vector_store %arg8[%c0_166, %c3_167, %c0_168], %291 {strides = array<i32>} : memref<2x8x64xf32, #tpu.memory_space<vmem>>, vector<2x1x64xf32>,
    %c8_i32_169 = arith.constant 8 : i32
    %292 = arith.muli %arg0, %c8_i32_169 : i32
    %c4_i32_170 = arith.constant 4 : i32
    %293 = arith.addi %292, %c4_i32_170 : i32
    %cst_171 = arith.constant 0.000000e+00 : f32
    %294 = vector.broadcast %cst_171 : f32 to vector<2x64xf32>
    %c1_i32_172 = arith.constant 1 : i32
    %295 = arith.cmpi sge, %293, %c1_i32_172 : i32
    %c1_i32_173 = arith.constant 1 : i32
    %296 = arith.subi %293, %c1_i32_173 : i32
    %c0_i32_174 = arith.constant 0 : i32
    %297 = arith.maxsi %296, %c0_i32_174 : i32
    %298 = arith.index_cast %297 : i32 to index
    %c0_175 = arith.constant 0 : index
    %c0_176 = arith.constant 0 : index
    %299 = vector.load %arg11[%298, %c0_175, %c0_176] : memref<16x2x64xf32, #tpu.memory_space<vmem>>, vector<1x2x64xf32>
    %300 = vector.shape_cast %299 : vector<1x2x64xf32> to vector<2x64xf32>
    %cst_177 = arith.constant 0.000000e+00 : f32
    %301 = vector.broadcast %cst_177 : f32 to vector<2x64xf32>
    %302 = arith.select %295, %300, %301 : vector<2x64xf32>
    %303 = arith.addf %294, %302 : vector<2x64xf32>
    %c2_i32_178 = arith.constant 2 : i32
    %304 = arith.cmpi sge, %293, %c2_i32_178 : i32
    %c2_i32_179 = arith.constant 2 : i32
    %305 = arith.subi %293, %c2_i32_179 : i32
    %c0_i32_180 = arith.constant 0 : i32
    %306 = arith.maxsi %305, %c0_i32_180 : i32
    %307 = arith.index_cast %306 : i32 to index
    %c0_181 = arith.constant 0 : index
    %c0_182 = arith.constant 0 : index
    %308 = vector.load %arg11[%307, %c0_181, %c0_182] : memref<16x2x64xf32, #tpu.memory_space<vmem>>, vector<1x2x64xf32>
    %309 = vector.shape_cast %308 : vector<1x2x64xf32> to vector<2x64xf32>
    %cst_183 = arith.constant 0.000000e+00 : f32
    %310 = vector.broadcast %cst_183 : f32 to vector<2x64xf32>
    %311 = arith.select %304, %309, %310 : vector<2x64xf32>
    %312 = arith.addf %303, %311 : vector<2x64xf32>
    %c4_i32_184 = arith.constant 4 : i32
    %313 = arith.cmpi sge, %293, %c4_i32_184 : i32
    %c4_i32_185 = arith.constant 4 : i32
    %314 = arith.subi %293, %c4_i32_185 : i32
    %c0_i32_186 = arith.constant 0 : i32
    %315 = arith.maxsi %314, %c0_i32_186 : i32
    %316 = arith.index_cast %315 : i32 to index
    %c0_187 = arith.constant 0 : index
    %c0_188 = arith.constant 0 : index
    %317 = vector.load %arg11[%316, %c0_187, %c0_188] : memref<16x2x64xf32, #tpu.memory_space<vmem>>, vector<1x2x64xf32>
    %318 = vector.shape_cast %317 : vector<1x2x64xf32> to vector<2x64xf32>
    %cst_189 = arith.constant 0.000000e+00 : f32
    %319 = vector.broadcast %cst_189 : f32 to vector<2x64xf32>
    %320 = arith.select %313, %318, %319 : vector<2x64xf32>
    %321 = arith.addf %312, %320 : vector<2x64xf32>
    %c8_i32_190 = arith.constant 8 : i32
    %322 = arith.cmpi sge, %293, %c8_i32_190 : i32
    %c8_i32_191 = arith.constant 8 : i32
    %323 = arith.subi %293, %c8_i32_191 : i32
    %c0_i32_192 = arith.constant 0 : i32
    %324 = arith.maxsi %323, %c0_i32_192 : i32
    %325 = arith.index_cast %324 : i32 to index
    %c0_193 = arith.constant 0 : index
    %c0_194 = arith.constant 0 : index
    %326 = vector.load %arg11[%325, %c0_193, %c0_194] : memref<16x2x64xf32, #tpu.memory_space<vmem>>, vector<1x2x64xf32>
    %327 = vector.shape_cast %326 : vector<1x2x64xf32> to vector<2x64xf32>
    %cst_195 = arith.constant 0.000000e+00 : f32
    %328 = vector.broadcast %cst_195 : f32 to vector<2x64xf32>
    %329 = arith.select %322, %327, %328 : vector<2x64xf32>
    %330 = arith.addf %321, %329 : vector<2x64xf32>
    %c4 = arith.constant 4 : index
    %c0_196 = arith.constant 0 : index
    %c0_197 = arith.constant 0 : index
    %331 = vector.load %arg1[%c4, %c0_196, %c0_197] : memref<8x2x256xf32, #tpu.memory_space<vmem>>, vector<1x2x256xf32>
    %332 = vector.shape_cast %331 : vector<1x2x256xf32> to vector<2x256xf32>
    %cst_198 = arith.constant dense<0.000000e+00> : vector<2x256xf32>
    %333 = tpu.matmul %330, %3, %cst_198 {dimension_numbers = #tpu.dot_dimension_numbers<[1], [0], [0], [1], [0, 0, 1, 1], [], []>} : vector<2x64xf32>, vector<64x256xf32>, vector<2x256xf32> -> vector<2x256xf32>
    %334 = arith.addf %332, %333 : vector<2x256xf32>
    %335 = vector.extract_strided_slice %334 {offsets = [0, 0], sizes = [2, 192], strides = [1, 1]} : vector<2x256xf32> to vector<2x192xf32>
    %336 = arith.negf %335 : vector<2x192xf32>
    %337 = math.exp %336 : vector<2x192xf32>
    %cst_199 = arith.constant 1.000000e+00 : f32
    %338 = vector.broadcast %cst_199 : f32 to vector<2x192xf32>
    %339 = arith.addf %338, %337 : vector<2x192xf32>
    %340 = arith.divf %338, %339 : vector<2x192xf32>
    %341 = vector.extract_strided_slice %334 {offsets = [0, 192], sizes = [2, 64], strides = [1, 1]} : vector<2x256xf32> to vector<2x64xf32>
    %342 = math.tanh %341 : vector<2x64xf32>
    %343 = vector.extract_strided_slice %340 {offsets = [0, 0], sizes = [2, 64], strides = [1, 1]} : vector<2x192xf32> to vector<2x64xf32>
    %344 = vector.extract_strided_slice %340 {offsets = [0, 64], sizes = [2, 64], strides = [1, 1]} : vector<2x192xf32> to vector<2x64xf32>
    %345 = vector.extract_strided_slice %340 {offsets = [0, 128], sizes = [2, 64], strides = [1, 1]} : vector<2x192xf32> to vector<2x64xf32>
    %c0_200 = arith.constant 0 : index
    %c0_201 = arith.constant 0 : index
    %346 = vector.load %arg12[%c0_200, %c0_201] : memref<2x64xf32, #tpu.memory_space<vmem>>, vector<2x64xf32>
    %347 = arith.mulf %344, %346 : vector<2x64xf32>
    %348 = arith.mulf %343, %342 : vector<2x64xf32>
    %349 = arith.addf %347, %348 : vector<2x64xf32>
    %350 = math.tanh %349 : vector<2x64xf32>
    %351 = arith.mulf %345, %350 : vector<2x64xf32>
    %c0_202 = arith.constant 0 : index
    %c0_203 = arith.constant 0 : index
    %352 = vector.load %arg12[%c0_202, %c0_203] : memref<2x64xf32, #tpu.memory_space<vmem>>, vector<2x64xf32>
    tpu.vector_store %arg12[%c0_202, %c0_203], %349 {strides = array<i32>} : memref<2x64xf32, #tpu.memory_space<vmem>>, vector<2x64xf32>,
    %353 = arith.index_cast %293 : i32 to index
    %c0_204 = arith.constant 0 : index
    %c0_205 = arith.constant 0 : index
    %354 = vector.load %arg11[%353, %c0_204, %c0_205] : memref<16x2x64xf32, #tpu.memory_space<vmem>>, vector<1x2x64xf32>
    %355 = vector.shape_cast %354 : vector<1x2x64xf32> to vector<2x64xf32>
    %356 = vector.shape_cast %351 : vector<2x64xf32> to vector<1x2x64xf32>
    tpu.vector_store %arg11[%353, %c0_204, %c0_205], %356 {strides = array<i32>} : memref<16x2x64xf32, #tpu.memory_space<vmem>>, vector<1x2x64xf32>,
    %c0_206 = arith.constant 0 : index
    %c4_207 = arith.constant 4 : index
    %c0_208 = arith.constant 0 : index
    %357 = vector.load %arg2[%c0_206, %c4_207, %c0_208] : memref<2x8x1xf32, #tpu.memory_space<vmem>>, vector<2x1x1xf32>
    %358 = vector.shape_cast %357 : vector<2x1x1xf32> to vector<2x1xf32>
    %359 = vector.broadcast %358 : vector<2x1xf32> to vector<2x64xf32>
    %360 = arith.mulf %351, %359 : vector<2x64xf32>
    %c0_209 = arith.constant 0 : index
    %c4_210 = arith.constant 4 : index
    %c0_211 = arith.constant 0 : index
    %361 = vector.load %arg8[%c0_209, %c4_210, %c0_211] : memref<2x8x64xf32, #tpu.memory_space<vmem>>, vector<2x1x64xf32>
    %362 = vector.shape_cast %361 : vector<2x1x64xf32> to vector<2x64xf32>
    %363 = vector.shape_cast %360 : vector<2x64xf32> to vector<2x1x64xf32>
    tpu.vector_store %arg8[%c0_209, %c4_210, %c0_211], %363 {strides = array<i32>} : memref<2x8x64xf32, #tpu.memory_space<vmem>>, vector<2x1x64xf32>,
    %c8_i32_212 = arith.constant 8 : i32
    %364 = arith.muli %arg0, %c8_i32_212 : i32
    %c5_i32 = arith.constant 5 : i32
    %365 = arith.addi %364, %c5_i32 : i32
    %cst_213 = arith.constant 0.000000e+00 : f32
    %366 = vector.broadcast %cst_213 : f32 to vector<2x64xf32>
    %c1_i32_214 = arith.constant 1 : i32
    %367 = arith.cmpi sge, %365, %c1_i32_214 : i32
    %c1_i32_215 = arith.constant 1 : i32
    %368 = arith.subi %365, %c1_i32_215 : i32
    %c0_i32_216 = arith.constant 0 : i32
    %369 = arith.maxsi %368, %c0_i32_216 : i32
    %370 = arith.index_cast %369 : i32 to index
    %c0_217 = arith.constant 0 : index
    %c0_218 = arith.constant 0 : index
    %371 = vector.load %arg11[%370, %c0_217, %c0_218] : memref<16x2x64xf32, #tpu.memory_space<vmem>>, vector<1x2x64xf32>
    %372 = vector.shape_cast %371 : vector<1x2x64xf32> to vector<2x64xf32>
    %cst_219 = arith.constant 0.000000e+00 : f32
    %373 = vector.broadcast %cst_219 : f32 to vector<2x64xf32>
    %374 = arith.select %367, %372, %373 : vector<2x64xf32>
    %375 = arith.addf %366, %374 : vector<2x64xf32>
    %c2_i32_220 = arith.constant 2 : i32
    %376 = arith.cmpi sge, %365, %c2_i32_220 : i32
    %c2_i32_221 = arith.constant 2 : i32
    %377 = arith.subi %365, %c2_i32_221 : i32
    %c0_i32_222 = arith.constant 0 : i32
    %378 = arith.maxsi %377, %c0_i32_222 : i32
    %379 = arith.index_cast %378 : i32 to index
    %c0_223 = arith.constant 0 : index
    %c0_224 = arith.constant 0 : index
    %380 = vector.load %arg11[%379, %c0_223, %c0_224] : memref<16x2x64xf32, #tpu.memory_space<vmem>>, vector<1x2x64xf32>
    %381 = vector.shape_cast %380 : vector<1x2x64xf32> to vector<2x64xf32>
    %cst_225 = arith.constant 0.000000e+00 : f32
    %382 = vector.broadcast %cst_225 : f32 to vector<2x64xf32>
    %383 = arith.select %376, %381, %382 : vector<2x64xf32>
    %384 = arith.addf %375, %383 : vector<2x64xf32>
    %c4_i32_226 = arith.constant 4 : i32
    %385 = arith.cmpi sge, %365, %c4_i32_226 : i32
    %c4_i32_227 = arith.constant 4 : i32
    %386 = arith.subi %365, %c4_i32_227 : i32
    %c0_i32_228 = arith.constant 0 : i32
    %387 = arith.maxsi %386, %c0_i32_228 : i32
    %388 = arith.index_cast %387 : i32 to index
    %c0_229 = arith.constant 0 : index
    %c0_230 = arith.constant 0 : index
    %389 = vector.load %arg11[%388, %c0_229, %c0_230] : memref<16x2x64xf32, #tpu.memory_space<vmem>>, vector<1x2x64xf32>
    %390 = vector.shape_cast %389 : vector<1x2x64xf32> to vector<2x64xf32>
    %cst_231 = arith.constant 0.000000e+00 : f32
    %391 = vector.broadcast %cst_231 : f32 to vector<2x64xf32>
    %392 = arith.select %385, %390, %391 : vector<2x64xf32>
    %393 = arith.addf %384, %392 : vector<2x64xf32>
    %c8_i32_232 = arith.constant 8 : i32
    %394 = arith.cmpi sge, %365, %c8_i32_232 : i32
    %c8_i32_233 = arith.constant 8 : i32
    %395 = arith.subi %365, %c8_i32_233 : i32
    %c0_i32_234 = arith.constant 0 : i32
    %396 = arith.maxsi %395, %c0_i32_234 : i32
    %397 = arith.index_cast %396 : i32 to index
    %c0_235 = arith.constant 0 : index
    %c0_236 = arith.constant 0 : index
    %398 = vector.load %arg11[%397, %c0_235, %c0_236] : memref<16x2x64xf32, #tpu.memory_space<vmem>>, vector<1x2x64xf32>
    %399 = vector.shape_cast %398 : vector<1x2x64xf32> to vector<2x64xf32>
    %cst_237 = arith.constant 0.000000e+00 : f32
    %400 = vector.broadcast %cst_237 : f32 to vector<2x64xf32>
    %401 = arith.select %394, %399, %400 : vector<2x64xf32>
    %402 = arith.addf %393, %401 : vector<2x64xf32>
    %c5 = arith.constant 5 : index
    %c0_238 = arith.constant 0 : index
    %c0_239 = arith.constant 0 : index
    %403 = vector.load %arg1[%c5, %c0_238, %c0_239] : memref<8x2x256xf32, #tpu.memory_space<vmem>>, vector<1x2x256xf32>
    %404 = vector.shape_cast %403 : vector<1x2x256xf32> to vector<2x256xf32>
    %cst_240 = arith.constant dense<0.000000e+00> : vector<2x256xf32>
    %405 = tpu.matmul %402, %3, %cst_240 {dimension_numbers = #tpu.dot_dimension_numbers<[1], [0], [0], [1], [0, 0, 1, 1], [], []>} : vector<2x64xf32>, vector<64x256xf32>, vector<2x256xf32> -> vector<2x256xf32>
    %406 = arith.addf %404, %405 : vector<2x256xf32>
    %407 = vector.extract_strided_slice %406 {offsets = [0, 0], sizes = [2, 192], strides = [1, 1]} : vector<2x256xf32> to vector<2x192xf32>
    %408 = arith.negf %407 : vector<2x192xf32>
    %409 = math.exp %408 : vector<2x192xf32>
    %cst_241 = arith.constant 1.000000e+00 : f32
    %410 = vector.broadcast %cst_241 : f32 to vector<2x192xf32>
    %411 = arith.addf %410, %409 : vector<2x192xf32>
    %412 = arith.divf %410, %411 : vector<2x192xf32>
    %413 = vector.extract_strided_slice %406 {offsets = [0, 192], sizes = [2, 64], strides = [1, 1]} : vector<2x256xf32> to vector<2x64xf32>
    %414 = math.tanh %413 : vector<2x64xf32>
    %415 = vector.extract_strided_slice %412 {offsets = [0, 0], sizes = [2, 64], strides = [1, 1]} : vector<2x192xf32> to vector<2x64xf32>
    %416 = vector.extract_strided_slice %412 {offsets = [0, 64], sizes = [2, 64], strides = [1, 1]} : vector<2x192xf32> to vector<2x64xf32>
    %417 = vector.extract_strided_slice %412 {offsets = [0, 128], sizes = [2, 64], strides = [1, 1]} : vector<2x192xf32> to vector<2x64xf32>
    %c0_242 = arith.constant 0 : index
    %c0_243 = arith.constant 0 : index
    %418 = vector.load %arg12[%c0_242, %c0_243] : memref<2x64xf32, #tpu.memory_space<vmem>>, vector<2x64xf32>
    %419 = arith.mulf %416, %418 : vector<2x64xf32>
    %420 = arith.mulf %415, %414 : vector<2x64xf32>
    %421 = arith.addf %419, %420 : vector<2x64xf32>
    %422 = math.tanh %421 : vector<2x64xf32>
    %423 = arith.mulf %417, %422 : vector<2x64xf32>
    %c0_244 = arith.constant 0 : index
    %c0_245 = arith.constant 0 : index
    %424 = vector.load %arg12[%c0_244, %c0_245] : memref<2x64xf32, #tpu.memory_space<vmem>>, vector<2x64xf32>
    tpu.vector_store %arg12[%c0_244, %c0_245], %421 {strides = array<i32>} : memref<2x64xf32, #tpu.memory_space<vmem>>, vector<2x64xf32>,
    %425 = arith.index_cast %365 : i32 to index
    %c0_246 = arith.constant 0 : index
    %c0_247 = arith.constant 0 : index
    %426 = vector.load %arg11[%425, %c0_246, %c0_247] : memref<16x2x64xf32, #tpu.memory_space<vmem>>, vector<1x2x64xf32>
    %427 = vector.shape_cast %426 : vector<1x2x64xf32> to vector<2x64xf32>
    %428 = vector.shape_cast %423 : vector<2x64xf32> to vector<1x2x64xf32>
    tpu.vector_store %arg11[%425, %c0_246, %c0_247], %428 {strides = array<i32>} : memref<16x2x64xf32, #tpu.memory_space<vmem>>, vector<1x2x64xf32>,
    %c0_248 = arith.constant 0 : index
    %c5_249 = arith.constant 5 : index
    %c0_250 = arith.constant 0 : index
    %429 = vector.load %arg2[%c0_248, %c5_249, %c0_250] : memref<2x8x1xf32, #tpu.memory_space<vmem>>, vector<2x1x1xf32>
    %430 = vector.shape_cast %429 : vector<2x1x1xf32> to vector<2x1xf32>
    %431 = vector.broadcast %430 : vector<2x1xf32> to vector<2x64xf32>
    %432 = arith.mulf %423, %431 : vector<2x64xf32>
    %c0_251 = arith.constant 0 : index
    %c5_252 = arith.constant 5 : index
    %c0_253 = arith.constant 0 : index
    %433 = vector.load %arg8[%c0_251, %c5_252, %c0_253] : memref<2x8x64xf32, #tpu.memory_space<vmem>>, vector<2x1x64xf32>
    %434 = vector.shape_cast %433 : vector<2x1x64xf32> to vector<2x64xf32>
    %435 = vector.shape_cast %432 : vector<2x64xf32> to vector<2x1x64xf32>
    tpu.vector_store %arg8[%c0_251, %c5_252, %c0_253], %435 {strides = array<i32>} : memref<2x8x64xf32, #tpu.memory_space<vmem>>, vector<2x1x64xf32>,
    %c8_i32_254 = arith.constant 8 : i32
    %436 = arith.muli %arg0, %c8_i32_254 : i32
    %c6_i32 = arith.constant 6 : i32
    %437 = arith.addi %436, %c6_i32 : i32
    %cst_255 = arith.constant 0.000000e+00 : f32
    %438 = vector.broadcast %cst_255 : f32 to vector<2x64xf32>
    %c1_i32_256 = arith.constant 1 : i32
    %439 = arith.cmpi sge, %437, %c1_i32_256 : i32
    %c1_i32_257 = arith.constant 1 : i32
    %440 = arith.subi %437, %c1_i32_257 : i32
    %c0_i32_258 = arith.constant 0 : i32
    %441 = arith.maxsi %440, %c0_i32_258 : i32
    %442 = arith.index_cast %441 : i32 to index
    %c0_259 = arith.constant 0 : index
    %c0_260 = arith.constant 0 : index
    %443 = vector.load %arg11[%442, %c0_259, %c0_260] : memref<16x2x64xf32, #tpu.memory_space<vmem>>, vector<1x2x64xf32>
    %444 = vector.shape_cast %443 : vector<1x2x64xf32> to vector<2x64xf32>
    %cst_261 = arith.constant 0.000000e+00 : f32
    %445 = vector.broadcast %cst_261 : f32 to vector<2x64xf32>
    %446 = arith.select %439, %444, %445 : vector<2x64xf32>
    %447 = arith.addf %438, %446 : vector<2x64xf32>
    %c2_i32_262 = arith.constant 2 : i32
    %448 = arith.cmpi sge, %437, %c2_i32_262 : i32
    %c2_i32_263 = arith.constant 2 : i32
    %449 = arith.subi %437, %c2_i32_263 : i32
    %c0_i32_264 = arith.constant 0 : i32
    %450 = arith.maxsi %449, %c0_i32_264 : i32
    %451 = arith.index_cast %450 : i32 to index
    %c0_265 = arith.constant 0 : index
    %c0_266 = arith.constant 0 : index
    %452 = vector.load %arg11[%451, %c0_265, %c0_266] : memref<16x2x64xf32, #tpu.memory_space<vmem>>, vector<1x2x64xf32>
    %453 = vector.shape_cast %452 : vector<1x2x64xf32> to vector<2x64xf32>
    %cst_267 = arith.constant 0.000000e+00 : f32
    %454 = vector.broadcast %cst_267 : f32 to vector<2x64xf32>
    %455 = arith.select %448, %453, %454 : vector<2x64xf32>
    %456 = arith.addf %447, %455 : vector<2x64xf32>
    %c4_i32_268 = arith.constant 4 : i32
    %457 = arith.cmpi sge, %437, %c4_i32_268 : i32
    %c4_i32_269 = arith.constant 4 : i32
    %458 = arith.subi %437, %c4_i32_269 : i32
    %c0_i32_270 = arith.constant 0 : i32
    %459 = arith.maxsi %458, %c0_i32_270 : i32
    %460 = arith.index_cast %459 : i32 to index
    %c0_271 = arith.constant 0 : index
    %c0_272 = arith.constant 0 : index
    %461 = vector.load %arg11[%460, %c0_271, %c0_272] : memref<16x2x64xf32, #tpu.memory_space<vmem>>, vector<1x2x64xf32>
    %462 = vector.shape_cast %461 : vector<1x2x64xf32> to vector<2x64xf32>
    %cst_273 = arith.constant 0.000000e+00 : f32
    %463 = vector.broadcast %cst_273 : f32 to vector<2x64xf32>
    %464 = arith.select %457, %462, %463 : vector<2x64xf32>
    %465 = arith.addf %456, %464 : vector<2x64xf32>
    %c8_i32_274 = arith.constant 8 : i32
    %466 = arith.cmpi sge, %437, %c8_i32_274 : i32
    %c8_i32_275 = arith.constant 8 : i32
    %467 = arith.subi %437, %c8_i32_275 : i32
    %c0_i32_276 = arith.constant 0 : i32
    %468 = arith.maxsi %467, %c0_i32_276 : i32
    %469 = arith.index_cast %468 : i32 to index
    %c0_277 = arith.constant 0 : index
    %c0_278 = arith.constant 0 : index
    %470 = vector.load %arg11[%469, %c0_277, %c0_278] : memref<16x2x64xf32, #tpu.memory_space<vmem>>, vector<1x2x64xf32>
    %471 = vector.shape_cast %470 : vector<1x2x64xf32> to vector<2x64xf32>
    %cst_279 = arith.constant 0.000000e+00 : f32
    %472 = vector.broadcast %cst_279 : f32 to vector<2x64xf32>
    %473 = arith.select %466, %471, %472 : vector<2x64xf32>
    %474 = arith.addf %465, %473 : vector<2x64xf32>
    %c6 = arith.constant 6 : index
    %c0_280 = arith.constant 0 : index
    %c0_281 = arith.constant 0 : index
    %475 = vector.load %arg1[%c6, %c0_280, %c0_281] : memref<8x2x256xf32, #tpu.memory_space<vmem>>, vector<1x2x256xf32>
    %476 = vector.shape_cast %475 : vector<1x2x256xf32> to vector<2x256xf32>
    %cst_282 = arith.constant dense<0.000000e+00> : vector<2x256xf32>
    %477 = tpu.matmul %474, %3, %cst_282 {dimension_numbers = #tpu.dot_dimension_numbers<[1], [0], [0], [1], [0, 0, 1, 1], [], []>} : vector<2x64xf32>, vector<64x256xf32>, vector<2x256xf32> -> vector<2x256xf32>
    %478 = arith.addf %476, %477 : vector<2x256xf32>
    %479 = vector.extract_strided_slice %478 {offsets = [0, 0], sizes = [2, 192], strides = [1, 1]} : vector<2x256xf32> to vector<2x192xf32>
    %480 = arith.negf %479 : vector<2x192xf32>
    %481 = math.exp %480 : vector<2x192xf32>
    %cst_283 = arith.constant 1.000000e+00 : f32
    %482 = vector.broadcast %cst_283 : f32 to vector<2x192xf32>
    %483 = arith.addf %482, %481 : vector<2x192xf32>
    %484 = arith.divf %482, %483 : vector<2x192xf32>
    %485 = vector.extract_strided_slice %478 {offsets = [0, 192], sizes = [2, 64], strides = [1, 1]} : vector<2x256xf32> to vector<2x64xf32>
    %486 = math.tanh %485 : vector<2x64xf32>
    %487 = vector.extract_strided_slice %484 {offsets = [0, 0], sizes = [2, 64], strides = [1, 1]} : vector<2x192xf32> to vector<2x64xf32>
    %488 = vector.extract_strided_slice %484 {offsets = [0, 64], sizes = [2, 64], strides = [1, 1]} : vector<2x192xf32> to vector<2x64xf32>
    %489 = vector.extract_strided_slice %484 {offsets = [0, 128], sizes = [2, 64], strides = [1, 1]} : vector<2x192xf32> to vector<2x64xf32>
    %c0_284 = arith.constant 0 : index
    %c0_285 = arith.constant 0 : index
    %490 = vector.load %arg12[%c0_284, %c0_285] : memref<2x64xf32, #tpu.memory_space<vmem>>, vector<2x64xf32>
    %491 = arith.mulf %488, %490 : vector<2x64xf32>
    %492 = arith.mulf %487, %486 : vector<2x64xf32>
    %493 = arith.addf %491, %492 : vector<2x64xf32>
    %494 = math.tanh %493 : vector<2x64xf32>
    %495 = arith.mulf %489, %494 : vector<2x64xf32>
    %c0_286 = arith.constant 0 : index
    %c0_287 = arith.constant 0 : index
    %496 = vector.load %arg12[%c0_286, %c0_287] : memref<2x64xf32, #tpu.memory_space<vmem>>, vector<2x64xf32>
    tpu.vector_store %arg12[%c0_286, %c0_287], %493 {strides = array<i32>} : memref<2x64xf32, #tpu.memory_space<vmem>>, vector<2x64xf32>,
    %497 = arith.index_cast %437 : i32 to index
    %c0_288 = arith.constant 0 : index
    %c0_289 = arith.constant 0 : index
    %498 = vector.load %arg11[%497, %c0_288, %c0_289] : memref<16x2x64xf32, #tpu.memory_space<vmem>>, vector<1x2x64xf32>
    %499 = vector.shape_cast %498 : vector<1x2x64xf32> to vector<2x64xf32>
    %500 = vector.shape_cast %495 : vector<2x64xf32> to vector<1x2x64xf32>
    tpu.vector_store %arg11[%497, %c0_288, %c0_289], %500 {strides = array<i32>} : memref<16x2x64xf32, #tpu.memory_space<vmem>>, vector<1x2x64xf32>,
    %c0_290 = arith.constant 0 : index
    %c6_291 = arith.constant 6 : index
    %c0_292 = arith.constant 0 : index
    %501 = vector.load %arg2[%c0_290, %c6_291, %c0_292] : memref<2x8x1xf32, #tpu.memory_space<vmem>>, vector<2x1x1xf32>
    %502 = vector.shape_cast %501 : vector<2x1x1xf32> to vector<2x1xf32>
    %503 = vector.broadcast %502 : vector<2x1xf32> to vector<2x64xf32>
    %504 = arith.mulf %495, %503 : vector<2x64xf32>
    %c0_293 = arith.constant 0 : index
    %c6_294 = arith.constant 6 : index
    %c0_295 = arith.constant 0 : index
    %505 = vector.load %arg8[%c0_293, %c6_294, %c0_295] : memref<2x8x64xf32, #tpu.memory_space<vmem>>, vector<2x1x64xf32>
    %506 = vector.shape_cast %505 : vector<2x1x64xf32> to vector<2x64xf32>
    %507 = vector.shape_cast %504 : vector<2x64xf32> to vector<2x1x64xf32>
    tpu.vector_store %arg8[%c0_293, %c6_294, %c0_295], %507 {strides = array<i32>} : memref<2x8x64xf32, #tpu.memory_space<vmem>>, vector<2x1x64xf32>,
    %c8_i32_296 = arith.constant 8 : i32
    %508 = arith.muli %arg0, %c8_i32_296 : i32
    %c7_i32 = arith.constant 7 : i32
    %509 = arith.addi %508, %c7_i32 : i32
    %cst_297 = arith.constant 0.000000e+00 : f32
    %510 = vector.broadcast %cst_297 : f32 to vector<2x64xf32>
    %c1_i32_298 = arith.constant 1 : i32
    %511 = arith.cmpi sge, %509, %c1_i32_298 : i32
    %c1_i32_299 = arith.constant 1 : i32
    %512 = arith.subi %509, %c1_i32_299 : i32
    %c0_i32_300 = arith.constant 0 : i32
    %513 = arith.maxsi %512, %c0_i32_300 : i32
    %514 = arith.index_cast %513 : i32 to index
    %c0_301 = arith.constant 0 : index
    %c0_302 = arith.constant 0 : index
    %515 = vector.load %arg11[%514, %c0_301, %c0_302] : memref<16x2x64xf32, #tpu.memory_space<vmem>>, vector<1x2x64xf32>
    %516 = vector.shape_cast %515 : vector<1x2x64xf32> to vector<2x64xf32>
    %cst_303 = arith.constant 0.000000e+00 : f32
    %517 = vector.broadcast %cst_303 : f32 to vector<2x64xf32>
    %518 = arith.select %511, %516, %517 : vector<2x64xf32>
    %519 = arith.addf %510, %518 : vector<2x64xf32>
    %c2_i32_304 = arith.constant 2 : i32
    %520 = arith.cmpi sge, %509, %c2_i32_304 : i32
    %c2_i32_305 = arith.constant 2 : i32
    %521 = arith.subi %509, %c2_i32_305 : i32
    %c0_i32_306 = arith.constant 0 : i32
    %522 = arith.maxsi %521, %c0_i32_306 : i32
    %523 = arith.index_cast %522 : i32 to index
    %c0_307 = arith.constant 0 : index
    %c0_308 = arith.constant 0 : index
    %524 = vector.load %arg11[%523, %c0_307, %c0_308] : memref<16x2x64xf32, #tpu.memory_space<vmem>>, vector<1x2x64xf32>
    %525 = vector.shape_cast %524 : vector<1x2x64xf32> to vector<2x64xf32>
    %cst_309 = arith.constant 0.000000e+00 : f32
    %526 = vector.broadcast %cst_309 : f32 to vector<2x64xf32>
    %527 = arith.select %520, %525, %526 : vector<2x64xf32>
    %528 = arith.addf %519, %527 : vector<2x64xf32>
    %c4_i32_310 = arith.constant 4 : i32
    %529 = arith.cmpi sge, %509, %c4_i32_310 : i32
    %c4_i32_311 = arith.constant 4 : i32
    %530 = arith.subi %509, %c4_i32_311 : i32
    %c0_i32_312 = arith.constant 0 : i32
    %531 = arith.maxsi %530, %c0_i32_312 : i32
    %532 = arith.index_cast %531 : i32 to index
    %c0_313 = arith.constant 0 : index
    %c0_314 = arith.constant 0 : index
    %533 = vector.load %arg11[%532, %c0_313, %c0_314] : memref<16x2x64xf32, #tpu.memory_space<vmem>>, vector<1x2x64xf32>
    %534 = vector.shape_cast %533 : vector<1x2x64xf32> to vector<2x64xf32>
    %cst_315 = arith.constant 0.000000e+00 : f32
    %535 = vector.broadcast %cst_315 : f32 to vector<2x64xf32>
    %536 = arith.select %529, %534, %535 : vector<2x64xf32>
    %537 = arith.addf %528, %536 : vector<2x64xf32>
    %c8_i32_316 = arith.constant 8 : i32
    %538 = arith.cmpi sge, %509, %c8_i32_316 : i32
    %c8_i32_317 = arith.constant 8 : i32
    %539 = arith.subi %509, %c8_i32_317 : i32
    %c0_i32_318 = arith.constant 0 : i32
    %540 = arith.maxsi %539, %c0_i32_318 : i32
    %541 = arith.index_cast %540 : i32 to index
    %c0_319 = arith.constant 0 : index
    %c0_320 = arith.constant 0 : index
    %542 = vector.load %arg11[%541, %c0_319, %c0_320] : memref<16x2x64xf32, #tpu.memory_space<vmem>>, vector<1x2x64xf32>
    %543 = vector.shape_cast %542 : vector<1x2x64xf32> to vector<2x64xf32>
    %cst_321 = arith.constant 0.000000e+00 : f32
    %544 = vector.broadcast %cst_321 : f32 to vector<2x64xf32>
    %545 = arith.select %538, %543, %544 : vector<2x64xf32>
    %546 = arith.addf %537, %545 : vector<2x64xf32>
    %c7 = arith.constant 7 : index
    %c0_322 = arith.constant 0 : index
    %c0_323 = arith.constant 0 : index
    %547 = vector.load %arg1[%c7, %c0_322, %c0_323] : memref<8x2x256xf32, #tpu.memory_space<vmem>>, vector<1x2x256xf32>
    %548 = vector.shape_cast %547 : vector<1x2x256xf32> to vector<2x256xf32>
    %cst_324 = arith.constant dense<0.000000e+00> : vector<2x256xf32>
    %549 = tpu.matmul %546, %3, %cst_324 {dimension_numbers = #tpu.dot_dimension_numbers<[1], [0], [0], [1], [0, 0, 1, 1], [], []>} : vector<2x64xf32>, vector<64x256xf32>, vector<2x256xf32> -> vector<2x256xf32>
    %550 = arith.addf %548, %549 : vector<2x256xf32>
    %551 = vector.extract_strided_slice %550 {offsets = [0, 0], sizes = [2, 192], strides = [1, 1]} : vector<2x256xf32> to vector<2x192xf32>
    %552 = arith.negf %551 : vector<2x192xf32>
    %553 = math.exp %552 : vector<2x192xf32>
    %cst_325 = arith.constant 1.000000e+00 : f32
    %554 = vector.broadcast %cst_325 : f32 to vector<2x192xf32>
    %555 = arith.addf %554, %553 : vector<2x192xf32>
    %556 = arith.divf %554, %555 : vector<2x192xf32>
    %557 = vector.extract_strided_slice %550 {offsets = [0, 192], sizes = [2, 64], strides = [1, 1]} : vector<2x256xf32> to vector<2x64xf32>
    %558 = math.tanh %557 : vector<2x64xf32>
    %559 = vector.extract_strided_slice %556 {offsets = [0, 0], sizes = [2, 64], strides = [1, 1]} : vector<2x192xf32> to vector<2x64xf32>
    %560 = vector.extract_strided_slice %556 {offsets = [0, 64], sizes = [2, 64], strides = [1, 1]} : vector<2x192xf32> to vector<2x64xf32>
    %561 = vector.extract_strided_slice %556 {offsets = [0, 128], sizes = [2, 64], strides = [1, 1]} : vector<2x192xf32> to vector<2x64xf32>
    %c0_326 = arith.constant 0 : index
    %c0_327 = arith.constant 0 : index
    %562 = vector.load %arg12[%c0_326, %c0_327] : memref<2x64xf32, #tpu.memory_space<vmem>>, vector<2x64xf32>
    %563 = arith.mulf %560, %562 : vector<2x64xf32>
    %564 = arith.mulf %559, %558 : vector<2x64xf32>
    %565 = arith.addf %563, %564 : vector<2x64xf32>
    %566 = math.tanh %565 : vector<2x64xf32>
    %567 = arith.mulf %561, %566 : vector<2x64xf32>
    %c0_328 = arith.constant 0 : index
    %c0_329 = arith.constant 0 : index
    %568 = vector.load %arg12[%c0_328, %c0_329] : memref<2x64xf32, #tpu.memory_space<vmem>>, vector<2x64xf32>
    tpu.vector_store %arg12[%c0_328, %c0_329], %565 {strides = array<i32>} : memref<2x64xf32, #tpu.memory_space<vmem>>, vector<2x64xf32>,
    %569 = arith.index_cast %509 : i32 to index
    %c0_330 = arith.constant 0 : index
    %c0_331 = arith.constant 0 : index
    %570 = vector.load %arg11[%569, %c0_330, %c0_331] : memref<16x2x64xf32, #tpu.memory_space<vmem>>, vector<1x2x64xf32>
    %571 = vector.shape_cast %570 : vector<1x2x64xf32> to vector<2x64xf32>
    %572 = vector.shape_cast %567 : vector<2x64xf32> to vector<1x2x64xf32>
    tpu.vector_store %arg11[%569, %c0_330, %c0_331], %572 {strides = array<i32>} : memref<16x2x64xf32, #tpu.memory_space<vmem>>, vector<1x2x64xf32>,
    %c0_332 = arith.constant 0 : index
    %c7_333 = arith.constant 7 : index
    %c0_334 = arith.constant 0 : index
    %573 = vector.load %arg2[%c0_332, %c7_333, %c0_334] : memref<2x8x1xf32, #tpu.memory_space<vmem>>, vector<2x1x1xf32>
    %574 = vector.shape_cast %573 : vector<2x1x1xf32> to vector<2x1xf32>
    %575 = vector.broadcast %574 : vector<2x1xf32> to vector<2x64xf32>
    %576 = arith.mulf %567, %575 : vector<2x64xf32>
    %c0_335 = arith.constant 0 : index
    %c7_336 = arith.constant 7 : index
    %c0_337 = arith.constant 0 : index
    %577 = vector.load %arg8[%c0_335, %c7_336, %c0_337] : memref<2x8x64xf32, #tpu.memory_space<vmem>>, vector<2x1x64xf32>
    %578 = vector.shape_cast %577 : vector<2x1x64xf32> to vector<2x64xf32>
    %579 = vector.shape_cast %576 : vector<2x64xf32> to vector<2x1x64xf32>
    tpu.vector_store %arg8[%c0_335, %c7_336, %c0_337], %579 {strides = array<i32>} : memref<2x8x64xf32, #tpu.memory_space<vmem>>, vector<2x1x64xf32>,
    %c1_i32_338 = arith.constant 1 : i32
    %580 = arith.cmpi eq, %arg0, %c1_i32_338 : i32
    %581 = arith.extui %580 : i1 to i32
    %c0_i32_339 = arith.constant 0 : i32
    %582 = arith.cmpi ne, %581, %c0_i32_339 : i32
    scf.if %582 {
      %c0_340 = arith.constant 0 : index
      %c0_341 = arith.constant 0 : index
      %583 = vector.load %arg4[%c0_340, %c0_341] : memref<64x32xf32, #tpu.memory_space<vmem>>, vector<64x32xf32>
      %cst_342 = arith.constant dense<0.000000e+00> : vector<2x32xf32>
      %584 = tpu.matmul %567, %583, %cst_342 {dimension_numbers = #tpu.dot_dimension_numbers<[1], [0], [0], [1], [0, 0, 1, 1], [], []>} : vector<2x64xf32>, vector<64x32xf32>, vector<2x32xf32> -> vector<2x32xf32>
      %c0_343 = arith.constant 0 : index
      %c0_344 = arith.constant 0 : index
      %585 = vector.load %arg5[%c0_343, %c0_344] : memref<1x32xf32, #tpu.memory_space<vmem>>, vector<1x32xf32>
      %586 = vector.broadcast %585 : vector<1x32xf32> to vector<2x32xf32>
      %587 = arith.addf %584, %586 : vector<2x32xf32>
      %c0_345 = arith.constant 0 : index
      %c0_346 = arith.constant 0 : index
      %588 = vector.load %arg9[%c0_345, %c0_346] : memref<2x32xf32, #tpu.memory_space<vmem>>, vector<2x32xf32>
      tpu.vector_store %arg9[%c0_345, %c0_346], %587 {strides = array<i32>} : memref<2x32xf32, #tpu.memory_space<vmem>>, vector<2x32xf32>,
      %c0_347 = arith.constant 0 : index
      %c0_348 = arith.constant 0 : index
      %589 = vector.load %arg12[%c0_347, %c0_348] : memref<2x64xf32, #tpu.memory_space<vmem>>, vector<2x64xf32>
      %c0_349 = arith.constant 0 : index
      %c0_350 = arith.constant 0 : index
      %590 = vector.load %arg6[%c0_349, %c0_350] : memref<64x32xf32, #tpu.memory_space<vmem>>, vector<64x32xf32>
      %cst_351 = arith.constant dense<0.000000e+00> : vector<2x32xf32>
      %591 = tpu.matmul %589, %590, %cst_351 {dimension_numbers = #tpu.dot_dimension_numbers<[1], [0], [0], [1], [0, 0, 1, 1], [], []>} : vector<2x64xf32>, vector<64x32xf32>, vector<2x32xf32> -> vector<2x32xf32>
      %c0_352 = arith.constant 0 : index
      %c0_353 = arith.constant 0 : index
      %592 = vector.load %arg7[%c0_352, %c0_353] : memref<1x32xf32, #tpu.memory_space<vmem>>, vector<1x32xf32>
      %593 = vector.broadcast %592 : vector<1x32xf32> to vector<2x32xf32>
      %594 = arith.addf %591, %593 : vector<2x32xf32>
      %c0_354 = arith.constant 0 : index
      %c0_355 = arith.constant 0 : index
      %595 = vector.load %arg10[%c0_354, %c0_355] : memref<2x32xf32, #tpu.memory_space<vmem>>, vector<2x32xf32>
      tpu.vector_store %arg10[%c0_354, %c0_355], %594 {strides = array<i32>} : memref<2x32xf32, #tpu.memory_space<vmem>>, vector<2x32xf32>,
    } else {
    }
    return
  }
  func.func @transform_0(%arg0: i32) -> (i32, i32, i32) {
    %c0_i32 = arith.constant 0 : i32
    %c0_i32_0 = arith.constant 0 : i32
    %c0_i32_1 = arith.constant 0 : i32
    return %arg0, %c0_i32, %c0_i32_0 : i32, i32, i32
  }
  func.func @transform_1(%arg0: i32) -> (i32, i32, i32) {
    %c0_i32 = arith.constant 0 : i32
    %c0_i32_0 = arith.constant 0 : i32
    %c0_i32_1 = arith.constant 0 : i32
    return %c0_i32, %arg0, %c0_i32_0 : i32, i32, i32
  }
  func.func @transform_2(%arg0: i32) -> (i32, i32) {
    %c0_i32 = arith.constant 0 : i32
    %c0_i32_0 = arith.constant 0 : i32
    %c0_i32_1 = arith.constant 0 : i32
    return %c0_i32, %c0_i32_0 : i32, i32
  }
  func.func @transform_3(%arg0: i32) -> (i32, i32) {
    %c0_i32 = arith.constant 0 : i32
    %c0_i32_0 = arith.constant 0 : i32
    %c0_i32_1 = arith.constant 0 : i32
    return %c0_i32, %c0_i32_0 : i32, i32
  }
  func.func @transform_4(%arg0: i32) -> (i32, i32) {
    %c0_i32 = arith.constant 0 : i32
    %c0_i32_0 = arith.constant 0 : i32
    %c0_i32_1 = arith.constant 0 : i32
    return %c0_i32, %c0_i32_0 : i32, i32
  }
  func.func @transform_5(%arg0: i32) -> (i32, i32) {
    %c0_i32 = arith.constant 0 : i32
    %c0_i32_0 = arith.constant 0 : i32
    %c0_i32_1 = arith.constant 0 : i32
    return %c0_i32, %c0_i32_0 : i32, i32
  }
  func.func @transform_6(%arg0: i32) -> (i32, i32) {
    %c0_i32 = arith.constant 0 : i32
    %c0_i32_0 = arith.constant 0 : i32
    %c0_i32_1 = arith.constant 0 : i32
    return %c0_i32, %c0_i32_0 : i32, i32
  }
  func.func @transform_7(%arg0: i32) -> (i32, i32, i32) {
    %c0_i32 = arith.constant 0 : i32
    %c0_i32_0 = arith.constant 0 : i32
    %c0_i32_1 = arith.constant 0 : i32
    return %c0_i32, %arg0, %c0_i32_0 : i32, i32, i32
  }
  func.func @transform_8(%arg0: i32) -> (i32, i32) {
    %c0_i32 = arith.constant 0 : i32
    %c0_i32_0 = arith.constant 0 : i32
    %c0_i32_1 = arith.constant 0 : i32
    return %c0_i32, %c0_i32_0 : i32, i32
  }
  func.func @transform_9(%arg0: i32) -> (i32, i32) {
    %c0_i32 = arith.constant 0 : i32
    %c0_i32_0 = arith.constant 0 : i32
    %c0_i32_1 = arith.constant 0 : i32
    return %c0_i32, %c0_i32_0 : i32, i32
  }
}

</mosaic_0001>

<llo_original>
// kernel: _lambda_.1
$region0: #{_lambda_.1}
  #allocation0 [shape = 'u32[]', space=smem, size = 0x4, offset = 0x4, fixed_abs, tag = 'smem constant byte address 0x4 - core index']
  #allocation1 [shape = 'u32[144,128]{1,0:T(1,128)}', space=vmem, size = 0x12000, scoped, tag = 'internal scratch']
  #allocation2 [shape = 'f32[16,2,64]{2,1,0:T(2,128)}', space=vmem, size = 0x4000, scoped, tag = 'scratch operand']
  #allocation3 [shape = 'f32[2,64]{1,0:T(2,128)}', space=vmem, size = 0x400, scoped, tag = 'scratch operand']
  %s0 = inlined_call_operand.vmem [shape: f32[16,2,256], index: 0, kind: input, shape index: {}]
  %s1 = inlined_call_operand.vmem [shape: f32[2,16,1], index: 1, kind: input, shape index: {}]
  %s2 = inlined_call_operand.vmem [shape: f32[64,256], index: 2, kind: input, shape index: {}]
  %s3 = inlined_call_operand.vmem [shape: f32[64,32], index: 3, kind: input, shape index: {}]
  %s4 = inlined_call_operand.vmem [shape: f32[1,32], index: 4, kind: input, shape index: {}]
  %s5 = inlined_call_operand.vmem [shape: f32[64,32], index: 5, kind: input, shape index: {}]
  %s6 = inlined_call_operand.vmem [shape: f32[1,32], index: 6, kind: input, shape index: {}]
  %s7 = inlined_call_operand.hbm [shape: f32[2,16,64], index: 7, kind: output, shape index: {0}]
  %s8 = inlined_call_operand.hbm [shape: f32[2,32], index: 8, kind: output, shape index: {1}]
  %s9 = inlined_call_operand.hbm [shape: f32[2,32], index: 9, kind: output, shape index: {2}]
  %10 = xla_tuple %s7, %s8, %s9
  %s11 = sld [smem:[#allocation0]]
  $region123: #{_lambda_.1} parent=0
    _
  %s13 = ssub.s32 1, %s11
  %s14 = scalar_select 0, %s13, %s11
  $region1: #{_lambda_.1} parent=0
    #allocation4 [shape = 'u8[16384]{0}', space=vmem, size = 0x4000, scoped, tag = 'input window, operand 1']
    #allocation5 [shape = 'u8[16384]{0}', space=vmem, size = 0x4000, scoped, tag = 'output window, operand 0']
    #allocation6 [shape = 's32[2]{0}', space=sflag, size = 0x8, scoped, tag = 'scoped memory for _lambda_.1']
    #allocation7 [shape = 'u8[1024]{0}', space=vmem, size = 0x400, scoped, tag = 'output window, operand 1, single buffered']
    #allocation8 [shape = 's32[1]{0}', space=sflag, size = 0x4, scoped, tag = 'scoped memory for _lambda_.1']
    #allocation9 [shape = 'u8[1024]{0}', space=vmem, size = 0x400, scoped, tag = 'output window, operand 2, single buffered']
    %15 = vsyncpa [#allocation6], 0
    %s16 = scalar_lea.sflag [#allocation6], 1
    %17 = vsyncpa %s16, 0
    %18 = vsyncpa [#allocation8], 0
    loop: start=0, step=1, limit=4
    $region2: #{_lambda_.1} parent=1 // loop_pre_header
      _
    $region3: #{_lambda_.1} parent=1 // loop_header
      %s20 = sphi 0, %s24
      %p21 = scmp.ge.s32.totalorder %s20, 4
      %s30 = sphi 0, %s32
      %s33 = sphi 0, %s30
      %s34 = sphi 0, %s33
      %s50 = sphi 0, %s34
      %s56 = sphi 0, %s58
      %s59 = sphi 0, %s56
      %s60 = sphi 0, %s59
      %s76 = sphi 0, %s60
      %s80 = sphi 0, %s80
      %s82 = sphi 0, %s80
      %s83 = sphi 0, %s82
      %s97 = sphi 0, %s83
      %s101 = sphi 0, %s101
      %s103 = sphi 0, %s101
      %s104 = sphi 0, %s103
      %s118 = sphi 0, %s104
      %s122 = sphi 0, %s122
      %s124 = sphi 0, %s122
      %s125 = sphi 0, %s124
      %s139 = sphi 0, %s125
      %s143 = sphi 0, %s143
      %s145 = sphi 0, %s143
      %s146 = sphi 0, %s145
      %s160 = sphi 0, %s146
      %s164 = sphi 0, %s164
      %s166 = sphi 0, %s164
      %s167 = sphi 0, %s166
      %s181 = sphi 0, %s167
      %s187 = sphi 0, %s189
      %s190 = sphi 0, %s187
      %s191 = sphi 0, %s190
      %s207 = sphi 0, %s191
      %s211 = sphi 0, %s211
      %s213 = sphi 0, %s211
      %s214 = sphi 0, %s213
      %s228 = sphi 0, %s214
      %s232 = sphi 0, %s232
      %s234 = sphi 0, %s232
      %s235 = sphi 0, %s234
      %s249 = sphi 0, %s235
    $region4: #{_lambda_.1} parent=1 // loop_header_branch
      %23 = sbr.rel (%p21) target = $region8
    $region5: #{_lambda_.1} parent=1 // loop_body
      %s25 = ssub.s32 %s20, 1
      %s26 = ssub.s32 %s20, 2
      %s27 = sadd.s32 %s20, 1
      %s28 = ssub.s32 %s20, %s27
      %p29 = scmp.eq.s32.totalorder %s28, 0
      %s31 = sadd.s32 %s30, 1
      %s32 = scalar_select %p29, %s30, %s31
      %p35 = pneg %p29
      %p36 = scmp.eq.s32.totalorder %s20, 1
      %p37 = por %p35, %p36
      %p38 = scmp.ne.s32.totalorder %s30, %s33
      %p39 = scmp.eq.s32.totalorder %s20, 0
      %p40 = por %p38, %p39
      %p41 = scmp.ne.s32.totalorder %s30, %s33
      %p42 = scmp.eq.s32.totalorder %s25, 1
      %p43 = por %p41, %p42
      %p44 = scmp.ne.s32.totalorder %s33, %s34
      %p45 = scmp.eq.s32.totalorder %s25, 0
      %p46 = por %p44, %p45
      %p47 = scmp.ne.s32.totalorder %s33, %s34
      %p48 = scmp.eq.s32.totalorder %s26, 1
      %p49 = por %p47, %p48
      %p51 = scmp.ne.s32.totalorder %s34, %s50
      %p52 = scmp.eq.s32.totalorder %s26, 0
      %p53 = por %p51, %p52
      %s54 = ssub.s32 %s20, %s27
      %p55 = scmp.eq.s32.totalorder %s54, 0
      %s57 = sadd.s32 %s56, 1
      %s58 = scalar_select %p55, %s56, %s57
      %p61 = pneg %p55
      %p62 = scmp.eq.s32.totalorder %s20, 1
      %p63 = por %p61, %p62
      %p64 = scmp.ne.s32.totalorder %s56, %s59
      %p65 = scmp.eq.s32.totalorder %s20, 0
      %p66 = por %p64, %p65
      %p67 = scmp.ne.s32.totalorder %s56, %s59
      %p68 = scmp.eq.s32.totalorder %s25, 1
      %p69 = por %p67, %p68
      %p70 = scmp.ne.s32.totalorder %s59, %s60
      %p71 = scmp.eq.s32.totalorder %s25, 0
      %p72 = por %p70, %p71
      %p73 = scmp.ne.s32.totalorder %s59, %s60
      %p74 = scmp.eq.s32.totalorder %s26, 1
      %p75 = por %p73, %p74
      %p77 = scmp.ne.s32.totalorder %s60, %s76
      %p78 = scmp.eq.s32.totalorder %s26, 0
      %p79 = por %p77, %p78
      %s81 = sadd.s32 %s80, 1
      %p84 = scmp.eq.s32.totalorder %s20, 1
      %p85 = scmp.ne.s32.totalorder %s80, %s82
      %p86 = scmp.eq.s32.totalorder %s20, 0
      %p87 = por %p85, %p86
      %p88 = scmp.ne.s32.totalorder %s80, %s82
      %p89 = scmp.eq.s32.totalorder %s25, 1
      %p90 = por %p88, %p89
      %p91 = scmp.ne.s32.totalorder %s82, %s83
      %p92 = scmp.eq.s32.totalorder %s25, 0
      %p93 = por %p91, %p92
      %p94 = scmp.ne.s32.totalorder %s82, %s83
      %p95 = scmp.eq.s32.totalorder %s26, 1
      %p96 = por %p94, %p95
      %p98 = scmp.ne.s32.totalorder %s83, %s97
      %p99 = scmp.eq.s32.totalorder %s26, 0
      %p100 = por %p98, %p99
      %s102 = sadd.s32 %s101, 1
      %p105 = scmp.eq.s32.totalorder %s20, 1
      %p106 = scmp.ne.s32.totalorder %s101, %s103
      %p107 = scmp.eq.s32.totalorder %s20, 0
      %p108 = por %p106, %p107
      %p109 = scmp.ne.s32.totalorder %s101, %s103
      %p110 = scmp.eq.s32.totalorder %s25, 1
      %p111 = por %p109, %p110
      %p112 = scmp.ne.s32.totalorder %s103, %s104
      %p113 = scmp.eq.s32.totalorder %s25, 0
      %p114 = por %p112, %p113
      %p115 = scmp.ne.s32.totalorder %s103, %s104
      %p116 = scmp.eq.s32.totalorder %s26, 1
      %p117 = por %p115, %p116
      %p119 = scmp.ne.s32.totalorder %s104, %s118
      %p120 = scmp.eq.s32.totalorder %s26, 0
      %p121 = por %p119, %p120
      %s123 = sadd.s32 %s122, 1
      %p126 = scmp.eq.s32.totalorder %s20, 1
      %p127 = scmp.ne.s32.totalorder %s122, %s124
      %p128 = scmp.eq.s32.totalorder %s20, 0
      %p129 = por %p127, %p128
      %p130 = scmp.ne.s32.totalorder %s122, %s124
      %p131 = scmp.eq.s32.totalorder %s25, 1
      %p132 = por %p130, %p131
      %p133 = scmp.ne.s32.totalorder %s124, %s125
      %p134 = scmp.eq.s32.totalorder %s25, 0
      %p135 = por %p133, %p134
      %p136 = scmp.ne.s32.totalorder %s124, %s125
      %p137 = scmp.eq.s32.totalorder %s26, 1
      %p138 = por %p136, %p137
      %p140 = scmp.ne.s32.totalorder %s125, %s139
      %p141 = scmp.eq.s32.totalorder %s26, 0
      %p142 = por %p140, %p141
      %s144 = sadd.s32 %s143, 1
      %p147 = scmp.eq.s32.totalorder %s20, 1
      %p148 = scmp.ne.s32.totalorder %s143, %s145
      %p149 = scmp.eq.s32.totalorder %s20, 0
      %p150 = por %p148, %p149
      %p151 = scmp.ne.s32.totalorder %s143, %s145
      %p152 = scmp.eq.s32.totalorder %s25, 1
      %p153 = por %p151, %p152
      %p154 = scmp.ne.s32.totalorder %s145, %s146
      %p155 = scmp.eq.s32.totalorder %s25, 0
      %p156 = por %p154, %p155
      %p157 = scmp.ne.s32.totalorder %s145, %s146
      %p158 = scmp.eq.s32.totalorder %s26, 1
      %p159 = por %p157, %p158
      %p161 = scmp.ne.s32.totalorder %s146, %s160
      %p162 = scmp.eq.s32.totalorder %s26, 0
      %p163 = por %p161, %p162
      %s165 = sadd.s32 %s164, 1
      %p168 = scmp.eq.s32.totalorder %s20, 1
      %p169 = scmp.ne.s32.totalorder %s164, %s166
      %p170 = scmp.eq.s32.totalorder %s20, 0
      %p171 = por %p169, %p170
      %p172 = scmp.ne.s32.totalorder %s164, %s166
      %p173 = scmp.eq.s32.totalorder %s25, 1
      %p174 = por %p172, %p173
      %p175 = scmp.ne.s32.totalorder %s166, %s167
      %p176 = scmp.eq.s32.totalorder %s25, 0
      %p177 = por %p175, %p176
      %p178 = scmp.ne.s32.totalorder %s166, %s167
      %p179 = scmp.eq.s32.totalorder %s26, 1
      %p180 = por %p178, %p179
      %p182 = scmp.ne.s32.totalorder %s167, %s181
      %p183 = scmp.eq.s32.totalorder %s26, 0
      %p184 = por %p182, %p183
      %s185 = ssub.s32 %s20, %s27
      %p186 = scmp.eq.s32.totalorder %s185, 0
      %s188 = sadd.s32 %s187, 1
      %s189 = scalar_select %p186, %s187, %s188
      %p192 = pneg %p186
      %p193 = scmp.eq.s32.totalorder %s20, 1
      %p194 = por %p192, %p193
      %p195 = scmp.ne.s32.totalorder %s187, %s190
      %p196 = scmp.eq.s32.totalorder %s20, 0
      %p197 = por %p195, %p196
      %p198 = scmp.ne.s32.totalorder %s187, %s190
      %p199 = scmp.eq.s32.totalorder %s25, 1
      %p200 = por %p198, %p199
      %p201 = scmp.ne.s32.totalorder %s190, %s191
      %p202 = scmp.eq.s32.totalorder %s25, 0
      %p203 = por %p201, %p202
      %p204 = scmp.ne.s32.totalorder %s190, %s191
      %p205 = scmp.eq.s32.totalorder %s26, 1
      %p206 = por %p204, %p205
      %p208 = scmp.ne.s32.totalorder %s191, %s207
      %p209 = scmp.eq.s32.totalorder %s26, 0
      %p210 = por %p208, %p209
      %s212 = sadd.s32 %s211, 1
      %p215 = scmp.eq.s32.totalorder %s20, 1
      %p216 = scmp.ne.s32.totalorder %s211, %s213
      %p217 = scmp.eq.s32.totalorder %s20, 0
      %p218 = por %p216, %p217
      %p219 = scmp.ne.s32.totalorder %s211, %s213
      %p220 = scmp.eq.s32.totalorder %s25, 1
      %p221 = por %p219, %p220
      %p222 = scmp.ne.s32.totalorder %s213, %s214
      %p223 = scmp.eq.s32.totalorder %s25, 0
      %p224 = por %p222, %p223
      %p225 = scmp.ne.s32.totalorder %s213, %s214
      %p226 = scmp.eq.s32.totalorder %s26, 1
      %p227 = por %p225, %p226
      %p229 = scmp.ne.s32.totalorder %s214, %s228
      %p230 = scmp.eq.s32.totalorder %s26, 0
      %p231 = por %p229, %p230
      %s233 = sadd.s32 %s232, 1
      %p236 = scmp.eq.s32.totalorder %s20, 1
      %p237 = scmp.ne.s32.totalorder %s232, %s234
      %p238 = scmp.eq.s32.totalorder %s20, 0
      %p239 = por %p237, %p238
      %p240 = scmp.ne.s32.totalorder %s232, %s234
      %p241 = scmp.eq.s32.totalorder %s25, 1
      %p242 = por %p240, %p241
      %p243 = scmp.ne.s32.totalorder %s234, %s235
      %p244 = scmp.eq.s32.totalorder %s25, 0
      %p245 = por %p243, %p244
      %p246 = scmp.ne.s32.totalorder %s234, %s235
      %p247 = scmp.eq.s32.totalorder %s26, 1
      %p248 = por %p246, %p247
      %p250 = scmp.ne.s32.totalorder %s235, %s249
      %p251 = scmp.eq.s32.totalorder %s26, 0
      %p252 = por %p250, %p251
      %p253 = scmp.le.s32.totalorder 1, %s20
      %p254 = scmp.lt.s32.totalorder %s20, 3
      %p255 = pnand %p253, %p254
      %p256 = pneg %p255
      // Predicated region
      $region9: #{_lambda_.1} parent=5 // pred_check
        _
      $region10: #{_lambda_.1} parent=5 // pred_check_branch
        %258 = sbr.rel (%p255) target = $region12
      $region11: #{_lambda_.1} parent=5 // pred_region
        %s259 = ssub.s32 %s20, 1
        // Predicated region
        $region13: #{_lambda_.1} parent=11 // pred_check
          %p260 = pneg %p93
        $region14: #{_lambda_.1} parent=11 // pred_check_branch
          %262 = sbr.rel (%p260) target = $region16
        $region15: #{_lambda_.1} parent=11 // pred_region
          _
        $region16: #{_lambda_.1} parent=11 // pred_fallthru
          _
        // Predicated region
        $region17: #{_lambda_.1} parent=11 // pred_check
          %p263 = pneg %p114
        $region18: #{_lambda_.1} parent=11 // pred_check_branch
          %265 = sbr.rel (%p263) target = $region20
        $region19: #{_lambda_.1} parent=11 // pred_region
          _
        $region20: #{_lambda_.1} parent=11 // pred_fallthru
          _
        // Predicated region
        $region21: #{_lambda_.1} parent=11 // pred_check
          %p266 = pneg %p135
        $region22: #{_lambda_.1} parent=11 // pred_check_branch
          %268 = sbr.rel (%p266) target = $region24
        $region23: #{_lambda_.1} parent=11 // pred_region
          _
        $region24: #{_lambda_.1} parent=11 // pred_fallthru
          _
        // Predicated region
        $region25: #{_lambda_.1} parent=11 // pred_check
          %p269 = pneg %p156
        $region26: #{_lambda_.1} parent=11 // pred_check_branch
          %271 = sbr.rel (%p269) target = $region28
        $region27: #{_lambda_.1} parent=11 // pred_region
          _
        $region28: #{_lambda_.1} parent=11 // pred_fallthru
          _
        // Predicated region
        $region29: #{_lambda_.1} parent=11 // pred_check
          %p272 = pneg %p177
        $region30: #{_lambda_.1} parent=11 // pred_check_branch
          %274 = sbr.rel (%p272) target = $region32
        $region31: #{_lambda_.1} parent=11 // pred_region
          _
        $region32: #{_lambda_.1} parent=11 // pred_fallthru
          _
      $region12: #{_lambda_.1} parent=5 // pred_fallthru
        _
      %p275 = scmp.lt.s32.totalorder %s20, 2
      // Predicated region
      $region33: #{_lambda_.1} parent=5 // pred_check
        %p276 = pneg %p275
      $region34: #{_lambda_.1} parent=5 // pred_check_branch
        %278 = sbr.rel (%p276) target = $region36
      $region35: #{_lambda_.1} parent=5 // pred_region
        // Predicated region
        $region37: #{_lambda_.1} parent=35 // pred_check
          %p279 = pneg %p40
        $region38: #{_lambda_.1} parent=35 // pred_check_branch
          %281 = sbr.rel (%p279) target = $region40
        $region39: #{_lambda_.1} parent=35 // pred_region
          %s282 = smul.u32 8, %s20
          %p283 = scmp.lt.s32.totalorder %s282, 15
          %s284 = scalar_select %p283, %s282, 15
          %s285 = smul.addr %s284, 2
          %s286 = smul.addr %s285, 2
          %s287 = scalar_lea.vmem %s0, %s286
          %s288 = smul.u32 8, %s20
        $region40: #{_lambda_.1} parent=35 // pred_fallthru
          _
        // Predicated region
        $region41: #{_lambda_.1} parent=35 // pred_check
          %p289 = pneg %p66
        $region42: #{_lambda_.1} parent=35 // pred_check_branch
          %291 = sbr.rel (%p289) target = $region44
        $region43: #{_lambda_.1} parent=35 // pred_region
          %s292 = sand.u32 %s56, 1
          %s293 = sand.u32 %s56, 1
          %s294 = smul.addr %s293, 16
          %s295 = scalar_lea.vmem [#allocation4], %s294
          %s296 = smul.addr %s20, 8
          %s297 = scalar_lea.vmem %s1, %s296
          // Predicated region
          $region45: #{_lambda_.1} parent=43 // pred_check
            _
          $region46: #{_lambda_.1} parent=43 // pred_check_branch
            %299 = sbr.rel (0) target = $region48
          $region47: #{_lambda_.1} parent=43 // pred_region
            // Predicated region
            $region49: #{_lambda_.1} parent=47 // pred_check
              _
            $region50: #{_lambda_.1} parent=47 // pred_check_branch
              %301 = sbr.rel (0) target = $region52
            $region51: #{_lambda_.1} parent=47 // pred_region
              // Predicated region
              $region64: #{_lambda_.1} parent=51 // pred_check
                _
              $region65: #{_lambda_.1} parent=51 // pred_check_branch
                %318 = sbr.rel (0) target = $region67
              $region66: #{_lambda_.1} parent=51 // pred_region
                loop: start=0, step=1, limit=1
                $region68: #{_lambda_.1} parent=66 // loop_pre_header
                  _
                $region69: #{_lambda_.1} parent=66 // loop_header
                  %s320 = sphi 0, %s324
                  %p321 = scmp.ge.s32.totalorder %s320, 1
                  %s325 = sphi %s297, %s297
                  %s326 = sphi %s295, %s295
                $region70: #{_lambda_.1} parent=66 // loop_header_branch
                  %323 = sbr.rel (%p321) target = $region74
                $region71: #{_lambda_.1} parent=66 // loop_body
                  %v327 = vld [vmem:[%s325] sm:$0xff]
                  %328 = vst [vmem:[%s326] sm:$0xff] %v327
                  %v329 = vld [vmem:[%s325 + $0x10] sm:$0xff]
                  %330 = vst [vmem:[%s326 + $0x8] sm:$0xff] %v329
                $region72: #{_lambda_.1} parent=66 // loop_footer
                  %s324 = sadd.s32 1, %s320
                $region73: #{_lambda_.1} parent=66 // loop_footer_branch
                  %319 = sbr.rel target = $region69
                $region74: #{_lambda_.1} parent=66 // loop_exit
                  _
              $region67: #{_lambda_.1} parent=51 // pred_fallthru
                _
              // Predicated region
              $region75: #{_lambda_.1} parent=51 // pred_check
                _
              $region76: #{_lambda_.1} parent=51 // pred_check_branch
                %332 = sbr.rel target = $region78
              $region77: #{_lambda_.1} parent=51 // pred_region
                _
              $region78: #{_lambda_.1} parent=51 // pred_fallthru
                _
            $region52: #{_lambda_.1} parent=47 // pred_fallthru
              _
            // Predicated region
            $region53: #{_lambda_.1} parent=47 // pred_check
              _
            $region54: #{_lambda_.1} parent=47 // pred_check_branch
              %303 = sbr.rel target = $region56
            $region55: #{_lambda_.1} parent=47 // pred_region
              loop: start=0, step=1, limit=1
              $region57: #{_lambda_.1} parent=55 // loop_pre_header
                _
              $region58: #{_lambda_.1} parent=55 // loop_header
                %s306 = sphi 0, %s310
                %p307 = scmp.ge.s32.totalorder %s306, 1
                %s311 = sphi %s297, %s297
                %s312 = sphi %s295, %s295
              $region59: #{_lambda_.1} parent=55 // loop_header_branch
                %309 = sbr.rel (%p307) target = $region63
              $region60: #{_lambda_.1} parent=55 // loop_body
                %v313 = vld [vmem:[%s311] sm:$0xff]
                %314 = vst [vmem:[%s312] sm:$0xff] %v313
                %v315 = vld [vmem:[%s311 + $0x10] sm:$0xff]
                %316 = vst [vmem:[%s312 + $0x8] sm:$0xff] %v315
              $region61: #{_lambda_.1} parent=55 // loop_footer
                %s310 = sadd.s32 1, %s306
              $region62: #{_lambda_.1} parent=55 // loop_footer_branch
                %305 = sbr.rel target = $region58
              $region63: #{_lambda_.1} parent=55 // loop_exit
                _
            $region56: #{_lambda_.1} parent=47 // pred_fallthru
              _
          $region48: #{_lambda_.1} parent=43 // pred_fallthru
            _
          %333 = vnop
        $region44: #{_lambda_.1} parent=35 // pred_fallthru
          _
      $region36: #{_lambda_.1} parent=5 // pred_fallthru
        _
      %p334 = scmp.le.s32.totalorder 1, %s20
      %p335 = scmp.lt.s32.totalorder %s20, 3
      %p336 = pnand %p334, %p335
      %p337 = pneg %p336
      // Predicated region
      $region79: #{_lambda_.1} parent=5 // pred_check
        _
      $region80: #{_lambda_.1} parent=5 // pred_check_branch
        %339 = sbr.rel (%p336) target = $region82
      $region81: #{_lambda_.1} parent=5 // pred_region
        %s340 = ssub.s32 %s20, 1
        %s341 = sand.u32 %s59, 1
        %s342 = sand.u32 %s59, 1
        %s343 = smul.addr %s342, 16
        %s344 = scalar_lea.vmem [#allocation4], %s343
        // Predicated region
        $region83: #{_lambda_.1} parent=81 // pred_check
          %p345 = pneg %p72
        $region84: #{_lambda_.1} parent=81 // pred_check_branch
          %347 = sbr.rel (%p345) target = $region86
        $region85: #{_lambda_.1} parent=81 // pred_region
          _
        $region86: #{_lambda_.1} parent=81 // pred_fallthru
          _
        %s348 = smul.u32 8, %s25
        %p349 = scmp.lt.s32.totalorder %s348, 15
        %s350 = scalar_select %p349, %s348, 15
        %s351 = smul.addr %s350, 2
        %s352 = smul.addr %s351, 2
        %s353 = scalar_lea.vmem %s0, %s352
        %p354 = pneg %p46
        %p355 = pneg %p43
        %s356 = sand.u32 %s59, 1
        %s357 = sand.u32 %s59, 1
        %s358 = smul.addr %s357, 16
        %s359 = scalar_lea.vmem [#allocation4], %s358
        %p360 = pneg %p72
        %p361 = pneg %p69
        %p362 = pneg %p93
        %p363 = pneg %p90
        %p364 = pneg %p114
        %p365 = pneg %p111
        %p366 = pneg %p135
        %p367 = pneg %p132
        %p368 = pneg %p156
        %p369 = pneg %p153
        %p370 = pneg %p177
        %p371 = pneg %p174
        %p372 = pneg %p203
        %p373 = pneg %p200
        %s374 = sand.u32 %s190, 1
        %s375 = scalar_lea.sflag [#allocation6], %s374
        %s376 = sand.u32 %s190, 1
        %s377 = smul.addr %s376, 16
        %s378 = scalar_lea.vmem [#allocation5], %s377
        %p379 = pneg %p224
        %p380 = pneg %p221
        %p381 = pneg %p245
        %p382 = pneg %p242
        %s383 = smul.u32 8, %s25
        %p384 = scmp.lt.s32.totalorder %s383, 15
        %s385 = scalar_select %p384, %s383, 15
        %s386 = smul.addr %s385, 2
        %s387 = smul.addr %s386, 2
        %s388 = scalar_lea.vmem %s0, %s387
        %s389 = smul.u32 8, %s25
        %p390 = scmp.eq.s32.totalorder %s25, 0
        // Predicated region
        $region87: #{_lambda_.1} parent=81 // pred_check
          %p391 = pneg %p390
        $region88: #{_lambda_.1} parent=81 // pred_check_branch
          %393 = sbr.rel (%p391) target = $region90
        $region89: #{_lambda_.1} parent=81 // pred_region
          %vm394 = vcmask 517120
          %395 = vst.msk [vmem:[#allocation3] sm:$0x3] %vm394, 0.0
        $region90: #{_lambda_.1} parent=81 // pred_fallthru
          _
        %v396 = vld [vmem:[%s2] sm:$0xff]
        %v397 = vld [vmem:[%s2 + $0x8] sm:$0xff]
        %v398 = vld [vmem:[%s2 + $0x10] sm:$0xff]
        %v399 = vld [vmem:[%s2 + $0x18] sm:$0xff]
        %v400 = vld [vmem:[%s2 + $0x20] sm:$0xff]
        %v401 = vld [vmem:[%s2 + $0x28] sm:$0xff]
        %v402 = vld [vmem:[%s2 + $0x30] sm:$0xff]
        %v403 = vld [vmem:[%s2 + $0x38] sm:$0xff]
        %v404 = vld [vmem:[%s2 + $0x40] sm:$0xff]
        %v405 = vld [vmem:[%s2 + $0x48] sm:$0xff]
        %v406 = vld [vmem:[%s2 + $0x50] sm:$0xff]
        %v407 = vld [vmem:[%s2 + $0x58] sm:$0xff]
        %v408 = vld [vmem:[%s2 + $0x60] sm:$0xff]
        %v409 = vld [vmem:[%s2 + $0x68] sm:$0xff]
        %v410 = vld [vmem:[%s2 + $0x70] sm:$0xff]
        %v411 = vld [vmem:[%s2 + $0x78] sm:$0xff]
        %s412 = smul.u32 %s25, 8
        %p413 = scmp.ge.s32.totalorder %s412, 1
        %s414 = sadd.s32 %s412, 4294967295
        %p415 = scmp.gt.s32.totalorder %s414, 0
        %s416 = scalar_select %p415, %s414, 0
        %s417 = smul.u32 %s416, 2
        %s418 = scalar_lea.vmem [#allocation2], %s417
        %v419 = vld [vmem:[%s418] sm:$0x3]
        %s420 = scalar_select %p413, 1, 0
        %v421 = vstv %s420
        %vm422 = vcmp.eq.s32.totalorder %v421, 1
        %v423 = vsel %vm422, %v419, 0.0
        %v424 = vadd.f32 %v423, 0.0
        %p425 = scmp.ge.s32.totalorder %s412, 2
        %s426 = sadd.s32 %s412, 4294967294
        %p427 = scmp.gt.s32.totalorder %s426, 0
        %s428 = scalar_select %p427, %s426, 0
        %s429 = smul.u32 %s428, 2
        %s430 = scalar_lea.vmem [#allocation2], %s429
        %v431 = vld [vmem:[%s430] sm:$0x3]
        %s432 = scalar_select %p425, 1, 0
        %v433 = vstv %s432
        %vm434 = vcmp.eq.s32.totalorder %v433, 1
        %v435 = vsel %vm434, %v431, 0.0
        %v436 = vadd.f32 %v424, %v435
        %p437 = scmp.ge.s32.totalorder %s412, 4
        %s438 = sadd.s32 %s412, 4294967292
        %p439 = scmp.gt.s32.totalorder %s438, 0
        %s440 = scalar_select %p439, %s438, 0
        %s441 = smul.u32 %s440, 2
        %s442 = scalar_lea.vmem [#allocation2], %s441
        %v443 = vld [vmem:[%s442] sm:$0x3]
        %s444 = scalar_select %p437, 1, 0
        %v445 = vstv %s444
        %vm446 = vcmp.eq.s32.totalorder %v445, 1
        %v447 = vsel %vm446, %v443, 0.0
        %v448 = vadd.f32 %v436, %v447
        %p449 = scmp.ge.s32.totalorder %s412, 8
        %s450 = sadd.s32 %s412, 4294967288
        %p451 = scmp.gt.s32.totalorder %s450, 0
        %s452 = scalar_select %p451, %s450, 0
        %s453 = smul.u32 %s452, 2
        %s454 = scalar_lea.vmem [#allocation2], %s453
        %v455 = vld [vmem:[%s454] sm:$0x3]
        %s456 = scalar_select %p449, 1, 0
        %v457 = vstv %s456
        %vm458 = vcmp.eq.s32.totalorder %v457, 1
        %v459 = vsel %vm458, %v455, 0.0
        %v460 = vadd.f32 %v448, %v459
        %v461 = vld [vmem:[%s388] sm:$0xf]
        %vm462 = vcmask 523264
        %v464 = vsel %vm462, %v460, 0
        %466 = vmatprep.subr.mxu0 %v397
        %467 = vmatpush1.msra.mxu0 %v396
        %468 = vmatprep.subr.mxu0 %v399
        %469 = vmatpush1.msra.mxu0 %v398
        %470 = vmatprep.subr.mxu0 %v401
        %471 = vmatpush1.msra.mxu0 %v400
        %472 = vmatprep.subr.mxu0 %v403
        %473 = vmatpush1.msra.mxu0 %v402
        %474 = vmatprep.subr.mxu0 %v405
        %475 = vmatpush1.msra.mxu0 %v404
        %476 = vmatprep.subr.mxu0 %v407
        %477 = vmatpush1.msra.mxu0 %v406
        %478 = vmatprep.subr.mxu0 %v409
        %479 = vmatpush1.msra.mxu0 %v408
        %480 = vmatprep.subr.mxu0 %v411
        %481 = vmatpush1.msra.mxu0 %v410
        %482 = vmatprep.subr.mxu0 0.0
        %483 = vmatpush1.msra.mxu0 0.0
        %484 = vmatprep.subr.mxu0 0.0
        %485 = vmatpush1.msra.mxu0 0.0
        %486 = vmatprep.subr.mxu0 0.0
        %487 = vmatpush1.msra.mxu0 0.0
        %488 = vmatprep.subr.mxu0 0.0
        %489 = vmatpush1.msra.mxu0 0.0
        %490 = vmatprep.subr.mxu0 0.0
        %491 = vmatpush1.msra.mxu0 0.0
        %492 = vmatprep.subr.mxu0 0.0
        %493 = vmatpush1.msra.mxu0 0.0
        %494 = vmatprep.subr.mxu0 0.0
        %495 = vmatpush1.msra.mxu0 0.0
        %496 = vmatprep.subr.mxu0 0.0
        %497 = vmatpush1.msra.mxu0 0.0
        %498 = vmatprep.subr.mxu0 0.0
        %499 = vmatpush1.msra.mxu0 0.0
        %500 = vmatprep.subr.mxu0 0.0
        %501 = vmatpush1.msra.mxu0 0.0
        %502 = vmatprep.subr.mxu0 0.0
        %503 = vmatpush1.msra.mxu0 0.0
        %504 = vmatprep.subr.mxu0 0.0
        %505 = vmatpush1.msra.mxu0 0.0
        %506 = vmatprep.subr.mxu0 0.0
        %507 = vmatpush1.msra.mxu0 0.0
        %508 = vmatprep.subr.mxu0 0.0
        %509 = vmatpush1.msra.mxu0 0.0
        %510 = vmatprep.subr.mxu0 0.0
        %511 = vmatpush1.msra.mxu0 0.0
        %512 = vmatprep.subr.mxu0 0.0
        %513 = vmatpush1.msra.mxu0 0.0
        %514 = vmatprep.subr.mxu0 0.0
        %515 = vmatpush1.msra.mxu0 0.0
        %516 = vmatprep.subr.mxu0 0.0
        %517 = vmatpush1.msra.mxu0 0.0
        %518 = vmatprep.subr.mxu0 0.0
        %519 = vmatpush1.msra.mxu0 0.0
        %520 = vmatprep.subr.mxu0 0.0
        %521 = vmatpush1.msra.mxu0 0.0
        %522 = vmatprep.subr.mxu0 0.0
        %523 = vmatpush1.msra.mxu0 0.0
        %524 = vmatprep.subr.mxu0 0.0
        %525 = vmatpush1.msra.mxu0 0.0
        %526 = vmatprep.subr.mxu0 0.0
        %527 = vmatpush1.msra.mxu0 0.0
        %528 = vmatprep.subr.mxu0 0.0
        %529 = vmatpush1.msra.mxu0 0.0
        %530 = vmatprep.mubr.f32.mxu0 0.0
        %531 = vmatmul.mubr.f32.gmra.mrb[0].mxu0 %v464
        %v532 = vpop.f32.mrb[0].mxu0
        %v533 = vadd.f32 0.0, %v532
        %v534 = vpop.f32.mrb[0].mxu0
        %v535 = vadd.f32 0.0, %v534
        %536 = vdwg.mxu0
        %v539 = vcombine.low %v533, %v535
        %v541 = vunpack.c.l.s4 1983009808
        %v542 = vunpack.c.0.s8 %v541
        %v543 = vlaneseq
        %v544 = vshrl.u32 %v543, 7
        %v545 = vsub.s32 %v542, %v544
        %v546 = vrot.slane %v539, %v545
        %v548 = vadd.f32 %v461, %v546
        %v549 = vxor.u32 %v548, 2147483648
        %v550 = vmul.f32 %v549, 1.442695
        %v551 = vpow.pop %v550
        %v552 = vadd.f32 %v551, 1.0
        %v553 = vrcp.pop %v552
        %v554 = vmul.f32 1.0, %v553
        %556 = vrot.lane.b32.xlu0 %v548, 64
        %v557 = vpop.permute.xlu0 %556
        %v558 = vrot.slane %v557, 2
        %v560 = vtanh.pop %v558
        %v561 = vld [vmem:[#allocation3] sm:$0x3]
        %v564 = vunpack.c.l.s4 1983009808
        %v565 = vunpack.c.0.s8 %v564
        %v566 = vlaneseq
        %v567 = vshrl.u32 %v566, 7
        %v568 = vsub.s32 %v565, %v567
        %v569 = vrot.slane %v561, %v568
        %570 = vrot.lane.b32.xlu0 %v569, 64
        %v571 = vpop.permute.xlu0 %570
        %v573 = vmul.f32 %v554, %v571
        %v574 = vmul.f32 %v554, %v560
        %576 = vrot.lane.b32.xlu0 %v574, 64
        %v577 = vpop.permute.xlu0 %576
        %v579 = vadd.f32 %v573, %v577
        %v580 = vtanh.pop %v579
        %v582 = vrot.slane %v554, 2
        %585 = vrot.lane.b32.xlu0 %v580, 64
        %v586 = vpop.permute.xlu0 %585
        %v588 = vmul.f32 %v582, %v586
        %v591 = vunpack.c.l.s4 1983009808
        %v592 = vunpack.c.0.s8 %v591
        %v593 = vlaneseq
        %v594 = vshrl.u32 %v593, 7
        %v595 = vsub.s32 %v592, %v594
        %v596 = vrot.slane %v579, %v595
        %597 = vrot.lane.b32.xlu0 %v596, 64
        %v598 = vpop.permute.xlu0 %597
        %vm600 = vcmask 517120
        %601 = vst.msk [vmem:[#allocation3] sm:$0x3] %vm600, %v598
        %s602 = smul.u32 %s412, 2
        %s603 = scalar_lea.vmem [#allocation2], %s602
        %604 = vst.msk [vmem:[%s603] sm:$0x3] %vm600, %v588
        %v605 = vld [vmem:[%s344] sm:$0x1]
        %v606 = vld [vmem:[%s344 + $0x8] sm:$0x1]
        %608 = vset.pattern.permute.xlu0 0
        %609 = vperm.xlu0 %608, %v605
        %v610 = vpop.permute.xlu0 %609
        %612 = vset.pattern.permute.xlu0 0
        %613 = vperm.xlu0 %612, %v606
        %v614 = vpop.permute.xlu0 %613
        %v616 = vunpack.c.l.s4 269488144
        %v617 = vunpack.c.0.s8 %v616
        %v618 = vlaneseq
        %v619 = vshrl.u32 %v618, 7
        %v620 = vsub.s32 %v617, %v619
        %v621 = vrot.slane %v610, %v620
        %v623 = vunpack.c.l.s4 269488144
        %v624 = vunpack.c.0.s8 %v623
        %v625 = vlaneseq
        %v626 = vshrl.u32 %v625, 7
        %v627 = vsub.s32 %v624, %v626
        %v628 = vrot.slane %v614, %v627
        %vm629 = vcmask 1044484
        %v630 = vsel %vm629, %v621, %v621
        %vm631 = vcmask 1046534
        %v632 = vsel %vm631, %v621, %v630
        %v633 = vrot.slane %v628, 7
        %vm634 = vcmask 1041409
        %v635 = vsel %vm634, %v633, %v632
        %vm636 = vcmask 1043459
        %v637 = vsel %vm636, %v633, %v635
        %vm638 = vcmask 1045509
        %v639 = vsel %vm638, %v633, %v637
        %vm640 = vcmask 1047559
        %v641 = vsel %vm640, %v633, %v639
        %v643 = vmul.f32 %v588, %v641
        %v646 = vunpack.c.l.s4 1966171168
        %v647 = vunpack.c.0.s8 %v646
        %v648 = vlaneseq
        %v649 = vshrl.u32 %v648, 7
        %v650 = vsub.s32 %v647, %v649
        %v651 = vrot.slane %v643, %v650
        %v652 = vcombine.high %v651, %v651
        %vm655 = vcmask 516096
        %656 = vst.msk [vmem:[%s378] sm:$0x1] %vm655, %v651
        %657 = vst.msk [vmem:[%s378 + $0x8] sm:$0x1] %vm655, %v652
        %s658 = sadd.s32 %s412, 1
        %p659 = scmp.ge.s32.totalorder %s658, 1
        %p660 = scmp.gt.s32.totalorder %s412, 0
        %s661 = scalar_select %p660, %s412, 0
        %s662 = smul.u32 %s661, 2
        %s663 = scalar_lea.vmem [#allocation2], %s662
        %v664 = vld [vmem:[%s663] sm:$0x3]
        %s665 = scalar_select %p659, 1, 0
        %v666 = vstv %s665
        %vm667 = vcmp.eq.s32.totalorder %v666, 1
        %v668 = vsel %vm667, %v664, 0.0
        %v669 = vadd.f32 %v668, 0.0
        %p670 = scmp.ge.s32.totalorder %s658, 2
        %v671 = vld [vmem:[%s418] sm:$0x3]
        %s672 = scalar_select %p670, 1, 0
        %v673 = vstv %s672
        %vm674 = vcmp.eq.s32.totalorder %v673, 1
        %v675 = vsel %vm674, %v671, 0.0
        %v676 = vadd.f32 %v669, %v675
        %p677 = scmp.ge.s32.totalorder %s658, 4
        %s678 = sadd.s32 %s412, 4294967293
        %p679 = scmp.gt.s32.totalorder %s678, 0
        %s680 = scalar_select %p679, %s678, 0
        %s681 = smul.u32 %s680, 2
        %s682 = scalar_lea.vmem [#allocation2], %s681
        %v683 = vld [vmem:[%s682] sm:$0x3]
        %s684 = scalar_select %p677, 1, 0
        %v685 = vstv %s684
        %vm686 = vcmp.eq.s32.totalorder %v685, 1
        %v687 = vsel %vm686, %v683, 0.0
        %v688 = vadd.f32 %v676, %v687
        %p689 = scmp.ge.s32.totalorder %s658, 8
        %s690 = sadd.s32 %s412, 4294967289
        %p691 = scmp.gt.s32.totalorder %s690, 0
        %s692 = scalar_select %p691, %s690, 0
        %s693 = smul.u32 %s692, 2
        %s694 = scalar_lea.vmem [#allocation2], %s693
        %v695 = vld [vmem:[%s694] sm:$0x3]
        %s696 = scalar_select %p689, 1, 0
        %v697 = vstv %s696
        %vm698 = vcmp.eq.s32.totalorder %v697, 1
        %v699 = vsel %vm698, %v695, 0.0
        %v700 = vadd.f32 %v688, %v699
        %s701 = scalar_lea.vmem %s388, 4
        %v702 = vld [vmem:[%s701] sm:$0xf]
        %v704 = vsel %vm462, %v700, 0
        %706 = vmatprep.subr.mxu0 %v397
        %707 = vmatpush1.msra.mxu0 %v396
        %708 = vmatprep.subr.mxu0 %v399
        %709 = vmatpush1.msra.mxu0 %v398
        %710 = vmatprep.subr.mxu0 %v401
        %711 = vmatpush1.msra.mxu0 %v400
        %712 = vmatprep.subr.mxu0 %v403
        %713 = vmatpush1.msra.mxu0 %v402
        %714 = vmatprep.subr.mxu0 %v405
        %715 = vmatpush1.msra.mxu0 %v404
        %716 = vmatprep.subr.mxu0 %v407
        %717 = vmatpush1.msra.mxu0 %v406
        %718 = vmatprep.subr.mxu0 %v409
        %719 = vmatpush1.msra.mxu0 %v408
        %720 = vmatprep.subr.mxu0 %v411
        %721 = vmatpush1.msra.mxu0 %v410
        %722 = vmatprep.subr.mxu0 0.0
        %723 = vmatpush1.msra.mxu0 0.0
        %724 = vmatprep.subr.mxu0 0.0
        %725 = vmatpush1.msra.mxu0 0.0
        %726 = vmatprep.subr.mxu0 0.0
        %727 = vmatpush1.msra.mxu0 0.0
        %728 = vmatprep.subr.mxu0 0.0
        %729 = vmatpush1.msra.mxu0 0.0
        %730 = vmatprep.subr.mxu0 0.0
        %731 = vmatpush1.msra.mxu0 0.0
        %732 = vmatprep.subr.mxu0 0.0
        %733 = vmatpush1.msra.mxu0 0.0
        %734 = vmatprep.subr.mxu0 0.0
        %735 = vmatpush1.msra.mxu0 0.0
        %736 = vmatprep.subr.mxu0 0.0
        %737 = vmatpush1.msra.mxu0 0.0
        %738 = vmatprep.subr.mxu0 0.0
        %739 = vmatpush1.msra.mxu0 0.0
        %740 = vmatprep.subr.mxu0 0.0
        %741 = vmatpush1.msra.mxu0 0.0
        %742 = vmatprep.subr.mxu0 0.0
        %743 = vmatpush1.msra.mxu0 0.0
        %744 = vmatprep.subr.mxu0 0.0
        %745 = vmatpush1.msra.mxu0 0.0
        %746 = vmatprep.subr.mxu0 0.0
        %747 = vmatpush1.msra.mxu0 0.0
        %748 = vmatprep.subr.mxu0 0.0
        %749 = vmatpush1.msra.mxu0 0.0
        %750 = vmatprep.subr.mxu0 0.0
        %751 = vmatpush1.msra.mxu0 0.0
        %752 = vmatprep.subr.mxu0 0.0
        %753 = vmatpush1.msra.mxu0 0.0
        %754 = vmatprep.subr.mxu0 0.0
        %755 = vmatpush1.msra.mxu0 0.0
        %756 = vmatprep.subr.mxu0 0.0
        %757 = vmatpush1.msra.mxu0 0.0
        %758 = vmatprep.subr.mxu0 0.0
        %759 = vmatpush1.msra.mxu0 0.0
        %760 = vmatprep.subr.mxu0 0.0
        %761 = vmatpush1.msra.mxu0 0.0
        %762 = vmatprep.subr.mxu0 0.0
        %763 = vmatpush1.msra.mxu0 0.0
        %764 = vmatprep.subr.mxu0 0.0
        %765 = vmatpush1.msra.mxu0 0.0
        %766 = vmatprep.subr.mxu0 0.0
        %767 = vmatpush1.msra.mxu0 0.0
        %768 = vmatprep.subr.mxu0 0.0
        %769 = vmatpush1.msra.mxu0 0.0
        %770 = vmatprep.mubr.f32.mxu0 0.0
        %771 = vmatmul.mubr.f32.gmra.mrb[0].mxu0 %v704
        %v772 = vpop.f32.mrb[0].mxu0
        %v773 = vadd.f32 0.0, %v772
        %v774 = vpop.f32.mrb[0].mxu0
        %v775 = vadd.f32 0.0, %v774
        %776 = vdwg.mxu0
        %v779 = vcombine.low %v773, %v775
        %v781 = vunpack.c.l.s4 1983009808
        %v782 = vunpack.c.0.s8 %v781
        %v783 = vlaneseq
        %v784 = vshrl.u32 %v783, 7
        %v785 = vsub.s32 %v782, %v784
        %v786 = vrot.slane %v779, %v785
        %v788 = vadd.f32 %v702, %v786
        %v789 = vxor.u32 %v788, 2147483648
        %v790 = vmul.f32 %v789, 1.442695
        %v791 = vpow.pop %v790
        %v792 = vadd.f32 %v791, 1.0
        %v793 = vrcp.pop %v792
        %v794 = vmul.f32 1.0, %v793
        %796 = vrot.lane.b32.xlu0 %v788, 64
        %v797 = vpop.permute.xlu0 %796
        %v798 = vrot.slane %v797, 2
        %v800 = vtanh.pop %v798
        %v801 = vld [vmem:[#allocation3] sm:$0x3]
        %v804 = vunpack.c.l.s4 1983009808
        %v805 = vunpack.c.0.s8 %v804
        %v806 = vlaneseq
        %v807 = vshrl.u32 %v806, 7
        %v808 = vsub.s32 %v805, %v807
        %v809 = vrot.slane %v801, %v808
        %810 = vrot.lane.b32.xlu0 %v809, 64
        %v811 = vpop.permute.xlu0 %810
        %v813 = vmul.f32 %v794, %v811
        %v814 = vmul.f32 %v794, %v800
        %816 = vrot.lane.b32.xlu0 %v814, 64
        %v817 = vpop.permute.xlu0 %816
        %v819 = vadd.f32 %v813, %v817
        %v820 = vtanh.pop %v819
        %v822 = vrot.slane %v794, 2
        %825 = vrot.lane.b32.xlu0 %v820, 64
        %v826 = vpop.permute.xlu0 %825
        %v828 = vmul.f32 %v822, %v826
        %v831 = vunpack.c.l.s4 1983009808
        %v832 = vunpack.c.0.s8 %v831
        %v833 = vlaneseq
        %v834 = vshrl.u32 %v833, 7
        %v835 = vsub.s32 %v832, %v834
        %v836 = vrot.slane %v819, %v835
        %837 = vrot.lane.b32.xlu0 %v836, 64
        %v838 = vpop.permute.xlu0 %837
        %840 = vst.msk [vmem:[#allocation3] sm:$0x3] %vm600, %v838
        %s841 = smul.u32 %s658, 2
        %s842 = scalar_lea.vmem [#allocation2], %s841
        %843 = vst.msk [vmem:[%s842] sm:$0x3] %vm600, %v828
        %v844 = vld [vmem:[%s344 + $0x1] sm:$0x1]
        %v845 = vld [vmem:[%s344 + $0x9] sm:$0x1]
        %847 = vset.pattern.permute.xlu0 0
        %848 = vperm.xlu0 %847, %v844
        %v849 = vpop.permute.xlu0 %848
        %851 = vset.pattern.permute.xlu0 0
        %852 = vperm.xlu0 %851, %v845
        %v853 = vpop.permute.xlu0 %852
        %v855 = vunpack.c.l.s4 269488144
        %v856 = vunpack.c.0.s8 %v855
        %v857 = vlaneseq
        %v858 = vshrl.u32 %v857, 7
        %v859 = vsub.s32 %v856, %v858
        %v860 = vrot.slane %v849, %v859
        %v862 = vunpack.c.l.s4 269488144
        %v863 = vunpack.c.0.s8 %v862
        %v864 = vlaneseq
        %v865 = vshrl.u32 %v864, 7
        %v866 = vsub.s32 %v863, %v865
        %v867 = vrot.slane %v853, %v866
        %v868 = vsel %vm629, %v860, %v860
        %v869 = vsel %vm631, %v860, %v868
        %v870 = vrot.slane %v867, 7
        %v871 = vsel %vm634, %v870, %v869
        %v872 = vsel %vm636, %v870, %v871
        %v873 = vsel %vm638, %v870, %v872
        %v874 = vsel %vm640, %v870, %v873
        %v876 = vmul.f32 %v828, %v874
        %v879 = vunpack.c.l.s4 1966171168
        %v880 = vunpack.c.0.s8 %v879
        %v881 = vlaneseq
        %v882 = vshrl.u32 %v881, 7
        %v883 = vsub.s32 %v880, %v882
        %v884 = vrot.slane %v876, %v883
        %v885 = vcombine.high %v884, %v884
        %888 = vst.msk [vmem:[%s378 + $0x1] sm:$0x1] %vm655, %v884
        %889 = vst.msk [vmem:[%s378 + $0x9] sm:$0x1] %vm655, %v885
        %s890 = sadd.s32 %s412, 2
        %p891 = scmp.ge.s32.totalorder %s890, 1
        %p892 = scmp.gt.s32.totalorder %s658, 0
        %s893 = scalar_select %p892, %s658, 0
        %s894 = smul.u32 %s893, 2
        %s895 = scalar_lea.vmem [#allocation2], %s894
        %v896 = vld [vmem:[%s895] sm:$0x3]
        %s897 = scalar_select %p891, 1, 0
        %v898 = vstv %s897
        %vm899 = vcmp.eq.s32.totalorder %v898, 1
        %v900 = vsel %vm899, %v896, 0.0
        %v901 = vadd.f32 %v900, 0.0
        %p902 = scmp.ge.s32.totalorder %s890, 2
        %v903 = vld [vmem:[%s663] sm:$0x3]
        %s904 = scalar_select %p902, 1, 0
        %v905 = vstv %s904
        %vm906 = vcmp.eq.s32.totalorder %v905, 1
        %v907 = vsel %vm906, %v903, 0.0
        %v908 = vadd.f32 %v901, %v907
        %p909 = scmp.ge.s32.totalorder %s890, 4
        %v910 = vld [vmem:[%s430] sm:$0x3]
        %s911 = scalar_select %p909, 1, 0
        %v912 = vstv %s911
        %vm913 = vcmp.eq.s32.totalorder %v912, 1
        %v914 = vsel %vm913, %v910, 0.0
        %v915 = vadd.f32 %v908, %v914
        %p916 = scmp.ge.s32.totalorder %s890, 8
        %s917 = sadd.s32 %s412, 4294967290
        %p918 = scmp.gt.s32.totalorder %s917, 0
        %s919 = scalar_select %p918, %s917, 0
        %s920 = smul.u32 %s919, 2
        %s921 = scalar_lea.vmem [#allocation2], %s920
        %v922 = vld [vmem:[%s921] sm:$0x3]
        %s923 = scalar_select %p916, 1, 0
        %v924 = vstv %s923
        %vm925 = vcmp.eq.s32.totalorder %v924, 1
        %v926 = vsel %vm925, %v922, 0.0
        %v927 = vadd.f32 %v915, %v926
        %s928 = scalar_lea.vmem %s388, 8
        %v929 = vld [vmem:[%s928] sm:$0xf]
        %v931 = vsel %vm462, %v927, 0
        %933 = vmatprep.subr.mxu0 %v397
        %934 = vmatpush1.msra.mxu0 %v396
        %935 = vmatprep.subr.mxu0 %v399
        %936 = vmatpush1.msra.mxu0 %v398
        %937 = vmatprep.subr.mxu0 %v401
        %938 = vmatpush1.msra.mxu0 %v400
        %939 = vmatprep.subr.mxu0 %v403
        %940 = vmatpush1.msra.mxu0 %v402
        %941 = vmatprep.subr.mxu0 %v405
        %942 = vmatpush1.msra.mxu0 %v404
        %943 = vmatprep.subr.mxu0 %v407
        %944 = vmatpush1.msra.mxu0 %v406
        %945 = vmatprep.subr.mxu0 %v409
        %946 = vmatpush1.msra.mxu0 %v408
        %947 = vmatprep.subr.mxu0 %v411
        %948 = vmatpush1.msra.mxu0 %v410
        %949 = vmatprep.subr.mxu0 0.0
        %950 = vmatpush1.msra.mxu0 0.0
        %951 = vmatprep.subr.mxu0 0.0
        %952 = vmatpush1.msra.mxu0 0.0
        %953 = vmatprep.subr.mxu0 0.0
        %954 = vmatpush1.msra.mxu0 0.0
        %955 = vmatprep.subr.mxu0 0.0
        %956 = vmatpush1.msra.mxu0 0.0
        %957 = vmatprep.subr.mxu0 0.0
        %958 = vmatpush1.msra.mxu0 0.0
        %959 = vmatprep.subr.mxu0 0.0
        %960 = vmatpush1.msra.mxu0 0.0
        %961 = vmatprep.subr.mxu0 0.0
        %962 = vmatpush1.msra.mxu0 0.0
        %963 = vmatprep.subr.mxu0 0.0
        %964 = vmatpush1.msra.mxu0 0.0
        %965 = vmatprep.subr.mxu0 0.0
        %966 = vmatpush1.msra.mxu0 0.0
        %967 = vmatprep.subr.mxu0 0.0
        %968 = vmatpush1.msra.mxu0 0.0
        %969 = vmatprep.subr.mxu0 0.0
        %970 = vmatpush1.msra.mxu0 0.0
        %971 = vmatprep.subr.mxu0 0.0
        %972 = vmatpush1.msra.mxu0 0.0
        %973 = vmatprep.subr.mxu0 0.0
        %974 = vmatpush1.msra.mxu0 0.0
        %975 = vmatprep.subr.mxu0 0.0
        %976 = vmatpush1.msra.mxu0 0.0
        %977 = vmatprep.subr.mxu0 0.0
        %978 = vmatpush1.msra.mxu0 0.0
        %979 = vmatprep.subr.mxu0 0.0
        %980 = vmatpush1.msra.mxu0 0.0
        %981 = vmatprep.subr.mxu0 0.0
        %982 = vmatpush1.msra.mxu0 0.0
        %983 = vmatprep.subr.mxu0 0.0
        %984 = vmatpush1.msra.mxu0 0.0
        %985 = vmatprep.subr.mxu0 0.0
        %986 = vmatpush1.msra.mxu0 0.0
        %987 = vmatprep.subr.mxu0 0.0
        %988 = vmatpush1.msra.mxu0 0.0
        %989 = vmatprep.subr.mxu0 0.0
        %990 = vmatpush1.msra.mxu0 0.0
        %991 = vmatprep.subr.mxu0 0.0
        %992 = vmatpush1.msra.mxu0 0.0
        %993 = vmatprep.subr.mxu0 0.0
        %994 = vmatpush1.msra.mxu0 0.0
        %995 = vmatprep.subr.mxu0 0.0
        %996 = vmatpush1.msra.mxu0 0.0
        %997 = vmatprep.mubr.f32.mxu0 0.0
        %998 = vmatmul.mubr.f32.gmra.mrb[0].mxu0 %v931
        %v999 = vpop.f32.mrb[0].mxu0
        %v1000 = vadd.f32 0.0, %v999
        %v1001 = vpop.f32.mrb[0].mxu0
        %v1002 = vadd.f32 0.0, %v1001
        %1003 = vdwg.mxu0
        %v1006 = vcombine.low %v1000, %v1002
        %v1008 = vunpack.c.l.s4 1983009808
        %v1009 = vunpack.c.0.s8 %v1008
        %v1010 = vlaneseq
        %v1011 = vshrl.u32 %v1010, 7
        %v1012 = vsub.s32 %v1009, %v1011
        %v1013 = vrot.slane %v1006, %v1012
        %v1015 = vadd.f32 %v929, %v1013
        %v1016 = vxor.u32 %v1015, 2147483648
        %v1017 = vmul.f32 %v1016, 1.442695
        %v1018 = vpow.pop %v1017
        %v1019 = vadd.f32 %v1018, 1.0
        %v1020 = vrcp.pop %v1019
        %v1021 = vmul.f32 1.0, %v1020
        %1023 = vrot.lane.b32.xlu0 %v1015, 64
        %v1024 = vpop.permute.xlu0 %1023
        %v1025 = vrot.slane %v1024, 2
        %v1027 = vtanh.pop %v1025
        %v1028 = vld [vmem:[#allocation3] sm:$0x3]
        %v1031 = vunpack.c.l.s4 1983009808
        %v1032 = vunpack.c.0.s8 %v1031
        %v1033 = vlaneseq
        %v1034 = vshrl.u32 %v1033, 7
        %v1035 = vsub.s32 %v1032, %v1034
        %v1036 = vrot.slane %v1028, %v1035
        %1037 = vrot.lane.b32.xlu0 %v1036, 64
        %v1038 = vpop.permute.xlu0 %1037
        %v1040 = vmul.f32 %v1021, %v1038
        %v1041 = vmul.f32 %v1021, %v1027
        %1043 = vrot.lane.b32.xlu0 %v1041, 64
        %v1044 = vpop.permute.xlu0 %1043
        %v1046 = vadd.f32 %v1040, %v1044
        %v1047 = vtanh.pop %v1046
        %v1049 = vrot.slane %v1021, 2
        %1052 = vrot.lane.b32.xlu0 %v1047, 64
        %v1053 = vpop.permute.xlu0 %1052
        %v1055 = vmul.f32 %v1049, %v1053
        %v1058 = vunpack.c.l.s4 1983009808
        %v1059 = vunpack.c.0.s8 %v1058
        %v1060 = vlaneseq
        %v1061 = vshrl.u32 %v1060, 7
        %v1062 = vsub.s32 %v1059, %v1061
        %v1063 = vrot.slane %v1046, %v1062
        %1064 = vrot.lane.b32.xlu0 %v1063, 64
        %v1065 = vpop.permute.xlu0 %1064
        %1067 = vst.msk [vmem:[#allocation3] sm:$0x3] %vm600, %v1065
        %s1068 = smul.u32 %s890, 2
        %s1069 = scalar_lea.vmem [#allocation2], %s1068
        %1070 = vst.msk [vmem:[%s1069] sm:$0x3] %vm600, %v1055
        %v1071 = vld [vmem:[%s344 + $0x2] sm:$0x1]
        %v1072 = vld [vmem:[%s344 + $0xa] sm:$0x1]
        %1074 = vset.pattern.permute.xlu0 0
        %1075 = vperm.xlu0 %1074, %v1071
        %v1076 = vpop.permute.xlu0 %1075
        %1078 = vset.pattern.permute.xlu0 0
        %1079 = vperm.xlu0 %1078, %v1072
        %v1080 = vpop.permute.xlu0 %1079
        %v1082 = vunpack.c.l.s4 269488144
        %v1083 = vunpack.c.0.s8 %v1082
        %v1084 = vlaneseq
        %v1085 = vshrl.u32 %v1084, 7
        %v1086 = vsub.s32 %v1083, %v1085
        %v1087 = vrot.slane %v1076, %v1086
        %v1089 = vunpack.c.l.s4 269488144
        %v1090 = vunpack.c.0.s8 %v1089
        %v1091 = vlaneseq
        %v1092 = vshrl.u32 %v1091, 7
        %v1093 = vsub.s32 %v1090, %v1092
        %v1094 = vrot.slane %v1080, %v1093
        %v1095 = vsel %vm629, %v1087, %v1087
        %v1096 = vsel %vm631, %v1087, %v1095
        %v1097 = vrot.slane %v1094, 7
        %v1098 = vsel %vm634, %v1097, %v1096
        %v1099 = vsel %vm636, %v1097, %v1098
        %v1100 = vsel %vm638, %v1097, %v1099
        %v1101 = vsel %vm640, %v1097, %v1100
        %v1103 = vmul.f32 %v1055, %v1101
        %v1106 = vunpack.c.l.s4 1966171168
        %v1107 = vunpack.c.0.s8 %v1106
        %v1108 = vlaneseq
        %v1109 = vshrl.u32 %v1108, 7
        %v1110 = vsub.s32 %v1107, %v1109
        %v1111 = vrot.slane %v1103, %v1110
        %v1112 = vcombine.high %v1111, %v1111
        %1115 = vst.msk [vmem:[%s378 + $0x2] sm:$0x1] %vm655, %v1111
        %1116 = vst.msk [vmem:[%s378 + $0xa] sm:$0x1] %vm655, %v1112
        %s1117 = sadd.s32 %s412, 3
        %p1118 = scmp.ge.s32.totalorder %s1117, 1
        %p1119 = scmp.gt.s32.totalorder %s890, 0
        %s1120 = scalar_select %p1119, %s890, 0
        %s1121 = smul.u32 %s1120, 2
        %s1122 = scalar_lea.vmem [#allocation2], %s1121
        %v1123 = vld [vmem:[%s1122] sm:$0x3]
        %s1124 = scalar_select %p1118, 1, 0
        %v1125 = vstv %s1124
        %vm1126 = vcmp.eq.s32.totalorder %v1125, 1
        %v1127 = vsel %vm1126, %v1123, 0.0
        %v1128 = vadd.f32 %v1127, 0.0
        %p1129 = scmp.ge.s32.totalorder %s1117, 2
        %v1130 = vld [vmem:[%s895] sm:$0x3]
        %s1131 = scalar_select %p1129, 1, 0
        %v1132 = vstv %s1131
        %vm1133 = vcmp.eq.s32.totalorder %v1132, 1
        %v1134 = vsel %vm1133, %v1130, 0.0
        %v1135 = vadd.f32 %v1128, %v1134
        %p1136 = scmp.ge.s32.totalorder %s1117, 4
        %v1137 = vld [vmem:[%s418] sm:$0x3]
        %s1138 = scalar_select %p1136, 1, 0
        %v1139 = vstv %s1138
        %vm1140 = vcmp.eq.s32.totalorder %v1139, 1
        %v1141 = vsel %vm1140, %v1137, 0.0
        %v1142 = vadd.f32 %v1135, %v1141
        %p1143 = scmp.ge.s32.totalorder %s1117, 8
        %s1144 = sadd.s32 %s412, 4294967291
        %p1145 = scmp.gt.s32.totalorder %s1144, 0
        %s1146 = scalar_select %p1145, %s1144, 0
        %s1147 = smul.u32 %s1146, 2
        %s1148 = scalar_lea.vmem [#allocation2], %s1147
        %v1149 = vld [vmem:[%s1148] sm:$0x3]
        %s1150 = scalar_select %p1143, 1, 0
        %v1151 = vstv %s1150
        %vm1152 = vcmp.eq.s32.totalorder %v1151, 1
        %v1153 = vsel %vm1152, %v1149, 0.0
        %v1154 = vadd.f32 %v1142, %v1153
        %s1155 = scalar_lea.vmem %s388, 12
        %v1156 = vld [vmem:[%s1155] sm:$0xf]
        %v1158 = vsel %vm462, %v1154, 0
        %1160 = vmatprep.subr.mxu0 %v397
        %1161 = vmatpush1.msra.mxu0 %v396
        %1162 = vmatprep.subr.mxu0 %v399
        %1163 = vmatpush1.msra.mxu0 %v398
        %1164 = vmatprep.subr.mxu0 %v401
        %1165 = vmatpush1.msra.mxu0 %v400
        %1166 = vmatprep.subr.mxu0 %v403
        %1167 = vmatpush1.msra.mxu0 %v402
        %1168 = vmatprep.subr.mxu0 %v405
        %1169 = vmatpush1.msra.mxu0 %v404
        %1170 = vmatprep.subr.mxu0 %v407
        %1171 = vmatpush1.msra.mxu0 %v406
        %1172 = vmatprep.subr.mxu0 %v409
        %1173 = vmatpush1.msra.mxu0 %v408
        %1174 = vmatprep.subr.mxu0 %v411
        %1175 = vmatpush1.msra.mxu0 %v410
        %1176 = vmatprep.subr.mxu0 0.0
        %1177 = vmatpush1.msra.mxu0 0.0
        %1178 = vmatprep.subr.mxu0 0.0
        %1179 = vmatpush1.msra.mxu0 0.0
        %1180 = vmatprep.subr.mxu0 0.0
        %1181 = vmatpush1.msra.mxu0 0.0
        %1182 = vmatprep.subr.mxu0 0.0
        %1183 = vmatpush1.msra.mxu0 0.0
        %1184 = vmatprep.subr.mxu0 0.0
        %1185 = vmatpush1.msra.mxu0 0.0
        %1186 = vmatprep.subr.mxu0 0.0
        %1187 = vmatpush1.msra.mxu0 0.0
        %1188 = vmatprep.subr.mxu0 0.0
        %1189 = vmatpush1.msra.mxu0 0.0
        %1190 = vmatprep.subr.mxu0 0.0
        %1191 = vmatpush1.msra.mxu0 0.0
        %1192 = vmatprep.subr.mxu0 0.0
        %1193 = vmatpush1.msra.mxu0 0.0
        %1194 = vmatprep.subr.mxu0 0.0
        %1195 = vmatpush1.msra.mxu0 0.0
        %1196 = vmatprep.subr.mxu0 0.0
        %1197 = vmatpush1.msra.mxu0 0.0
        %1198 = vmatprep.subr.mxu0 0.0
        %1199 = vmatpush1.msra.mxu0 0.0
        %1200 = vmatprep.subr.mxu0 0.0
        %1201 = vmatpush1.msra.mxu0 0.0
        %1202 = vmatprep.subr.mxu0 0.0
        %1203 = vmatpush1.msra.mxu0 0.0
        %1204 = vmatprep.subr.mxu0 0.0
        %1205 = vmatpush1.msra.mxu0 0.0
        %1206 = vmatprep.subr.mxu0 0.0
        %1207 = vmatpush1.msra.mxu0 0.0
        %1208 = vmatprep.subr.mxu0 0.0
        %1209 = vmatpush1.msra.mxu0 0.0
        %1210 = vmatprep.subr.mxu0 0.0
        %1211 = vmatpush1.msra.mxu0 0.0
        %1212 = vmatprep.subr.mxu0 0.0
        %1213 = vmatpush1.msra.mxu0 0.0
        %1214 = vmatprep.subr.mxu0 0.0
        %1215 = vmatpush1.msra.mxu0 0.0
        %1216 = vmatprep.subr.mxu0 0.0
        %1217 = vmatpush1.msra.mxu0 0.0
        %1218 = vmatprep.subr.mxu0 0.0
        %1219 = vmatpush1.msra.mxu0 0.0
        %1220 = vmatprep.subr.mxu0 0.0
        %1221 = vmatpush1.msra.mxu0 0.0
        %1222 = vmatprep.subr.mxu0 0.0
        %1223 = vmatpush1.msra.mxu0 0.0
        %1224 = vmatprep.mubr.f32.mxu0 0.0
        %1225 = vmatmul.mubr.f32.gmra.mrb[0].mxu0 %v1158
        %v1226 = vpop.f32.mrb[0].mxu0
        %v1227 = vadd.f32 0.0, %v1226
        %v1228 = vpop.f32.mrb[0].mxu0
        %v1229 = vadd.f32 0.0, %v1228
        %1230 = vdwg.mxu0
        %v1233 = vcombine.low %v1227, %v1229
        %v1235 = vunpack.c.l.s4 1983009808
        %v1236 = vunpack.c.0.s8 %v1235
        %v1237 = vlaneseq
        %v1238 = vshrl.u32 %v1237, 7
        %v1239 = vsub.s32 %v1236, %v1238
        %v1240 = vrot.slane %v1233, %v1239
        %v1242 = vadd.f32 %v1156, %v1240
        %v1243 = vxor.u32 %v1242, 2147483648
        %v1244 = vmul.f32 %v1243, 1.442695
        %v1245 = vpow.pop %v1244
        %v1246 = vadd.f32 %v1245, 1.0
        %v1247 = vrcp.pop %v1246
        %v1248 = vmul.f32 1.0, %v1247
        %1250 = vrot.lane.b32.xlu0 %v1242, 64
        %v1251 = vpop.permute.xlu0 %1250
        %v1252 = vrot.slane %v1251, 2
        %v1254 = vtanh.pop %v1252
        %v1255 = vld [vmem:[#allocation3] sm:$0x3]
        %v1258 = vunpack.c.l.s4 1983009808
        %v1259 = vunpack.c.0.s8 %v1258
        %v1260 = vlaneseq
        %v1261 = vshrl.u32 %v1260, 7
        %v1262 = vsub.s32 %v1259, %v1261
        %v1263 = vrot.slane %v1255, %v1262
        %1264 = vrot.lane.b32.xlu0 %v1263, 64
        %v1265 = vpop.permute.xlu0 %1264
        %v1267 = vmul.f32 %v1248, %v1265
        %v1268 = vmul.f32 %v1248, %v1254
        %1270 = vrot.lane.b32.xlu0 %v1268, 64
        %v1271 = vpop.permute.xlu0 %1270
        %v1273 = vadd.f32 %v1267, %v1271
        %v1274 = vtanh.pop %v1273
        %v1276 = vrot.slane %v1248, 2
        %1279 = vrot.lane.b32.xlu0 %v1274, 64
        %v1280 = vpop.permute.xlu0 %1279
        %v1282 = vmul.f32 %v1276, %v1280
        %v1285 = vunpack.c.l.s4 1983009808
        %v1286 = vunpack.c.0.s8 %v1285
        %v1287 = vlaneseq
        %v1288 = vshrl.u32 %v1287, 7
        %v1289 = vsub.s32 %v1286, %v1288
        %v1290 = vrot.slane %v1273, %v1289
        %1291 = vrot.lane.b32.xlu0 %v1290, 64
        %v1292 = vpop.permute.xlu0 %1291
        %1294 = vst.msk [vmem:[#allocation3] sm:$0x3] %vm600, %v1292
        %s1295 = smul.u32 %s1117, 2
        %s1296 = scalar_lea.vmem [#allocation2], %s1295
        %1297 = vst.msk [vmem:[%s1296] sm:$0x3] %vm600, %v1282
        %v1298 = vld [vmem:[%s344 + $0x3] sm:$0x1]
        %v1299 = vld [vmem:[%s344 + $0xb] sm:$0x1]
        %1301 = vset.pattern.permute.xlu0 0
        %1302 = vperm.xlu0 %1301, %v1298
        %v1303 = vpop.permute.xlu0 %1302
        %1305 = vset.pattern.permute.xlu0 0
        %1306 = vperm.xlu0 %1305, %v1299
        %v1307 = vpop.permute.xlu0 %1306
        %v1309 = vunpack.c.l.s4 269488144
        %v1310 = vunpack.c.0.s8 %v1309
        %v1311 = vlaneseq
        %v1312 = vshrl.u32 %v1311, 7
        %v1313 = vsub.s32 %v1310, %v1312
        %v1314 = vrot.slane %v1303, %v1313
        %v1316 = vunpack.c.l.s4 269488144
        %v1317 = vunpack.c.0.s8 %v1316
        %v1318 = vlaneseq
        %v1319 = vshrl.u32 %v1318, 7
        %v1320 = vsub.s32 %v1317, %v1319
        %v1321 = vrot.slane %v1307, %v1320
        %v1322 = vsel %vm629, %v1314, %v1314
        %v1323 = vsel %vm631, %v1314, %v1322
        %v1324 = vrot.slane %v1321, 7
        %v1325 = vsel %vm634, %v1324, %v1323
        %v1326 = vsel %vm636, %v1324, %v1325
        %v1327 = vsel %vm638, %v1324, %v1326
        %v1328 = vsel %vm640, %v1324, %v1327
        %v1330 = vmul.f32 %v1282, %v1328
        %v1333 = vunpack.c.l.s4 1966171168
        %v1334 = vunpack.c.0.s8 %v1333
        %v1335 = vlaneseq
        %v1336 = vshrl.u32 %v1335, 7
        %v1337 = vsub.s32 %v1334, %v1336
        %v1338 = vrot.slane %v1330, %v1337
        %v1339 = vcombine.high %v1338, %v1338
        %1342 = vst.msk [vmem:[%s378 + $0x3] sm:$0x1] %vm655, %v1338
        %1343 = vst.msk [vmem:[%s378 + $0xb] sm:$0x1] %vm655, %v1339
        %s1344 = sadd.s32 %s412, 4
        %p1345 = scmp.ge.s32.totalorder %s1344, 1
        %p1346 = scmp.gt.s32.totalorder %s1117, 0
        %s1347 = scalar_select %p1346, %s1117, 0
        %s1348 = smul.u32 %s1347, 2
        %s1349 = scalar_lea.vmem [#allocation2], %s1348
        %v1350 = vld [vmem:[%s1349] sm:$0x3]
        %s1351 = scalar_select %p1345, 1, 0
        %v1352 = vstv %s1351
        %vm1353 = vcmp.eq.s32.totalorder %v1352, 1
        %v1354 = vsel %vm1353, %v1350, 0.0
        %v1355 = vadd.f32 %v1354, 0.0
        %p1356 = scmp.ge.s32.totalorder %s1344, 2
        %v1357 = vld [vmem:[%s1122] sm:$0x3]
        %s1358 = scalar_select %p1356, 1, 0
        %v1359 = vstv %s1358
        %vm1360 = vcmp.eq.s32.totalorder %v1359, 1
        %v1361 = vsel %vm1360, %v1357, 0.0
        %v1362 = vadd.f32 %v1355, %v1361
        %p1363 = scmp.ge.s32.totalorder %s1344, 4
        %v1364 = vld [vmem:[%s663] sm:$0x3]
        %s1365 = scalar_select %p1363, 1, 0
        %v1366 = vstv %s1365
        %vm1367 = vcmp.eq.s32.totalorder %v1366, 1
        %v1368 = vsel %vm1367, %v1364, 0.0
        %v1369 = vadd.f32 %v1362, %v1368
        %p1370 = scmp.ge.s32.totalorder %s1344, 8
        %v1371 = vld [vmem:[%s442] sm:$0x3]
        %s1372 = scalar_select %p1370, 1, 0
        %v1373 = vstv %s1372
        %vm1374 = vcmp.eq.s32.totalorder %v1373, 1
        %v1375 = vsel %vm1374, %v1371, 0.0
        %v1376 = vadd.f32 %v1369, %v1375
        %s1377 = scalar_lea.vmem %s388, 16
        %v1378 = vld [vmem:[%s1377] sm:$0xf]
        %v1380 = vsel %vm462, %v1376, 0
        %1382 = vmatprep.subr.mxu0 %v397
        %1383 = vmatpush1.msra.mxu0 %v396
        %1384 = vmatprep.subr.mxu0 %v399
        %1385 = vmatpush1.msra.mxu0 %v398
        %1386 = vmatprep.subr.mxu0 %v401
        %1387 = vmatpush1.msra.mxu0 %v400
        %1388 = vmatprep.subr.mxu0 %v403
        %1389 = vmatpush1.msra.mxu0 %v402
        %1390 = vmatprep.subr.mxu0 %v405
        %1391 = vmatpush1.msra.mxu0 %v404
        %1392 = vmatprep.subr.mxu0 %v407
        %1393 = vmatpush1.msra.mxu0 %v406
        %1394 = vmatprep.subr.mxu0 %v409
        %1395 = vmatpush1.msra.mxu0 %v408
        %1396 = vmatprep.subr.mxu0 %v411
        %1397 = vmatpush1.msra.mxu0 %v410
        %1398 = vmatprep.subr.mxu0 0.0
        %1399 = vmatpush1.msra.mxu0 0.0
        %1400 = vmatprep.subr.mxu0 0.0
        %1401 = vmatpush1.msra.mxu0 0.0
        %1402 = vmatprep.subr.mxu0 0.0
        %1403 = vmatpush1.msra.mxu0 0.0
        %1404 = vmatprep.subr.mxu0 0.0
        %1405 = vmatpush1.msra.mxu0 0.0
        %1406 = vmatprep.subr.mxu0 0.0
        %1407 = vmatpush1.msra.mxu0 0.0
        %1408 = vmatprep.subr.mxu0 0.0
        %1409 = vmatpush1.msra.mxu0 0.0
        %1410 = vmatprep.subr.mxu0 0.0
        %1411 = vmatpush1.msra.mxu0 0.0
        %1412 = vmatprep.subr.mxu0 0.0
        %1413 = vmatpush1.msra.mxu0 0.0
        %1414 = vmatprep.subr.mxu0 0.0
        %1415 = vmatpush1.msra.mxu0 0.0
        %1416 = vmatprep.subr.mxu0 0.0
        %1417 = vmatpush1.msra.mxu0 0.0
        %1418 = vmatprep.subr.mxu0 0.0
        %1419 = vmatpush1.msra.mxu0 0.0
        %1420 = vmatprep.subr.mxu0 0.0
        %1421 = vmatpush1.msra.mxu0 0.0
        %1422 = vmatprep.subr.mxu0 0.0
        %1423 = vmatpush1.msra.mxu0 0.0
        %1424 = vmatprep.subr.mxu0 0.0
        %1425 = vmatpush1.msra.mxu0 0.0
        %1426 = vmatprep.subr.mxu0 0.0
        %1427 = vmatpush1.msra.mxu0 0.0
        %1428 = vmatprep.subr.mxu0 0.0
        %1429 = vmatpush1.msra.mxu0 0.0
        %1430 = vmatprep.subr.mxu0 0.0
        %1431 = vmatpush1.msra.mxu0 0.0
        %1432 = vmatprep.subr.mxu0 0.0
        %1433 = vmatpush1.msra.mxu0 0.0
        %1434 = vmatprep.subr.mxu0 0.0
        %1435 = vmatpush1.msra.mxu0 0.0
        %1436 = vmatprep.subr.mxu0 0.0
        %1437 = vmatpush1.msra.mxu0 0.0
        %1438 = vmatprep.subr.mxu0 0.0
        %1439 = vmatpush1.msra.mxu0 0.0
        %1440 = vmatprep.subr.mxu0 0.0
        %1441 = vmatpush1.msra.mxu0 0.0
        %1442 = vmatprep.subr.mxu0 0.0
        %1443 = vmatpush1.msra.mxu0 0.0
        %1444 = vmatprep.subr.mxu0 0.0
        %1445 = vmatpush1.msra.mxu0 0.0
        %1446 = vmatprep.mubr.f32.mxu0 0.0
        %1447 = vmatmul.mubr.f32.gmra.mrb[0].mxu0 %v1380
        %v1448 = vpop.f32.mrb[0].mxu0
        %v1449 = vadd.f32 0.0, %v1448
        %v1450 = vpop.f32.mrb[0].mxu0
        %v1451 = vadd.f32 0.0, %v1450
        %1452 = vdwg.mxu0
        %v1455 = vcombine.low %v1449, %v1451
        %v1457 = vunpack.c.l.s4 1983009808
        %v1458 = vunpack.c.0.s8 %v1457
        %v1459 = vlaneseq
        %v1460 = vshrl.u32 %v1459, 7
        %v1461 = vsub.s32 %v1458, %v1460
        %v1462 = vrot.slane %v1455, %v1461
        %v1464 = vadd.f32 %v1378, %v1462
        %v1465 = vxor.u32 %v1464, 2147483648
        %v1466 = vmul.f32 %v1465, 1.442695
        %v1467 = vpow.pop %v1466
        %v1468 = vadd.f32 %v1467, 1.0
        %v1469 = vrcp.pop %v1468
        %v1470 = vmul.f32 1.0, %v1469
        %1472 = vrot.lane.b32.xlu0 %v1464, 64
        %v1473 = vpop.permute.xlu0 %1472
        %v1474 = vrot.slane %v1473, 2
        %v1476 = vtanh.pop %v1474
        %v1477 = vld [vmem:[#allocation3] sm:$0x3]
        %v1480 = vunpack.c.l.s4 1983009808
        %v1481 = vunpack.c.0.s8 %v1480
        %v1482 = vlaneseq
        %v1483 = vshrl.u32 %v1482, 7
        %v1484 = vsub.s32 %v1481, %v1483
        %v1485 = vrot.slane %v1477, %v1484
        %1486 = vrot.lane.b32.xlu0 %v1485, 64
        %v1487 = vpop.permute.xlu0 %1486
        %v1489 = vmul.f32 %v1470, %v1487
        %v1490 = vmul.f32 %v1470, %v1476
        %1492 = vrot.lane.b32.xlu0 %v1490, 64
        %v1493 = vpop.permute.xlu0 %1492
        %v1495 = vadd.f32 %v1489, %v1493
        %v1496 = vtanh.pop %v1495
        %v1498 = vrot.slane %v1470, 2
        %1501 = vrot.lane.b32.xlu0 %v1496, 64
        %v1502 = vpop.permute.xlu0 %1501
        %v1504 = vmul.f32 %v1498, %v1502
        %v1507 = vunpack.c.l.s4 1983009808
        %v1508 = vunpack.c.0.s8 %v1507
        %v1509 = vlaneseq
        %v1510 = vshrl.u32 %v1509, 7
        %v1511 = vsub.s32 %v1508, %v1510
        %v1512 = vrot.slane %v1495, %v1511
        %1513 = vrot.lane.b32.xlu0 %v1512, 64
        %v1514 = vpop.permute.xlu0 %1513
        %1516 = vst.msk [vmem:[#allocation3] sm:$0x3] %vm600, %v1514
        %s1517 = smul.u32 %s1344, 2
        %s1518 = scalar_lea.vmem [#allocation2], %s1517
        %1519 = vst.msk [vmem:[%s1518] sm:$0x3] %vm600, %v1504
        %v1520 = vld [vmem:[%s344 + $0x4] sm:$0x1]
        %v1521 = vld [vmem:[%s344 + $0xc] sm:$0x1]
        %1523 = vset.pattern.permute.xlu0 0
        %1524 = vperm.xlu0 %1523, %v1520
        %v1525 = vpop.permute.xlu0 %1524
        %1527 = vset.pattern.permute.xlu0 0
        %1528 = vperm.xlu0 %1527, %v1521
        %v1529 = vpop.permute.xlu0 %1528
        %v1531 = vunpack.c.l.s4 269488144
        %v1532 = vunpack.c.0.s8 %v1531
        %v1533 = vlaneseq
        %v1534 = vshrl.u32 %v1533, 7
        %v1535 = vsub.s32 %v1532, %v1534
        %v1536 = vrot.slane %v1525, %v1535
        %v1538 = vunpack.c.l.s4 269488144
        %v1539 = vunpack.c.0.s8 %v1538
        %v1540 = vlaneseq
        %v1541 = vshrl.u32 %v1540, 7
        %v1542 = vsub.s32 %v1539, %v1541
        %v1543 = vrot.slane %v1529, %v1542
        %v1544 = vsel %vm629, %v1536, %v1536
        %v1545 = vsel %vm631, %v1536, %v1544
        %v1546 = vrot.slane %v1543, 7
        %v1547 = vsel %vm634, %v1546, %v1545
        %v1548 = vsel %vm636, %v1546, %v1547
        %v1549 = vsel %vm638, %v1546, %v1548
        %v1550 = vsel %vm640, %v1546, %v1549
        %v1552 = vmul.f32 %v1504, %v1550
        %v1555 = vunpack.c.l.s4 1966171168
        %v1556 = vunpack.c.0.s8 %v1555
        %v1557 = vlaneseq
        %v1558 = vshrl.u32 %v1557, 7
        %v1559 = vsub.s32 %v1556, %v1558
        %v1560 = vrot.slane %v1552, %v1559
        %v1561 = vcombine.high %v1560, %v1560
        %1564 = vst.msk [vmem:[%s378 + $0x4] sm:$0x1] %vm655, %v1560
        %1565 = vst.msk [vmem:[%s378 + $0xc] sm:$0x1] %vm655, %v1561
        %s1566 = sadd.s32 %s412, 5
        %p1567 = scmp.ge.s32.totalorder %s1566, 1
        %p1568 = scmp.gt.s32.totalorder %s1344, 0
        %s1569 = scalar_select %p1568, %s1344, 0
        %s1570 = smul.u32 %s1569, 2
        %s1571 = scalar_lea.vmem [#allocation2], %s1570
        %v1572 = vld [vmem:[%s1571] sm:$0x3]
        %s1573 = scalar_select %p1567, 1, 0
        %v1574 = vstv %s1573
        %vm1575 = vcmp.eq.s32.totalorder %v1574, 1
        %v1576 = vsel %vm1575, %v1572, 0.0
        %v1577 = vadd.f32 %v1576, 0.0
        %p1578 = scmp.ge.s32.totalorder %s1566, 2
        %v1579 = vld [vmem:[%s1349] sm:$0x3]
        %s1580 = scalar_select %p1578, 1, 0
        %v1581 = vstv %s1580
        %vm1582 = vcmp.eq.s32.totalorder %v1581, 1
        %v1583 = vsel %vm1582, %v1579, 0.0
        %v1584 = vadd.f32 %v1577, %v1583
        %p1585 = scmp.ge.s32.totalorder %s1566, 4
        %v1586 = vld [vmem:[%s895] sm:$0x3]
        %s1587 = scalar_select %p1585, 1, 0
        %v1588 = vstv %s1587
        %vm1589 = vcmp.eq.s32.totalorder %v1588, 1
        %v1590 = vsel %vm1589, %v1586, 0.0
        %v1591 = vadd.f32 %v1584, %v1590
        %p1592 = scmp.ge.s32.totalorder %s1566, 8
        %v1593 = vld [vmem:[%s682] sm:$0x3]
        %s1594 = scalar_select %p1592, 1, 0
        %v1595 = vstv %s1594
        %vm1596 = vcmp.eq.s32.totalorder %v1595, 1
        %v1597 = vsel %vm1596, %v1593, 0.0
        %v1598 = vadd.f32 %v1591, %v1597
        %s1599 = scalar_lea.vmem %s388, 20
        %v1600 = vld [vmem:[%s1599] sm:$0xf]
        %v1602 = vsel %vm462, %v1598, 0
        %1604 = vmatprep.subr.mxu0 %v397
        %1605 = vmatpush1.msra.mxu0 %v396
        %1606 = vmatprep.subr.mxu0 %v399
        %1607 = vmatpush1.msra.mxu0 %v398
        %1608 = vmatprep.subr.mxu0 %v401
        %1609 = vmatpush1.msra.mxu0 %v400
        %1610 = vmatprep.subr.mxu0 %v403
        %1611 = vmatpush1.msra.mxu0 %v402
        %1612 = vmatprep.subr.mxu0 %v405
        %1613 = vmatpush1.msra.mxu0 %v404
        %1614 = vmatprep.subr.mxu0 %v407
        %1615 = vmatpush1.msra.mxu0 %v406
        %1616 = vmatprep.subr.mxu0 %v409
        %1617 = vmatpush1.msra.mxu0 %v408
        %1618 = vmatprep.subr.mxu0 %v411
        %1619 = vmatpush1.msra.mxu0 %v410
        %1620 = vmatprep.subr.mxu0 0.0
        %1621 = vmatpush1.msra.mxu0 0.0
        %1622 = vmatprep.subr.mxu0 0.0
        %1623 = vmatpush1.msra.mxu0 0.0
        %1624 = vmatprep.subr.mxu0 0.0
        %1625 = vmatpush1.msra.mxu0 0.0
        %1626 = vmatprep.subr.mxu0 0.0
        %1627 = vmatpush1.msra.mxu0 0.0
        %1628 = vmatprep.subr.mxu0 0.0
        %1629 = vmatpush1.msra.mxu0 0.0
        %1630 = vmatprep.subr.mxu0 0.0
        %1631 = vmatpush1.msra.mxu0 0.0
        %1632 = vmatprep.subr.mxu0 0.0
        %1633 = vmatpush1.msra.mxu0 0.0
        %1634 = vmatprep.subr.mxu0 0.0
        %1635 = vmatpush1.msra.mxu0 0.0
        %1636 = vmatprep.subr.mxu0 0.0
        %1637 = vmatpush1.msra.mxu0 0.0
        %1638 = vmatprep.subr.mxu0 0.0
        %1639 = vmatpush1.msra.mxu0 0.0
        %1640 = vmatprep.subr.mxu0 0.0
        %1641 = vmatpush1.msra.mxu0 0.0
        %1642 = vmatprep.subr.mxu0 0.0
        %1643 = vmatpush1.msra.mxu0 0.0
        %1644 = vmatprep.subr.mxu0 0.0
        %1645 = vmatpush1.msra.mxu0 0.0
        %1646 = vmatprep.subr.mxu0 0.0
        %1647 = vmatpush1.msra.mxu0 0.0
        %1648 = vmatprep.subr.mxu0 0.0
        %1649 = vmatpush1.msra.mxu0 0.0
        %1650 = vmatprep.subr.mxu0 0.0
        %1651 = vmatpush1.msra.mxu0 0.0
        %1652 = vmatprep.subr.mxu0 0.0
        %1653 = vmatpush1.msra.mxu0 0.0
        %1654 = vmatprep.subr.mxu0 0.0
        %1655 = vmatpush1.msra.mxu0 0.0
        %1656 = vmatprep.subr.mxu0 0.0
        %1657 = vmatpush1.msra.mxu0 0.0
        %1658 = vmatprep.subr.mxu0 0.0
        %1659 = vmatpush1.msra.mxu0 0.0
        %1660 = vmatprep.subr.mxu0 0.0
        %1661 = vmatpush1.msra.mxu0 0.0
        %1662 = vmatprep.subr.mxu0 0.0
        %1663 = vmatpush1.msra.mxu0 0.0
        %1664 = vmatprep.subr.mxu0 0.0
        %1665 = vmatpush1.msra.mxu0 0.0
        %1666 = vmatprep.subr.mxu0 0.0
        %1667 = vmatpush1.msra.mxu0 0.0
        %1668 = vmatprep.mubr.f32.mxu0 0.0
        %1669 = vmatmul.mubr.f32.gmra.mrb[0].mxu0 %v1602
        %v1670 = vpop.f32.mrb[0].mxu0
        %v1671 = vadd.f32 0.0, %v1670
        %v1672 = vpop.f32.mrb[0].mxu0
        %v1673 = vadd.f32 0.0, %v1672
        %1674 = vdwg.mxu0
        %v1677 = vcombine.low %v1671, %v1673
        %v1679 = vunpack.c.l.s4 1983009808
        %v1680 = vunpack.c.0.s8 %v1679
        %v1681 = vlaneseq
        %v1682 = vshrl.u32 %v1681, 7
        %v1683 = vsub.s32 %v1680, %v1682
        %v1684 = vrot.slane %v1677, %v1683
        %v1686 = vadd.f32 %v1600, %v1684
        %v1687 = vxor.u32 %v1686, 2147483648
        %v1688 = vmul.f32 %v1687, 1.442695
        %v1689 = vpow.pop %v1688
        %v1690 = vadd.f32 %v1689, 1.0
        %v1691 = vrcp.pop %v1690
        %v1692 = vmul.f32 1.0, %v1691
        %1694 = vrot.lane.b32.xlu0 %v1686, 64
        %v1695 = vpop.permute.xlu0 %1694
        %v1696 = vrot.slane %v1695, 2
        %v1698 = vtanh.pop %v1696
        %v1699 = vld [vmem:[#allocation3] sm:$0x3]
        %v1702 = vunpack.c.l.s4 1983009808
        %v1703 = vunpack.c.0.s8 %v1702
        %v1704 = vlaneseq
        %v1705 = vshrl.u32 %v1704, 7
        %v1706 = vsub.s32 %v1703, %v1705
        %v1707 = vrot.slane %v1699, %v1706
        %1708 = vrot.lane.b32.xlu0 %v1707, 64
        %v1709 = vpop.permute.xlu0 %1708
        %v1711 = vmul.f32 %v1692, %v1709
        %v1712 = vmul.f32 %v1692, %v1698
        %1714 = vrot.lane.b32.xlu0 %v1712, 64
        %v1715 = vpop.permute.xlu0 %1714
        %v1717 = vadd.f32 %v1711, %v1715
        %v1718 = vtanh.pop %v1717
        %v1720 = vrot.slane %v1692, 2
        %1723 = vrot.lane.b32.xlu0 %v1718, 64
        %v1724 = vpop.permute.xlu0 %1723
        %v1726 = vmul.f32 %v1720, %v1724
        %v1729 = vunpack.c.l.s4 1983009808
        %v1730 = vunpack.c.0.s8 %v1729
        %v1731 = vlaneseq
        %v1732 = vshrl.u32 %v1731, 7
        %v1733 = vsub.s32 %v1730, %v1732
        %v1734 = vrot.slane %v1717, %v1733
        %1735 = vrot.lane.b32.xlu0 %v1734, 64
        %v1736 = vpop.permute.xlu0 %1735
        %1738 = vst.msk [vmem:[#allocation3] sm:$0x3] %vm600, %v1736
        %s1739 = smul.u32 %s1566, 2
        %s1740 = scalar_lea.vmem [#allocation2], %s1739
        %1741 = vst.msk [vmem:[%s1740] sm:$0x3] %vm600, %v1726
        %v1742 = vld [vmem:[%s344 + $0x5] sm:$0x1]
        %v1743 = vld [vmem:[%s344 + $0xd] sm:$0x1]
        %1745 = vset.pattern.permute.xlu0 0
        %1746 = vperm.xlu0 %1745, %v1742
        %v1747 = vpop.permute.xlu0 %1746
        %1749 = vset.pattern.permute.xlu0 0
        %1750 = vperm.xlu0 %1749, %v1743
        %v1751 = vpop.permute.xlu0 %1750
        %v1753 = vunpack.c.l.s4 269488144
        %v1754 = vunpack.c.0.s8 %v1753
        %v1755 = vlaneseq
        %v1756 = vshrl.u32 %v1755, 7
        %v1757 = vsub.s32 %v1754, %v1756
        %v1758 = vrot.slane %v1747, %v1757
        %v1760 = vunpack.c.l.s4 269488144
        %v1761 = vunpack.c.0.s8 %v1760
        %v1762 = vlaneseq
        %v1763 = vshrl.u32 %v1762, 7
        %v1764 = vsub.s32 %v1761, %v1763
        %v1765 = vrot.slane %v1751, %v1764
        %v1766 = vsel %vm629, %v1758, %v1758
        %v1767 = vsel %vm631, %v1758, %v1766
        %v1768 = vrot.slane %v1765, 7
        %v1769 = vsel %vm634, %v1768, %v1767
        %v1770 = vsel %vm636, %v1768, %v1769
        %v1771 = vsel %vm638, %v1768, %v1770
        %v1772 = vsel %vm640, %v1768, %v1771
        %v1774 = vmul.f32 %v1726, %v1772
        %v1777 = vunpack.c.l.s4 1966171168
        %v1778 = vunpack.c.0.s8 %v1777
        %v1779 = vlaneseq
        %v1780 = vshrl.u32 %v1779, 7
        %v1781 = vsub.s32 %v1778, %v1780
        %v1782 = vrot.slane %v1774, %v1781
        %v1783 = vcombine.high %v1782, %v1782
        %1786 = vst.msk [vmem:[%s378 + $0x5] sm:$0x1] %vm655, %v1782
        %1787 = vst.msk [vmem:[%s378 + $0xd] sm:$0x1] %vm655, %v1783
        %s1788 = sadd.s32 %s412, 6
        %p1789 = scmp.ge.s32.totalorder %s1788, 1
        %p1790 = scmp.gt.s32.totalorder %s1566, 0
        %s1791 = scalar_select %p1790, %s1566, 0
        %s1792 = smul.u32 %s1791, 2
        %s1793 = scalar_lea.vmem [#allocation2], %s1792
        %v1794 = vld [vmem:[%s1793] sm:$0x3]
        %s1795 = scalar_select %p1789, 1, 0
        %v1796 = vstv %s1795
        %vm1797 = vcmp.eq.s32.totalorder %v1796, 1
        %v1798 = vsel %vm1797, %v1794, 0.0
        %v1799 = vadd.f32 %v1798, 0.0
        %p1800 = scmp.ge.s32.totalorder %s1788, 2
        %v1801 = vld [vmem:[%s1571] sm:$0x3]
        %s1802 = scalar_select %p1800, 1, 0
        %v1803 = vstv %s1802
        %vm1804 = vcmp.eq.s32.totalorder %v1803, 1
        %v1805 = vsel %vm1804, %v1801, 0.0
        %v1806 = vadd.f32 %v1799, %v1805
        %p1807 = scmp.ge.s32.totalorder %s1788, 4
        %v1808 = vld [vmem:[%s1122] sm:$0x3]
        %s1809 = scalar_select %p1807, 1, 0
        %v1810 = vstv %s1809
        %vm1811 = vcmp.eq.s32.totalorder %v1810, 1
        %v1812 = vsel %vm1811, %v1808, 0.0
        %v1813 = vadd.f32 %v1806, %v1812
        %p1814 = scmp.ge.s32.totalorder %s1788, 8
        %v1815 = vld [vmem:[%s430] sm:$0x3]
        %s1816 = scalar_select %p1814, 1, 0
        %v1817 = vstv %s1816
        %vm1818 = vcmp.eq.s32.totalorder %v1817, 1
        %v1819 = vsel %vm1818, %v1815, 0.0
        %v1820 = vadd.f32 %v1813, %v1819
        %s1821 = scalar_lea.vmem %s388, 24
        %v1822 = vld [vmem:[%s1821] sm:$0xf]
        %v1824 = vsel %vm462, %v1820, 0
        %1826 = vmatprep.subr.mxu0 %v397
        %1827 = vmatpush1.msra.mxu0 %v396
        %1828 = vmatprep.subr.mxu0 %v399
        %1829 = vmatpush1.msra.mxu0 %v398
        %1830 = vmatprep.subr.mxu0 %v401
        %1831 = vmatpush1.msra.mxu0 %v400
        %1832 = vmatprep.subr.mxu0 %v403
        %1833 = vmatpush1.msra.mxu0 %v402
        %1834 = vmatprep.subr.mxu0 %v405
        %1835 = vmatpush1.msra.mxu0 %v404
        %1836 = vmatprep.subr.mxu0 %v407
        %1837 = vmatpush1.msra.mxu0 %v406
        %1838 = vmatprep.subr.mxu0 %v409
        %1839 = vmatpush1.msra.mxu0 %v408
        %1840 = vmatprep.subr.mxu0 %v411
        %1841 = vmatpush1.msra.mxu0 %v410
        %1842 = vmatprep.subr.mxu0 0.0
        %1843 = vmatpush1.msra.mxu0 0.0
        %1844 = vmatprep.subr.mxu0 0.0
        %1845 = vmatpush1.msra.mxu0 0.0
        %1846 = vmatprep.subr.mxu0 0.0
        %1847 = vmatpush1.msra.mxu0 0.0
        %1848 = vmatprep.subr.mxu0 0.0
        %1849 = vmatpush1.msra.mxu0 0.0
        %1850 = vmatprep.subr.mxu0 0.0
        %1851 = vmatpush1.msra.mxu0 0.0
        %1852 = vmatprep.subr.mxu0 0.0
        %1853 = vmatpush1.msra.mxu0 0.0
        %1854 = vmatprep.subr.mxu0 0.0
        %1855 = vmatpush1.msra.mxu0 0.0
        %1856 = vmatprep.subr.mxu0 0.0
        %1857 = vmatpush1.msra.mxu0 0.0
        %1858 = vmatprep.subr.mxu0 0.0
        %1859 = vmatpush1.msra.mxu0 0.0
        %1860 = vmatprep.subr.mxu0 0.0
        %1861 = vmatpush1.msra.mxu0 0.0
        %1862 = vmatprep.subr.mxu0 0.0
        %1863 = vmatpush1.msra.mxu0 0.0
        %1864 = vmatprep.subr.mxu0 0.0
        %1865 = vmatpush1.msra.mxu0 0.0
        %1866 = vmatprep.subr.mxu0 0.0
        %1867 = vmatpush1.msra.mxu0 0.0
        %1868 = vmatprep.subr.mxu0 0.0
        %1869 = vmatpush1.msra.mxu0 0.0
        %1870 = vmatprep.subr.mxu0 0.0
        %1871 = vmatpush1.msra.mxu0 0.0
        %1872 = vmatprep.subr.mxu0 0.0
        %1873 = vmatpush1.msra.mxu0 0.0
        %1874 = vmatprep.subr.mxu0 0.0
        %1875 = vmatpush1.msra.mxu0 0.0
        %1876 = vmatprep.subr.mxu0 0.0
        %1877 = vmatpush1.msra.mxu0 0.0
        %1878 = vmatprep.subr.mxu0 0.0
        %1879 = vmatpush1.msra.mxu0 0.0
        %1880 = vmatprep.subr.mxu0 0.0
        %1881 = vmatpush1.msra.mxu0 0.0
        %1882 = vmatprep.subr.mxu0 0.0
        %1883 = vmatpush1.msra.mxu0 0.0
        %1884 = vmatprep.subr.mxu0 0.0
        %1885 = vmatpush1.msra.mxu0 0.0
        %1886 = vmatprep.subr.mxu0 0.0
        %1887 = vmatpush1.msra.mxu0 0.0
        %1888 = vmatprep.subr.mxu0 0.0
        %1889 = vmatpush1.msra.mxu0 0.0
        %1890 = vmatprep.mubr.f32.mxu0 0.0
        %1891 = vmatmul.mubr.f32.gmra.mrb[0].mxu0 %v1824
        %v1892 = vpop.f32.mrb[0].mxu0
        %v1893 = vadd.f32 0.0, %v1892
        %v1894 = vpop.f32.mrb[0].mxu0
        %v1895 = vadd.f32 0.0, %v1894
        %1896 = vdwg.mxu0
        %v1899 = vcombine.low %v1893, %v1895
        %v1901 = vunpack.c.l.s4 1983009808
        %v1902 = vunpack.c.0.s8 %v1901
        %v1903 = vlaneseq
        %v1904 = vshrl.u32 %v1903, 7
        %v1905 = vsub.s32 %v1902, %v1904
        %v1906 = vrot.slane %v1899, %v1905
        %v1908 = vadd.f32 %v1822, %v1906
        %v1909 = vxor.u32 %v1908, 2147483648
        %v1910 = vmul.f32 %v1909, 1.442695
        %v1911 = vpow.pop %v1910
        %v1912 = vadd.f32 %v1911, 1.0
        %v1913 = vrcp.pop %v1912
        %v1914 = vmul.f32 1.0, %v1913
        %1916 = vrot.lane.b32.xlu0 %v1908, 64
        %v1917 = vpop.permute.xlu0 %1916
        %v1918 = vrot.slane %v1917, 2
        %v1920 = vtanh.pop %v1918
        %v1921 = vld [vmem:[#allocation3] sm:$0x3]
        %v1924 = vunpack.c.l.s4 1983009808
        %v1925 = vunpack.c.0.s8 %v1924
        %v1926 = vlaneseq
        %v1927 = vshrl.u32 %v1926, 7
        %v1928 = vsub.s32 %v1925, %v1927
        %v1929 = vrot.slane %v1921, %v1928
        %1930 = vrot.lane.b32.xlu0 %v1929, 64
        %v1931 = vpop.permute.xlu0 %1930
        %v1933 = vmul.f32 %v1914, %v1931
        %v1934 = vmul.f32 %v1914, %v1920
        %1936 = vrot.lane.b32.xlu0 %v1934, 64
        %v1937 = vpop.permute.xlu0 %1936
        %v1939 = vadd.f32 %v1933, %v1937
        %v1940 = vtanh.pop %v1939
        %v1942 = vrot.slane %v1914, 2
        %1945 = vrot.lane.b32.xlu0 %v1940, 64
        %v1946 = vpop.permute.xlu0 %1945
        %v1948 = vmul.f32 %v1942, %v1946
        %v1951 = vunpack.c.l.s4 1983009808
        %v1952 = vunpack.c.0.s8 %v1951
        %v1953 = vlaneseq
        %v1954 = vshrl.u32 %v1953, 7
        %v1955 = vsub.s32 %v1952, %v1954
        %v1956 = vrot.slane %v1939, %v1955
        %1957 = vrot.lane.b32.xlu0 %v1956, 64
        %v1958 = vpop.permute.xlu0 %1957
        %1960 = vst.msk [vmem:[#allocation3] sm:$0x3] %vm600, %v1958
        %s1961 = smul.u32 %s1788, 2
        %s1962 = scalar_lea.vmem [#allocation2], %s1961
        %1963 = vst.msk [vmem:[%s1962] sm:$0x3] %vm600, %v1948
        %v1964 = vld [vmem:[%s344 + $0x6] sm:$0x1]
        %v1965 = vld [vmem:[%s344 + $0xe] sm:$0x1]
        %1967 = vset.pattern.permute.xlu0 0
        %1968 = vperm.xlu0 %1967, %v1964
        %v1969 = vpop.permute.xlu0 %1968
        %1971 = vset.pattern.permute.xlu0 0
        %1972 = vperm.xlu0 %1971, %v1965
        %v1973 = vpop.permute.xlu0 %1972
        %v1975 = vunpack.c.l.s4 269488144
        %v1976 = vunpack.c.0.s8 %v1975
        %v1977 = vlaneseq
        %v1978 = vshrl.u32 %v1977, 7
        %v1979 = vsub.s32 %v1976, %v1978
        %v1980 = vrot.slane %v1969, %v1979
        %v1982 = vunpack.c.l.s4 269488144
        %v1983 = vunpack.c.0.s8 %v1982
        %v1984 = vlaneseq
        %v1985 = vshrl.u32 %v1984, 7
        %v1986 = vsub.s32 %v1983, %v1985
        %v1987 = vrot.slane %v1973, %v1986
        %v1988 = vsel %vm629, %v1980, %v1980
        %v1989 = vsel %vm631, %v1980, %v1988
        %v1990 = vrot.slane %v1987, 7
        %v1991 = vsel %vm634, %v1990, %v1989
        %v1992 = vsel %vm636, %v1990, %v1991
        %v1993 = vsel %vm638, %v1990, %v1992
        %v1994 = vsel %vm640, %v1990, %v1993
        %v1996 = vmul.f32 %v1948, %v1994
        %v1999 = vunpack.c.l.s4 1966171168
        %v2000 = vunpack.c.0.s8 %v1999
        %v2001 = vlaneseq
        %v2002 = vshrl.u32 %v2001, 7
        %v2003 = vsub.s32 %v2000, %v2002
        %v2004 = vrot.slane %v1996, %v2003
        %v2005 = vcombine.high %v2004, %v2004
        %2008 = vst.msk [vmem:[%s378 + $0x6] sm:$0x1] %vm655, %v2004
        %2009 = vst.msk [vmem:[%s378 + $0xe] sm:$0x1] %vm655, %v2005
        %s2010 = sadd.s32 %s412, 7
        %p2011 = scmp.ge.s32.totalorder %s2010, 1
        %p2012 = scmp.gt.s32.totalorder %s1788, 0
        %s2013 = scalar_select %p2012, %s1788, 0
        %s2014 = smul.u32 %s2013, 2
        %s2015 = scalar_lea.vmem [#allocation2], %s2014
        %v2016 = vld [vmem:[%s2015] sm:$0x3]
        %s2017 = scalar_select %p2011, 1, 0
        %v2018 = vstv %s2017
        %vm2019 = vcmp.eq.s32.totalorder %v2018, 1
        %v2020 = vsel %vm2019, %v2016, 0.0
        %v2021 = vadd.f32 %v2020, 0.0
        %p2022 = scmp.ge.s32.totalorder %s2010, 2
        %v2023 = vld [vmem:[%s1793] sm:$0x3]
        %s2024 = scalar_select %p2022, 1, 0
        %v2025 = vstv %s2024
        %vm2026 = vcmp.eq.s32.totalorder %v2025, 1
        %v2027 = vsel %vm2026, %v2023, 0.0
        %v2028 = vadd.f32 %v2021, %v2027
        %p2029 = scmp.ge.s32.totalorder %s2010, 4
        %v2030 = vld [vmem:[%s1349] sm:$0x3]
        %s2031 = scalar_select %p2029, 1, 0
        %v2032 = vstv %s2031
        %vm2033 = vcmp.eq.s32.totalorder %v2032, 1
        %v2034 = vsel %vm2033, %v2030, 0.0
        %v2035 = vadd.f32 %v2028, %v2034
        %p2036 = scmp.ge.s32.totalorder %s2010, 8
        %v2037 = vld [vmem:[%s418] sm:$0x3]
        %s2038 = scalar_select %p2036, 1, 0
        %v2039 = vstv %s2038
        %vm2040 = vcmp.eq.s32.totalorder %v2039, 1
        %v2041 = vsel %vm2040, %v2037, 0.0
        %v2042 = vadd.f32 %v2035, %v2041
        %s2043 = scalar_lea.vmem %s388, 28
        %v2044 = vld [vmem:[%s2043] sm:$0xf]
        %v2046 = vsel %vm462, %v2042, 0
        %2048 = vmatprep.subr.mxu0 %v397
        %2049 = vmatpush1.msra.mxu0 %v396
        %2050 = vmatprep.subr.mxu0 %v399
        %2051 = vmatpush1.msra.mxu0 %v398
        %2052 = vmatprep.subr.mxu0 %v401
        %2053 = vmatpush1.msra.mxu0 %v400
        %2054 = vmatprep.subr.mxu0 %v403
        %2055 = vmatpush1.msra.mxu0 %v402
        %2056 = vmatprep.subr.mxu0 %v405
        %2057 = vmatpush1.msra.mxu0 %v404
        %2058 = vmatprep.subr.mxu0 %v407
        %2059 = vmatpush1.msra.mxu0 %v406
        %2060 = vmatprep.subr.mxu0 %v409
        %2061 = vmatpush1.msra.mxu0 %v408
        %2062 = vmatprep.subr.mxu0 %v411
        %2063 = vmatpush1.msra.mxu0 %v410
        %2064 = vmatprep.subr.mxu0 0.0
        %2065 = vmatpush1.msra.mxu0 0.0
        %2066 = vmatprep.subr.mxu0 0.0
        %2067 = vmatpush1.msra.mxu0 0.0
        %2068 = vmatprep.subr.mxu0 0.0
        %2069 = vmatpush1.msra.mxu0 0.0
        %2070 = vmatprep.subr.mxu0 0.0
        %2071 = vmatpush1.msra.mxu0 0.0
        %2072 = vmatprep.subr.mxu0 0.0
        %2073 = vmatpush1.msra.mxu0 0.0
        %2074 = vmatprep.subr.mxu0 0.0
        %2075 = vmatpush1.msra.mxu0 0.0
        %2076 = vmatprep.subr.mxu0 0.0
        %2077 = vmatpush1.msra.mxu0 0.0
        %2078 = vmatprep.subr.mxu0 0.0
        %2079 = vmatpush1.msra.mxu0 0.0
        %2080 = vmatprep.subr.mxu0 0.0
        %2081 = vmatpush1.msra.mxu0 0.0
        %2082 = vmatprep.subr.mxu0 0.0
        %2083 = vmatpush1.msra.mxu0 0.0
        %2084 = vmatprep.subr.mxu0 0.0
        %2085 = vmatpush1.msra.mxu0 0.0
        %2086 = vmatprep.subr.mxu0 0.0
        %2087 = vmatpush1.msra.mxu0 0.0
        %2088 = vmatprep.subr.mxu0 0.0
        %2089 = vmatpush1.msra.mxu0 0.0
        %2090 = vmatprep.subr.mxu0 0.0
        %2091 = vmatpush1.msra.mxu0 0.0
        %2092 = vmatprep.subr.mxu0 0.0
        %2093 = vmatpush1.msra.mxu0 0.0
        %2094 = vmatprep.subr.mxu0 0.0
        %2095 = vmatpush1.msra.mxu0 0.0
        %2096 = vmatprep.subr.mxu0 0.0
        %2097 = vmatpush1.msra.mxu0 0.0
        %2098 = vmatprep.subr.mxu0 0.0
        %2099 = vmatpush1.msra.mxu0 0.0
        %2100 = vmatprep.subr.mxu0 0.0
        %2101 = vmatpush1.msra.mxu0 0.0
        %2102 = vmatprep.subr.mxu0 0.0
        %2103 = vmatpush1.msra.mxu0 0.0
        %2104 = vmatprep.subr.mxu0 0.0
        %2105 = vmatpush1.msra.mxu0 0.0
        %2106 = vmatprep.subr.mxu0 0.0
        %2107 = vmatpush1.msra.mxu0 0.0
        %2108 = vmatprep.subr.mxu0 0.0
        %2109 = vmatpush1.msra.mxu0 0.0
        %2110 = vmatprep.subr.mxu0 0.0
        %2111 = vmatpush1.msra.mxu0 0.0
        %2112 = vmatprep.mubr.f32.mxu0 0.0
        %2113 = vmatmul.mubr.f32.gmra.mrb[0].mxu0 %v2046
        %v2114 = vpop.f32.mrb[0].mxu0
        %v2115 = vadd.f32 0.0, %v2114
        %v2116 = vpop.f32.mrb[0].mxu0
        %v2117 = vadd.f32 0.0, %v2116
        %2118 = vdwg.mxu0
        %v2121 = vcombine.low %v2115, %v2117
        %v2123 = vunpack.c.l.s4 1983009808
        %v2124 = vunpack.c.0.s8 %v2123
        %v2125 = vlaneseq
        %v2126 = vshrl.u32 %v2125, 7
        %v2127 = vsub.s32 %v2124, %v2126
        %v2128 = vrot.slane %v2121, %v2127
        %v2130 = vadd.f32 %v2044, %v2128
        %v2131 = vxor.u32 %v2130, 2147483648
        %v2132 = vmul.f32 %v2131, 1.442695
        %v2133 = vpow.pop %v2132
        %v2134 = vadd.f32 %v2133, 1.0
        %v2135 = vrcp.pop %v2134
        %v2136 = vmul.f32 1.0, %v2135
        %2138 = vrot.lane.b32.xlu0 %v2130, 64
        %v2139 = vpop.permute.xlu0 %2138
        %v2140 = vrot.slane %v2139, 2
        %v2142 = vtanh.pop %v2140
        %v2143 = vld [vmem:[#allocation3] sm:$0x3]
        %v2146 = vunpack.c.l.s4 1983009808
        %v2147 = vunpack.c.0.s8 %v2146
        %v2148 = vlaneseq
        %v2149 = vshrl.u32 %v2148, 7
        %v2150 = vsub.s32 %v2147, %v2149
        %v2151 = vrot.slane %v2143, %v2150
        %2152 = vrot.lane.b32.xlu0 %v2151, 64
        %v2153 = vpop.permute.xlu0 %2152
        %v2155 = vmul.f32 %v2136, %v2153
        %v2156 = vmul.f32 %v2136, %v2142
        %2158 = vrot.lane.b32.xlu0 %v2156, 64
        %v2159 = vpop.permute.xlu0 %2158
        %v2161 = vadd.f32 %v2155, %v2159
        %v2162 = vtanh.pop %v2161
        %v2164 = vrot.slane %v2136, 2
        %2167 = vrot.lane.b32.xlu0 %v2162, 64
        %v2168 = vpop.permute.xlu0 %2167
        %v2170 = vmul.f32 %v2164, %v2168
        %v2173 = vunpack.c.l.s4 1983009808
        %v2174 = vunpack.c.0.s8 %v2173
        %v2175 = vlaneseq
        %v2176 = vshrl.u32 %v2175, 7
        %v2177 = vsub.s32 %v2174, %v2176
        %v2178 = vrot.slane %v2161, %v2177
        %2179 = vrot.lane.b32.xlu0 %v2178, 64
        %v2180 = vpop.permute.xlu0 %2179
        %2182 = vst.msk [vmem:[#allocation3] sm:$0x3] %vm600, %v2180
        %s2183 = smul.u32 %s2010, 2
        %s2184 = scalar_lea.vmem [#allocation2], %s2183
        %2185 = vst.msk [vmem:[%s2184] sm:$0x3] %vm600, %v2170
        %v2186 = vld [vmem:[%s344 + $0x7] sm:$0x1]
        %v2187 = vld [vmem:[%s344 + $0xf] sm:$0x1]
        %2189 = vset.pattern.permute.xlu0 0
        %2190 = vperm.xlu0 %2189, %v2186
        %v2191 = vpop.permute.xlu0 %2190
        %2193 = vset.pattern.permute.xlu0 0
        %2194 = vperm.xlu0 %2193, %v2187
        %v2195 = vpop.permute.xlu0 %2194
        %v2197 = vunpack.c.l.s4 269488144
        %v2198 = vunpack.c.0.s8 %v2197
        %v2199 = vlaneseq
        %v2200 = vshrl.u32 %v2199, 7
        %v2201 = vsub.s32 %v2198, %v2200
        %v2202 = vrot.slane %v2191, %v2201
        %v2204 = vunpack.c.l.s4 269488144
        %v2205 = vunpack.c.0.s8 %v2204
        %v2206 = vlaneseq
        %v2207 = vshrl.u32 %v2206, 7
        %v2208 = vsub.s32 %v2205, %v2207
        %v2209 = vrot.slane %v2195, %v2208
        %v2210 = vsel %vm629, %v2202, %v2202
        %v2211 = vsel %vm631, %v2202, %v2210
        %v2212 = vrot.slane %v2209, 7
        %v2213 = vsel %vm634, %v2212, %v2211
        %v2214 = vsel %vm636, %v2212, %v2213
        %v2215 = vsel %vm638, %v2212, %v2214
        %v2216 = vsel %vm640, %v2212, %v2215
        %v2218 = vmul.f32 %v2170, %v2216
        %v2221 = vunpack.c.l.s4 1966171168
        %v2222 = vunpack.c.0.s8 %v2221
        %v2223 = vlaneseq
        %v2224 = vshrl.u32 %v2223, 7
        %v2225 = vsub.s32 %v2222, %v2224
        %v2226 = vrot.slane %v2218, %v2225
        %v2227 = vcombine.high %v2226, %v2226
        %2230 = vst.msk [vmem:[%s378 + $0x7] sm:$0x1] %vm655, %v2226
        %2231 = vst.msk [vmem:[%s378 + $0xf] sm:$0x1] %vm655, %v2227
        %p2232 = scmp.eq.s32.totalorder %s25, 1
        // Predicated region
        $region91: #{_lambda_.1} parent=81 // pred_check
          %p2233 = pneg %p2232
        $region92: #{_lambda_.1} parent=81 // pred_check_branch
          %2235 = sbr.rel (%p2233) target = $region94
        $region93: #{_lambda_.1} parent=81 // pred_region
          %v2236 = vld [vmem:[%s3] sm:$0xff]
          %v2237 = vld [vmem:[%s3 + $0x8] sm:$0xff]
          %v2238 = vld [vmem:[%s3 + $0x10] sm:$0xff]
          %v2239 = vld [vmem:[%s3 + $0x18] sm:$0xff]
          %v2240 = vld [vmem:[%s3 + $0x20] sm:$0xff]
          %v2241 = vld [vmem:[%s3 + $0x28] sm:$0xff]
          %v2242 = vld [vmem:[%s3 + $0x30] sm:$0xff]
          %v2243 = vld [vmem:[%s3 + $0x38] sm:$0xff]
          %v2244 = vld [vmem:[%s4] sm:$0x1]
          %v2246 = vlaneseq
          %v2247 = vshrl.u32 %v2246, 7
          %v2248 = vsub.s32 0, %v2247
          %v2249 = vrot.slane %v2244, %v2248
          %v2252 = vsel %vm462, %v2170, 0
          %2254 = vmatprep.subr.mxu0 0.0
          %2255 = vmatpush1.msra.mxu0 %v2236
          %2256 = vmatprep.subr.mxu0 0.0
          %2257 = vmatpush1.msra.mxu0 %v2237
          %2258 = vmatprep.subr.mxu0 0.0
          %2259 = vmatpush1.msra.mxu0 %v2238
          %2260 = vmatprep.subr.mxu0 0.0
          %2261 = vmatpush1.msra.mxu0 %v2239
          %2262 = vmatprep.subr.mxu0 0.0
          %2263 = vmatpush1.msra.mxu0 %v2240
          %2264 = vmatprep.subr.mxu0 0.0
          %2265 = vmatpush1.msra.mxu0 %v2241
          %2266 = vmatprep.subr.mxu0 0.0
          %2267 = vmatpush1.msra.mxu0 %v2242
          %2268 = vmatprep.subr.mxu0 0.0
          %2269 = vmatpush1.msra.mxu0 %v2243
          %2270 = vmatprep.subr.mxu0 0.0
          %2271 = vmatpush1.msra.mxu0 0.0
          %2272 = vmatprep.subr.mxu0 0.0
          %2273 = vmatpush1.msra.mxu0 0.0
          %2274 = vmatprep.subr.mxu0 0.0
          %2275 = vmatpush1.msra.mxu0 0.0
          %2276 = vmatprep.subr.mxu0 0.0
          %2277 = vmatpush1.msra.mxu0 0.0
          %2278 = vmatprep.subr.mxu0 0.0
          %2279 = vmatpush1.msra.mxu0 0.0
          %2280 = vmatprep.subr.mxu0 0.0
          %2281 = vmatpush1.msra.mxu0 0.0
          %2282 = vmatprep.subr.mxu0 0.0
          %2283 = vmatpush1.msra.mxu0 0.0
          %2284 = vmatprep.subr.mxu0 0.0
          %2285 = vmatpush1.msra.mxu0 0.0
          %2286 = vmatprep.subr.mxu0 0.0
          %2287 = vmatpush1.msra.mxu0 0.0
          %2288 = vmatprep.subr.mxu0 0.0
          %2289 = vmatpush1.msra.mxu0 0.0
          %2290 = vmatprep.subr.mxu0 0.0
          %2291 = vmatpush1.msra.mxu0 0.0
          %2292 = vmatprep.subr.mxu0 0.0
          %2293 = vmatpush1.msra.mxu0 0.0
          %2294 = vmatprep.subr.mxu0 0.0
          %2295 = vmatpush1.msra.mxu0 0.0
          %2296 = vmatprep.subr.mxu0 0.0
          %2297 = vmatpush1.msra.mxu0 0.0
          %2298 = vmatprep.subr.mxu0 0.0
          %2299 = vmatpush1.msra.mxu0 0.0
          %2300 = vmatprep.subr.mxu0 0.0
          %2301 = vmatpush1.msra.mxu0 0.0
          %2302 = vmatprep.subr.mxu0 0.0
          %2303 = vmatpush1.msra.mxu0 0.0
          %2304 = vmatprep.subr.mxu0 0.0
          %2305 = vmatpush1.msra.mxu0 0.0
          %2306 = vmatprep.subr.mxu0 0.0
          %2307 = vmatpush1.msra.mxu0 0.0
          %2308 = vmatprep.subr.mxu0 0.0
          %2309 = vmatpush1.msra.mxu0 0.0
          %2310 = vmatprep.subr.mxu0 0.0
          %2311 = vmatpush1.msra.mxu0 0.0
          %2312 = vmatprep.subr.mxu0 0.0
          %2313 = vmatpush1.msra.mxu0 0.0
          %2314 = vmatprep.subr.mxu0 0.0
          %2315 = vmatpush1.msra.mxu0 0.0
          %2316 = vmatprep.subr.mxu0 0.0
          %2317 = vmatpush1.msra.mxu0 0.0
          %2318 = vmatprep.mubr.f32.mxu0 0.0
          %2319 = vmatmul.mubr.f32.gmra.mrb[0].mxu0 %v2252
          %v2320 = vpop.f32.mrb[0].mxu0
          %v2321 = vadd.f32 %v2249, %v2320
          %v2322 = vpop.f32.mrb[0].mxu0
          %2323 = vdwg.mxu0
          %vm2324 = vcmask 254976
          %2325 = vst.msk [vmem:[#allocation7] sm:$0x3] %vm2324, %v2321
          %v2326 = vld [vmem:[#allocation3] sm:$0x3]
          %v2327 = vld [vmem:[%s5] sm:$0xff]
          %v2328 = vld [vmem:[%s5 + $0x8] sm:$0xff]
          %v2329 = vld [vmem:[%s5 + $0x10] sm:$0xff]
          %v2330 = vld [vmem:[%s5 + $0x18] sm:$0xff]
          %v2331 = vld [vmem:[%s5 + $0x20] sm:$0xff]
          %v2332 = vld [vmem:[%s5 + $0x28] sm:$0xff]
          %v2333 = vld [vmem:[%s5 + $0x30] sm:$0xff]
          %v2334 = vld [vmem:[%s5 + $0x38] sm:$0xff]
          %v2335 = vld [vmem:[%s6] sm:$0x1]
          %v2337 = vlaneseq
          %v2338 = vshrl.u32 %v2337, 7
          %v2339 = vsub.s32 0, %v2338
          %v2340 = vrot.slane %v2335, %v2339
          %v2343 = vsel %vm462, %v2326, 0
          %2345 = vmatprep.subr.mxu0 0.0
          %2346 = vmatpush1.msra.mxu0 %v2327
          %2347 = vmatprep.subr.mxu0 0.0
          %2348 = vmatpush1.msra.mxu0 %v2328
          %2349 = vmatprep.subr.mxu0 0.0
          %2350 = vmatpush1.msra.mxu0 %v2329
          %2351 = vmatprep.subr.mxu0 0.0
          %2352 = vmatpush1.msra.mxu0 %v2330
          %2353 = vmatprep.subr.mxu0 0.0
          %2354 = vmatpush1.msra.mxu0 %v2331
          %2355 = vmatprep.subr.mxu0 0.0
          %2356 = vmatpush1.msra.mxu0 %v2332
          %2357 = vmatprep.subr.mxu0 0.0
          %2358 = vmatpush1.msra.mxu0 %v2333
          %2359 = vmatprep.subr.mxu0 0.0
          %2360 = vmatpush1.msra.mxu0 %v2334
          %2361 = vmatprep.subr.mxu0 0.0
          %2362 = vmatpush1.msra.mxu0 0.0
          %2363 = vmatprep.subr.mxu0 0.0
          %2364 = vmatpush1.msra.mxu0 0.0
          %2365 = vmatprep.subr.mxu0 0.0
          %2366 = vmatpush1.msra.mxu0 0.0
          %2367 = vmatprep.subr.mxu0 0.0
          %2368 = vmatpush1.msra.mxu0 0.0
          %2369 = vmatprep.subr.mxu0 0.0
          %2370 = vmatpush1.msra.mxu0 0.0
          %2371 = vmatprep.subr.mxu0 0.0
          %2372 = vmatpush1.msra.mxu0 0.0
          %2373 = vmatprep.subr.mxu0 0.0
          %2374 = vmatpush1.msra.mxu0 0.0
          %2375 = vmatprep.subr.mxu0 0.0
          %2376 = vmatpush1.msra.mxu0 0.0
          %2377 = vmatprep.subr.mxu0 0.0
          %2378 = vmatpush1.msra.mxu0 0.0
          %2379 = vmatprep.subr.mxu0 0.0
          %2380 = vmatpush1.msra.mxu0 0.0
          %2381 = vmatprep.subr.mxu0 0.0
          %2382 = vmatpush1.msra.mxu0 0.0
          %2383 = vmatprep.subr.mxu0 0.0
          %2384 = vmatpush1.msra.mxu0 0.0
          %2385 = vmatprep.subr.mxu0 0.0
          %2386 = vmatpush1.msra.mxu0 0.0
          %2387 = vmatprep.subr.mxu0 0.0
          %2388 = vmatpush1.msra.mxu0 0.0
          %2389 = vmatprep.subr.mxu0 0.0
          %2390 = vmatpush1.msra.mxu0 0.0
          %2391 = vmatprep.subr.mxu0 0.0
          %2392 = vmatpush1.msra.mxu0 0.0
          %2393 = vmatprep.subr.mxu0 0.0
          %2394 = vmatpush1.msra.mxu0 0.0
          %2395 = vmatprep.subr.mxu0 0.0
          %2396 = vmatpush1.msra.mxu0 0.0
          %2397 = vmatprep.subr.mxu0 0.0
          %2398 = vmatpush1.msra.mxu0 0.0
          %2399 = vmatprep.subr.mxu0 0.0
          %2400 = vmatpush1.msra.mxu0 0.0
          %2401 = vmatprep.subr.mxu0 0.0
          %2402 = vmatpush1.msra.mxu0 0.0
          %2403 = vmatprep.subr.mxu0 0.0
          %2404 = vmatpush1.msra.mxu0 0.0
          %2405 = vmatprep.subr.mxu0 0.0
          %2406 = vmatpush1.msra.mxu0 0.0
          %2407 = vmatprep.subr.mxu0 0.0
          %2408 = vmatpush1.msra.mxu0 0.0
          %2409 = vmatprep.mubr.f32.mxu0 0.0
          %2410 = vmatmul.mubr.f32.gmra.mrb[0].mxu0 %v2343
          %v2411 = vpop.f32.mrb[0].mxu0
          %v2412 = vadd.f32 %v2340, %v2411
          %v2413 = vpop.f32.mrb[0].mxu0
          %2414 = vdwg.mxu0
          %2415 = vst.msk [vmem:[#allocation9] sm:$0x3] %vm2324, %v2412
        $region94: #{_lambda_.1} parent=81 // pred_fallthru
          _
        %s2416 = sand.u32 %s190, 1
        %s2417 = scalar_lea.sflag [#allocation6], %s2416
        %s2418 = sand.u32 %s190, 1
        %s2419 = smul.addr %s2418, 16
        %s2420 = scalar_lea.vmem [#allocation5], %s2419
        // Predicated region
        $region95: #{_lambda_.1} parent=81 // pred_check
          %p2421 = pneg %p200
        $region96: #{_lambda_.1} parent=81 // pred_check_branch
          %2423 = sbr.rel (%p2421) target = $region98
        $region97: #{_lambda_.1} parent=81 // pred_region
          %s2425 = ssub.s32 256, 256
          %2426 = vsyncadd %s2417, %s2425
          %s2427 = smul.addr %s25, 128
          %s2428 = scalar_lea.hbm %s7, %s2427
          %s2429 = sshll.u32 %s2420, 4
          %s2430 = int_to_ptr.vmem [resolvable:$true] %s2429
          %2435 = dma.vmem_to_hbm [thread:$0]  %s2430, 256, %s2428, %s2417, 128, 256, 8
        $region98: #{_lambda_.1} parent=81 // pred_fallthru
          _
        // Predicated region
        $region99: #{_lambda_.1} parent=81 // pred_check
          %p2436 = pneg %p221
        $region100: #{_lambda_.1} parent=81 // pred_check_branch
          %2438 = sbr.rel (%p2436) target = $region102
        $region101: #{_lambda_.1} parent=81 // pred_region
          %s2440 = ssub.s32 32, 32
          %2441 = vsyncadd [#allocation8], %s2440
          %s2443 = sshll.u32 [#allocation7], 4
          %s2444 = int_to_ptr.vmem [resolvable:$true] %s2443
          %2446 = dma.vmem_to_hbm [thread:$0]  %s2444, 32, %s8, [#allocation8]
        $region102: #{_lambda_.1} parent=81 // pred_fallthru
          _
        // Predicated region
        $region103: #{_lambda_.1} parent=81 // pred_check
          %p2447 = pneg %p242
        $region104: #{_lambda_.1} parent=81 // pred_check_branch
          %2449 = sbr.rel (%p2447) target = $region106
        $region105: #{_lambda_.1} parent=81 // pred_region
          %s2451 = ssub.s32 32, 32
          %2452 = vsyncadd [#allocation8], %s2451
          %s2454 = sshll.u32 [#allocation9], 4
          %s2455 = int_to_ptr.vmem [resolvable:$true] %s2454
          %2457 = dma.vmem_to_hbm [thread:$0]  %s2455, 32, %s9, [#allocation8]
        $region106: #{_lambda_.1} parent=81 // pred_fallthru
          _
        // Predicated region
        $region107: #{_lambda_.1} parent=81 // pred_check
          %p2458 = pneg %p221
        $region108: #{_lambda_.1} parent=81 // pred_check_branch
          %2460 = sbr.rel (%p2458) target = $region110
        $region109: #{_lambda_.1} parent=81 // pred_region
          %2461 = dma.done [#allocation8], 32
        $region110: #{_lambda_.1} parent=81 // pred_fallthru
          _
        // Predicated region
        $region111: #{_lambda_.1} parent=81 // pred_check
          %p2462 = pneg %p242
        $region112: #{_lambda_.1} parent=81 // pred_check_branch
          %2464 = sbr.rel (%p2462) target = $region114
        $region113: #{_lambda_.1} parent=81 // pred_region
          %2465 = dma.done [#allocation8], 32
        $region114: #{_lambda_.1} parent=81 // pred_fallthru
          _
      $region82: #{_lambda_.1} parent=5 // pred_fallthru
        _
      %p2466 = scmp.le.s32.totalorder 2, %s20
      // Predicated region
      $region115: #{_lambda_.1} parent=5 // pred_check
        %p2467 = pneg %p2466
      $region116: #{_lambda_.1} parent=5 // pred_check_branch
        %2469 = sbr.rel (%p2467) target = $region118
      $region117: #{_lambda_.1} parent=5 // pred_region
        %s2470 = ssub.s32 %s20, 2
        // Predicated region
        $region119: #{_lambda_.1} parent=117 // pred_check
          %p2471 = pneg %p206
        $region120: #{_lambda_.1} parent=117 // pred_check_branch
          %2473 = sbr.rel (%p2471) target = $region122
        $region121: #{_lambda_.1} parent=117 // pred_region
          %s2474 = sand.u32 %s191, 1
          %s2475 = scalar_lea.sflag [#allocation6], %s2474
          %s2476 = sand.u32 %s191, 1
          %s2477 = smul.addr %s2476, 16
          %s2478 = scalar_lea.vmem [#allocation5], %s2477
          %2479 = dma.done %s2475, 256
        $region122: #{_lambda_.1} parent=117 // pred_fallthru
          _
      $region118: #{_lambda_.1} parent=5 // pred_fallthru
        _
    $region6: #{_lambda_.1} parent=1 // loop_footer
      %s24 = sadd.s32 1, %s20
    $region7: #{_lambda_.1} parent=1 // loop_footer_branch
      %19 = sbr.rel target = $region3
    $region8: #{_lambda_.1} parent=1 // loop_exit
      _
    %2480 = vsyncpa [#allocation6], 1
    %s2481 = scalar_lea.sflag [#allocation6], 1
    %2482 = vsyncpa %s2481, 1
    %2483 = vsyncpa [#allocation8], 1

</llo_original>
